<compile_context>
chip_gen: v7x
topology: tpu7x:2x2x1
jax: 0.10.0
libtpu: 0.0.40
codegen_flags: <defaults>
</compile_context>

<pallas_src>
import math

import jax
import jax.numpy as jnp
from jax.experimental import pallas as pl
from jax.experimental.pallas import tpu as pltpu

NHEAD = 4
LN_EPS = 1e-5
OUT_PAD = 128  # lane-dense output slab


def _layernorm(x, w, b):
    mean = jnp.mean(x, axis=-1, keepdims=True)
    xc = x - mean
    var = jnp.mean(xc * xc, axis=-1, keepdims=True)
    inv = jax.lax.rsqrt(var + LN_EPS)
    return xc * inv * w + b


def transformer_layer_kernel(x_ref, emb_w_ref, emb_b_ref, fc_w_ref, fc_b_ref,
                             wq_ref, bq_ref, wk_ref, bk_ref, wv_ref, bv_ref,
                             wo_ref, bo_ref, ln1w_ref, ln1b_ref,
                             w1_ref, b1_ref, w2_ref, b2_ref,
                             ln2w_ref, ln2b_ref,
                             o_ref, h_ref):
    l = pl.program_id(1)
    BT, S, Din = x_ref.shape
    H = wq_ref.shape[2]
    dh = H // NHEAD

    # ---- embedding + tanh, only on the first layer step ----
    @pl.when(l == 0)
    def _():
        xb = x_ref[...].reshape(BT * S, Din).astype(jnp.bfloat16)
        emb = jnp.dot(xb, emb_w_ref[...],
                      preferred_element_type=jnp.float32) + emb_b_ref[...]
        h_ref[...] = jnp.tanh(emb)

    h = h_ref[...]                         # (BT*S, H) f32, carried across layers
    hb = h.astype(jnp.bfloat16)

    # ---- q/k/v projections: lane-dense, no weight transpose, scale folded into wq/bq ----
    q = jnp.dot(hb, wq_ref[0], preferred_element_type=jnp.float32) + bq_ref[0]
    k = jnp.dot(hb, wk_ref[0], preferred_element_type=jnp.float32) + bk_ref[0]
    v = jnp.dot(hb, wv_ref[0], preferred_element_type=jnp.float32) + bv_ref[0]
    q = q.reshape(BT, S, H)
    k = k.reshape(BT, S, H)
    v = v.reshape(BT, S, H)

    # ---- multi-head self attention (batched over BT per head) ----
    heads = []
    for hh in range(NHEAD):
        sl = slice(hh * dh, (hh + 1) * dh)
        qh, kh, vh = q[:, :, sl], k[:, :, sl], v[:, :, sl]
        sc = jnp.einsum('bqd,bkd->bqk', qh, kh,
                        preferred_element_type=jnp.float32)
        # softmax with EUP reciprocal (no vector divide)
        p = jnp.exp(sc - jnp.max(sc, axis=-1, keepdims=True))
        p = p * pl.reciprocal(jnp.sum(p, axis=-1, keepdims=True), approx=True)
        heads.append(jnp.einsum('bqk,bkd->bqd', p, vh,
                                preferred_element_type=jnp.float32))
    a = jnp.concatenate(heads, axis=-1).reshape(BT * S, H)

    # single out-projection matmul over the concatenated heads
    attn = jnp.dot(a.astype(jnp.bfloat16), wo_ref[0],
                   preferred_element_type=jnp.float32) + bo_ref[0]

    h1 = _layernorm(h + attn, ln1w_ref[0], ln1b_ref[0])

    # ---- feed forward: linear1 -> relu -> linear2 ----
    ff = jnp.dot(h1.astype(jnp.bfloat16), w1_ref[0],
                 preferred_element_type=jnp.float32) + b1_ref[0]
    ff = jnp.maximum(ff, 0.0)
    ff = jnp.dot(ff.astype(jnp.bfloat16), w2_ref[0],
                 preferred_element_type=jnp.float32) + b2_ref[0]

    h2 = _layernorm(h1 + ff, ln2w_ref[0], ln2b_ref[0])
    h_ref[...] = h2

    # ---- final fc + tanh on the last sequence position, only on the last layer ----
    @pl.when(l == pl.num_programs(1) - 1)
    def _():
        last = h2.reshape(BT, S, H)[:, S - 1, :]                    # (BT, H)
        out = jnp.dot(last.astype(jnp.bfloat16), fc_w_ref[...],
                      preferred_element_type=jnp.float32) + fc_b_ref[...]
        o_ref[...] = jnp.tanh(out)


def quadruped_transformer(x, kp, out_size, *, batch_tile=None):
    B, S, Din = x.shape
    H = kp['emb_w'].shape[1]
    L = kp['wq'].shape[0]
    F = kp['w1'].shape[2]
    if batch_tile is None:
        batch_tile = B                 # one batch tile at toy shapes; split for v7x dual-TC
    assert B % batch_tile == 0
    BT = batch_tile
    nb = B // BT

    def layer_spec(shape):             # per-layer weight: block index follows the layer axis
        return pl.BlockSpec((1,) + shape, lambda b, l: (l,) + (0,) * len(shape))

    def const_spec(shape):             # non-layer weight: resident across the whole grid
        return pl.BlockSpec(shape, lambda b, l: (0,) * len(shape))

    grid_spec = pltpu.PrefetchScalarGridSpec(
        num_scalar_prefetch=0,
        grid=(nb, L),
        in_specs=[
            pl.BlockSpec((BT, S, Din), lambda b, l: (b, 0, 0)),   # x
            const_spec((Din, H)),                                 # emb_w
            const_spec((1, H)),                                   # emb_b
            const_spec((H, OUT_PAD)),                             # fc_w (padded)
            const_spec((1, OUT_PAD)),                             # fc_b (padded)
            layer_spec((H, H)), layer_spec((1, H)),               # wq, bq (scale folded)
            layer_spec((H, H)), layer_spec((1, H)),               # wk, bk
            layer_spec((H, H)), layer_spec((1, H)),               # wv, bv
            layer_spec((H, H)), layer_spec((1, H)),               # wo, bo
            layer_spec((1, H)), layer_spec((1, H)),               # ln1_w, ln1_b
            layer_spec((H, F)), layer_spec((1, F)),               # w1, b1
            layer_spec((F, H)), layer_spec((1, H)),               # w2, b2
            layer_spec((1, H)), layer_spec((1, H)),               # ln2_w, ln2_b
        ],
        out_specs=pl.BlockSpec((BT, OUT_PAD), lambda b, l: (b, 0)),
        scratch_shapes=[pltpu.VMEM((BT * S, H), jnp.float32)],    # carried hidden state
    )

    out = pl.pallas_call(
        transformer_layer_kernel,
        out_shape=jax.ShapeDtypeStruct((B, OUT_PAD), jnp.float32),
        grid_spec=grid_spec,
        compiler_params=pltpu.CompilerParams(
            dimension_semantics=("parallel", "arbitrary"),
        ),
    )(x, kp['emb_w'], kp['emb_b'], kp['fc_w'], kp['fc_b'],
      kp['wq'], kp['bq'], kp['wk'], kp['bk'], kp['wv'], kp['bv'],
      kp['wo'], kp['bo'], kp['ln1_w'], kp['ln1_b'],
      kp['w1'], kp['b1'], kp['w2'], kp['b2'],
      kp['ln2_w'], kp['ln2_b'])
    return out[:, :out_size]


def init_params(key, input_size, hidden, output, num_layers=2, dim_ff=2048):
    """PyTorch-layout (out_features, in_features) f32 parameters."""
    ks = jax.random.split(key, 8)
    s = 0.1
    L, H, F = num_layers, hidden, dim_ff
    return dict(
        emb_w=s * jax.random.normal(ks[0], (H, input_size), jnp.float32),
        emb_b=s * jax.random.normal(ks[1], (1, H), jnp.float32),
        in_w=s * jax.random.normal(ks[2], (L, 3 * H, H), jnp.float32),
        in_b=s * jax.random.normal(ks[3], (L, 1, 3 * H), jnp.float32),
        out_w=s * jax.random.normal(ks[4], (L, H, H), jnp.float32),
        out_b=jnp.zeros((L, 1, H), jnp.float32),
        ln1_w=jnp.ones((L, 1, H), jnp.float32),
        ln1_b=jnp.zeros((L, 1, H), jnp.float32),
        l1_w=s * jax.random.normal(ks[5], (L, F, H), jnp.float32),
        l1_b=jnp.zeros((L, 1, F), jnp.float32),
        l2_w=s * jax.random.normal(ks[6], (L, H, F), jnp.float32),
        l2_b=jnp.zeros((L, 1, H), jnp.float32),
        ln2_w=jnp.ones((L, 1, H), jnp.float32),
        ln2_b=jnp.zeros((L, 1, H), jnp.float32),
        fc_w=s * jax.random.normal(ks[7], (output, H), jnp.float32),
        fc_b=jnp.zeros((1, output), jnp.float32),
    )


def prepare_params(p):
    """Host-side re-layout: transpose to (in, out), split q/k/v, fold the 1/sqrt(dh)
    attention scale into the q projection, cast matmul weights to bf16, pad fc to 128."""
    L, _, H = p['in_w'].shape
    dh = H // NHEAD
    scale = 1.0 / math.sqrt(dh)
    wdt = jnp.bfloat16
    out_size = p['fc_w'].shape[0]
    in_w = p['in_w']                              # (L, 3H, H)
    in_b = p['in_b'].reshape(L, 3 * H)

    def t(w):                                     # (L, out, in) -> (L, in, out)
        return jnp.transpose(w, (0, 2, 1))

    fc_w = jnp.zeros((H, OUT_PAD), jnp.float32).at[:, :out_size].set(p['fc_w'].T)
    fc_b = jnp.zeros((1, OUT_PAD), jnp.float32).at[:, :out_size].set(
        p['fc_b'].reshape(1, -1))

    return dict(
        emb_w=p['emb_w'].T.astype(wdt),                                   # (Din, H)
        emb_b=p['emb_b'].reshape(1, -1).astype(jnp.float32),
        fc_w=fc_w.astype(wdt),
        fc_b=fc_b,
        wq=(t(in_w[:, 0 * H:1 * H, :]) * scale).astype(wdt),
        bq=(in_b[:, 0 * H:1 * H] * scale).reshape(L, 1, H).astype(jnp.float32),
        wk=t(in_w[:, 1 * H:2 * H, :]).astype(wdt),
        bk=in_b[:, 1 * H:2 * H].reshape(L, 1, H).astype(jnp.float32),
        wv=t(in_w[:, 2 * H:3 * H, :]).astype(wdt),
        bv=in_b[:, 2 * H:3 * H].reshape(L, 1, H).astype(jnp.float32),
        wo=t(p['out_w']).astype(wdt),
        bo=p['out_b'].astype(jnp.float32),
        ln1_w=p['ln1_w'].astype(jnp.float32),
        ln1_b=p['ln1_b'].astype(jnp.float32),
        w1=t(p['l1_w']).astype(wdt),
        b1=p['l1_b'].astype(jnp.float32),
        w2=t(p['l2_w']).astype(wdt),
        b2=p['l2_b'].astype(jnp.float32),
        ln2_w=p['ln2_w'].astype(jnp.float32),
        ln2_b=p['ln2_b'].astype(jnp.float32),
    )


def reference_forward(x, p):
    """Pure-JAX f32 reference with identical math (eval-mode dropout)."""
    B, S, _ = x.shape
    H = p['emb_w'].shape[0]
    dh = H // NHEAD
    h = jnp.tanh(x.reshape(B * S, -1) @ p['emb_w'].T + p['emb_b']).reshape(B, S, H)
    for l in range(p['in_w'].shape[0]):
        hf = h.reshape(B * S, H)
        qkv = hf @ p['in_w'][l].T + p['in_b'][l]
        q, k, v = (qkv[:, i * H:(i + 1) * H].reshape(B, S, NHEAD, dh).transpose(0, 2, 1, 3)
                   for i in range(3))
        sc = jnp.einsum('bhqd,bhkd->bhqk', q, k) / math.sqrt(dh)
        a = jnp.einsum('bhqk,bhkd->bhqd', jax.nn.softmax(sc, -1), v)
        a = a.transpose(0, 2, 1, 3).reshape(B * S, H) @ p['out_w'][l].T + p['out_b'][l]
        h1 = _layernorm(hf + a, p['ln1_w'][l], p['ln1_b'][l])
        ff = jnp.maximum(h1 @ p['l1_w'][l].T + p['l1_b'][l], 0.0) @ p['l2_w'][l].T + p['l2_b'][l]
        h = _layernorm(h1 + ff, p['ln2_w'][l], p['ln2_b'][l]).reshape(B, S, H)
    return jnp.tanh(h[:, S - 1, :] @ p['fc_w'].T + p['fc_b'])


if __name__ == "__main__":
    B, S, INPUT, HIDDEN, OUTPUT = 2, 8, 16, 32, 4
    key = jax.random.PRNGKey(0)
    kx, kp = jax.random.split(key)
    x = jax.random.normal(kx, (B, S, INPUT), jnp.float32)
    params = init_params(kp, INPUT, HIDDEN, OUTPUT)
    kparams = prepare_params(params)

    out = quadruped_transformer(x, kparams, OUTPUT)
    out = jax.block_until_ready(out)

    ref = jax.block_until_ready(reference_forward(x, params))
    assert out.shape == (B, OUTPUT)
    assert bool(jnp.all(jnp.isfinite(out)))
    # bf16 matmul weights + approx-reciprocal softmax in the kernel vs f32 reference
    assert bool(jnp.allclose(out, ref, atol=2e-2, rtol=2e-2))
    print("KERNEL_OK")
</pallas_src>

<mosaic_0001>
module attributes {stable_mosaic.version = 11 : i64} {
  func.func @transformer_layer_kernel(%arg0: i32, %arg1: i32, %arg2: memref<2x8x16xf32, #tpu.memory_space<vmem>>, %arg3: memref<16x32xbf16, #tpu.memory_space<vmem>>, %arg4: memref<1x32xf32, #tpu.memory_space<vmem>>, %arg5: memref<32x128xbf16, #tpu.memory_space<vmem>>, %arg6: memref<1x128xf32, #tpu.memory_space<vmem>>, %arg7: memref<1x32x32xbf16, #tpu.memory_space<vmem>>, %arg8: memref<1x1x32xf32, #tpu.memory_space<vmem>>, %arg9: memref<1x32x32xbf16, #tpu.memory_space<vmem>>, %arg10: memref<1x1x32xf32, #tpu.memory_space<vmem>>, %arg11: memref<1x32x32xbf16, #tpu.memory_space<vmem>>, %arg12: memref<1x1x32xf32, #tpu.memory_space<vmem>>, %arg13: memref<1x32x32xbf16, #tpu.memory_space<vmem>>, %arg14: memref<1x1x32xf32, #tpu.memory_space<vmem>>, %arg15: memref<1x1x32xf32, #tpu.memory_space<vmem>>, %arg16: memref<1x1x32xf32, #tpu.memory_space<vmem>>, %arg17: memref<1x32x2048xbf16, #tpu.memory_space<vmem>>, %arg18: memref<1x1x2048xf32, #tpu.memory_space<vmem>>, %arg19: memref<1x2048x32xbf16, #tpu.memory_space<vmem>>, %arg20: memref<1x1x32xf32, #tpu.memory_space<vmem>>, %arg21: memref<1x1x32xf32, #tpu.memory_space<vmem>>, %arg22: memref<1x1x32xf32, #tpu.memory_space<vmem>>, %arg23: memref<2x128xf32, #tpu.memory_space<vmem>>, %arg24: memref<16x32xf32, #tpu.memory_space<vmem>>) attributes {dimension_semantics = [#tpu.dimension_semantics<parallel>, #tpu.dimension_semantics<arbitrary>], iteration_bounds = array<i64: 1, 2>, scalar_prefetch = 0 : i64, scratch_operands = 1 : i64, tpu.core_type = #tpu.core_type<tc>, window_params = [{transform_indices = @transform_0, window_bounds = array<i64: 2, 8, 16>}, {pipeline_mode = #tpu.pipeline_mode<synchronous>, transform_indices = @transform_1, window_bounds = array<i64: 16, 32>}, {pipeline_mode = #tpu.pipeline_mode<synchronous>, transform_indices = @transform_2, window_bounds = array<i64: 1, 32>}, {pipeline_mode = #tpu.pipeline_mode<synchronous>, transform_indices = @transform_3, window_bounds = array<i64: 32, 128>}, {pipeline_mode = #tpu.pipeline_mode<synchronous>, transform_indices = @transform_4, window_bounds = array<i64: 1, 128>}, {transform_indices = @transform_5, window_bounds = array<i64: 1, 32, 32>}, {transform_indices = @transform_6, window_bounds = array<i64: 1, 1, 32>}, {transform_indices = @transform_7, window_bounds = array<i64: 1, 32, 32>}, {transform_indices = @transform_8, window_bounds = array<i64: 1, 1, 32>}, {transform_indices = @transform_9, window_bounds = array<i64: 1, 32, 32>}, {transform_indices = @transform_10, window_bounds = array<i64: 1, 1, 32>}, {transform_indices = @transform_11, window_bounds = array<i64: 1, 32, 32>}, {transform_indices = @transform_12, window_bounds = array<i64: 1, 1, 32>}, {transform_indices = @transform_13, window_bounds = array<i64: 1, 1, 32>}, {transform_indices = @transform_14, window_bounds = array<i64: 1, 1, 32>}, {transform_indices = @transform_15, window_bounds = array<i64: 1, 32, 2048>}, {transform_indices = @transform_16, window_bounds = array<i64: 1, 1, 2048>}, {transform_indices = @transform_17, window_bounds = array<i64: 1, 2048, 32>}, {transform_indices = @transform_18, window_bounds = array<i64: 1, 1, 32>}, {transform_indices = @transform_19, window_bounds = array<i64: 1, 1, 32>}, {transform_indices = @transform_20, window_bounds = array<i64: 1, 1, 32>}, {transform_indices = @transform_21, window_bounds = array<i64: 2, 128>}]} {
    %c0_i32 = arith.constant 0 : i32
    %0 = arith.cmpi eq, %arg1, %c0_i32 : i32
    %1 = arith.extui %0 : i1 to i32
    %c0_i32_0 = arith.constant 0 : i32
    %2 = arith.cmpi ne, %1, %c0_i32_0 : i32
    scf.if %2 {
      %c0_85 = arith.constant 0 : index
      %c0_86 = arith.constant 0 : index
      %c0_87 = arith.constant 0 : index
      %171 = vector.load %arg2[%c0_85, %c0_86, %c0_87] : memref<2x8x16xf32, #tpu.memory_space<vmem>>, vector<2x8x16xf32>
      %172 = vector.shape_cast %171 : vector<2x8x16xf32> to vector<16x16xf32>
      %173 = arith.truncf %172 : vector<16x16xf32> to vector<16x16xbf16>
      %c0_88 = arith.constant 0 : index
      %c0_89 = arith.constant 0 : index
      %174 = vector.load %arg3[%c0_88, %c0_89] : memref<16x32xbf16, #tpu.memory_space<vmem>>, vector<16x32xbf16>
      %cst_90 = arith.constant dense<0.000000e+00> : vector<16x32xf32>
      %175 = tpu.matmul %173, %174, %cst_90 {dimension_numbers = #tpu.dot_dimension_numbers<[1], [0], [0], [1], [0, 0, 1, 1], [], []>} : vector<16x16xbf16>, vector<16x32xbf16>, vector<16x32xf32> -> vector<16x32xf32>
      %c0_91 = arith.constant 0 : index
      %c0_92 = arith.constant 0 : index
      %176 = vector.load %arg4[%c0_91, %c0_92] : memref<1x32xf32, #tpu.memory_space<vmem>>, vector<1x32xf32>
      %177 = vector.broadcast %176 : vector<1x32xf32> to vector<16x32xf32>
      %178 = arith.addf %175, %177 : vector<16x32xf32>
      %179 = math.tanh %178 : vector<16x32xf32>
      %c0_93 = arith.constant 0 : index
      %c0_94 = arith.constant 0 : index
      %180 = vector.load %arg24[%c0_93, %c0_94] : memref<16x32xf32, #tpu.memory_space<vmem>>, vector<16x32xf32>
      tpu.vector_store %arg24[%c0_93, %c0_94], %179 {strides = array<i32>} : memref<16x32xf32, #tpu.memory_space<vmem>>, vector<16x32xf32>,
    } else {
    }
    %c0 = arith.constant 0 : index
    %c0_1 = arith.constant 0 : index
    %3 = vector.load %arg24[%c0, %c0_1] : memref<16x32xf32, #tpu.memory_space<vmem>>, vector<16x32xf32>
    %4 = arith.truncf %3 : vector<16x32xf32> to vector<16x32xbf16>
    %c0_2 = arith.constant 0 : index
    %c0_3 = arith.constant 0 : index
    %c0_4 = arith.constant 0 : index
    %5 = vector.load %arg7[%c0_2, %c0_3, %c0_4] : memref<1x32x32xbf16, #tpu.memory_space<vmem>>, vector<1x32x32xbf16>
    %6 = vector.shape_cast %5 : vector<1x32x32xbf16> to vector<32x32xbf16>
    %cst = arith.constant dense<0.000000e+00> : vector<16x32xf32>
    %7 = tpu.matmul %4, %6, %cst {dimension_numbers = #tpu.dot_dimension_numbers<[1], [0], [0], [1], [0, 0, 1, 1], [], []>} : vector<16x32xbf16>, vector<32x32xbf16>, vector<16x32xf32> -> vector<16x32xf32>
    %c0_5 = arith.constant 0 : index
    %c0_6 = arith.constant 0 : index
    %c0_7 = arith.constant 0 : index
    %8 = vector.load %arg8[%c0_5, %c0_6, %c0_7] : memref<1x1x32xf32, #tpu.memory_space<vmem>>, vector<1x1x32xf32>
    %9 = vector.shape_cast %8 : vector<1x1x32xf32> to vector<1x32xf32>
    %10 = vector.broadcast %9 : vector<1x32xf32> to vector<16x32xf32>
    %11 = arith.addf %7, %10 : vector<16x32xf32>
    %c0_8 = arith.constant 0 : index
    %c0_9 = arith.constant 0 : index
    %c0_10 = arith.constant 0 : index
    %12 = vector.load %arg9[%c0_8, %c0_9, %c0_10] : memref<1x32x32xbf16, #tpu.memory_space<vmem>>, vector<1x32x32xbf16>
    %13 = vector.shape_cast %12 : vector<1x32x32xbf16> to vector<32x32xbf16>
    %cst_11 = arith.constant dense<0.000000e+00> : vector<16x32xf32>
    %14 = tpu.matmul %4, %13, %cst_11 {dimension_numbers = #tpu.dot_dimension_numbers<[1], [0], [0], [1], [0, 0, 1, 1], [], []>} : vector<16x32xbf16>, vector<32x32xbf16>, vector<16x32xf32> -> vector<16x32xf32>
    %c0_12 = arith.constant 0 : index
    %c0_13 = arith.constant 0 : index
    %c0_14 = arith.constant 0 : index
    %15 = vector.load %arg10[%c0_12, %c0_13, %c0_14] : memref<1x1x32xf32, #tpu.memory_space<vmem>>, vector<1x1x32xf32>
    %16 = vector.shape_cast %15 : vector<1x1x32xf32> to vector<1x32xf32>
    %17 = vector.broadcast %16 : vector<1x32xf32> to vector<16x32xf32>
    %18 = arith.addf %14, %17 : vector<16x32xf32>
    %c0_15 = arith.constant 0 : index
    %c0_16 = arith.constant 0 : index
    %c0_17 = arith.constant 0 : index
    %19 = vector.load %arg11[%c0_15, %c0_16, %c0_17] : memref<1x32x32xbf16, #tpu.memory_space<vmem>>, vector<1x32x32xbf16>
    %20 = vector.shape_cast %19 : vector<1x32x32xbf16> to vector<32x32xbf16>
    %cst_18 = arith.constant dense<0.000000e+00> : vector<16x32xf32>
    %21 = tpu.matmul %4, %20, %cst_18 {dimension_numbers = #tpu.dot_dimension_numbers<[1], [0], [0], [1], [0, 0, 1, 1], [], []>} : vector<16x32xbf16>, vector<32x32xbf16>, vector<16x32xf32> -> vector<16x32xf32>
    %c0_19 = arith.constant 0 : index
    %c0_20 = arith.constant 0 : index
    %c0_21 = arith.constant 0 : index
    %22 = vector.load %arg12[%c0_19, %c0_20, %c0_21] : memref<1x1x32xf32, #tpu.memory_space<vmem>>, vector<1x1x32xf32>
    %23 = vector.shape_cast %22 : vector<1x1x32xf32> to vector<1x32xf32>
    %24 = vector.broadcast %23 : vector<1x32xf32> to vector<16x32xf32>
    %25 = arith.addf %21, %24 : vector<16x32xf32>
    %26 = vector.shape_cast %11 : vector<16x32xf32> to vector<2x8x32xf32>
    %27 = vector.shape_cast %18 : vector<16x32xf32> to vector<2x8x32xf32>
    %28 = vector.shape_cast %25 : vector<16x32xf32> to vector<2x8x32xf32>
    %29 = vector.extract_strided_slice %26 {offsets = [0, 0, 0], sizes = [2, 8, 8], strides = [1, 1, 1]} : vector<2x8x32xf32> to vector<2x8x8xf32>
    %30 = vector.extract_strided_slice %27 {offsets = [0, 0, 0], sizes = [2, 8, 8], strides = [1, 1, 1]} : vector<2x8x32xf32> to vector<2x8x8xf32>
    %31 = vector.extract_strided_slice %28 {offsets = [0, 0, 0], sizes = [2, 8, 8], strides = [1, 1, 1]} : vector<2x8x32xf32> to vector<2x8x8xf32>
    "tpu.trace_start"() <{level = 10 : i32, message = "bqd,bkd->bqk"}> : () -> ()
    %cst_22 = arith.constant dense<0.000000e+00> : vector<2x8x8xf32>
    %32 = tpu.matmul %29, %30, %cst_22 {dimension_numbers = #tpu.dot_dimension_numbers<[2], [2], [1], [1], [0, 0, 0, 1, 1, 1], [0], [0]>} : vector<2x8x8xf32>, vector<2x8x8xf32>, vector<2x8x8xf32> -> vector<2x8x8xf32>
    "tpu.trace_stop"() : () -> ()
    %cst_23 = arith.constant dense<0xFF800000> : vector<2x8xf32>
    %33 = vector.multi_reduction <maximumf>, %32, %cst_23 [2] : vector<2x8x8xf32> to vector<2x8xf32>
    %34 = vector.shape_cast %33 : vector<2x8xf32> to vector<2x8x1xf32>
    %35 = vector.broadcast %34 : vector<2x8x1xf32> to vector<2x8x8xf32>
    %36 = arith.subf %32, %35 : vector<2x8x8xf32>
    %37 = math.exp %36 : vector<2x8x8xf32>
    %cst_24 = arith.constant dense<0.000000e+00> : vector<2x8xf32>
    %38 = vector.multi_reduction <add>, %37, %cst_24 [2] : vector<2x8x8xf32> to vector<2x8xf32>
    %39 = vector.shape_cast %38 : vector<2x8xf32> to vector<2x8x1xf32>
    %40 = tpu.reciprocal %39 {approx = true} : vector<2x8x1xf32> -> vector<2x8x1xf32>
    %41 = vector.broadcast %40 : vector<2x8x1xf32> to vector<2x8x8xf32>
    %42 = arith.mulf %37, %41 : vector<2x8x8xf32>
    "tpu.trace_start"() <{level = 10 : i32, message = "bqk,bkd->bqd"}> : () -> ()
    %cst_25 = arith.constant dense<0.000000e+00> : vector<2x8x8xf32>
    %43 = tpu.matmul %42, %31, %cst_25 {dimension_numbers = #tpu.dot_dimension_numbers<[2], [1], [1], [2], [0, 0, 0, 1, 1, 2], [0], [0]>} : vector<2x8x8xf32>, vector<2x8x8xf32>, vector<2x8x8xf32> -> vector<2x8x8xf32>
    "tpu.trace_stop"() : () -> ()
    %44 = vector.extract_strided_slice %26 {offsets = [0, 0, 8], sizes = [2, 8, 8], strides = [1, 1, 1]} : vector<2x8x32xf32> to vector<2x8x8xf32>
    %45 = vector.extract_strided_slice %27 {offsets = [0, 0, 8], sizes = [2, 8, 8], strides = [1, 1, 1]} : vector<2x8x32xf32> to vector<2x8x8xf32>
    %46 = vector.extract_strided_slice %28 {offsets = [0, 0, 8], sizes = [2, 8, 8], strides = [1, 1, 1]} : vector<2x8x32xf32> to vector<2x8x8xf32>
    "tpu.trace_start"() <{level = 10 : i32, message = "bqd,bkd->bqk"}> : () -> ()
    %cst_26 = arith.constant dense<0.000000e+00> : vector<2x8x8xf32>
    %47 = tpu.matmul %44, %45, %cst_26 {dimension_numbers = #tpu.dot_dimension_numbers<[2], [2], [1], [1], [0, 0, 0, 1, 1, 1], [0], [0]>} : vector<2x8x8xf32>, vector<2x8x8xf32>, vector<2x8x8xf32> -> vector<2x8x8xf32>
    "tpu.trace_stop"() : () -> ()
    %cst_27 = arith.constant dense<0xFF800000> : vector<2x8xf32>
    %48 = vector.multi_reduction <maximumf>, %47, %cst_27 [2] : vector<2x8x8xf32> to vector<2x8xf32>
    %49 = vector.shape_cast %48 : vector<2x8xf32> to vector<2x8x1xf32>
    %50 = vector.broadcast %49 : vector<2x8x1xf32> to vector<2x8x8xf32>
    %51 = arith.subf %47, %50 : vector<2x8x8xf32>
    %52 = math.exp %51 : vector<2x8x8xf32>
    %cst_28 = arith.constant dense<0.000000e+00> : vector<2x8xf32>
    %53 = vector.multi_reduction <add>, %52, %cst_28 [2] : vector<2x8x8xf32> to vector<2x8xf32>
    %54 = vector.shape_cast %53 : vector<2x8xf32> to vector<2x8x1xf32>
    %55 = tpu.reciprocal %54 {approx = true} : vector<2x8x1xf32> -> vector<2x8x1xf32>
    %56 = vector.broadcast %55 : vector<2x8x1xf32> to vector<2x8x8xf32>
    %57 = arith.mulf %52, %56 : vector<2x8x8xf32>
    "tpu.trace_start"() <{level = 10 : i32, message = "bqk,bkd->bqd"}> : () -> ()
    %cst_29 = arith.constant dense<0.000000e+00> : vector<2x8x8xf32>
    %58 = tpu.matmul %57, %46, %cst_29 {dimension_numbers = #tpu.dot_dimension_numbers<[2], [1], [1], [2], [0, 0, 0, 1, 1, 2], [0], [0]>} : vector<2x8x8xf32>, vector<2x8x8xf32>, vector<2x8x8xf32> -> vector<2x8x8xf32>
    "tpu.trace_stop"() : () -> ()
    %59 = vector.extract_strided_slice %26 {offsets = [0, 0, 16], sizes = [2, 8, 8], strides = [1, 1, 1]} : vector<2x8x32xf32> to vector<2x8x8xf32>
    %60 = vector.extract_strided_slice %27 {offsets = [0, 0, 16], sizes = [2, 8, 8], strides = [1, 1, 1]} : vector<2x8x32xf32> to vector<2x8x8xf32>
    %61 = vector.extract_strided_slice %28 {offsets = [0, 0, 16], sizes = [2, 8, 8], strides = [1, 1, 1]} : vector<2x8x32xf32> to vector<2x8x8xf32>
    "tpu.trace_start"() <{level = 10 : i32, message = "bqd,bkd->bqk"}> : () -> ()
    %cst_30 = arith.constant dense<0.000000e+00> : vector<2x8x8xf32>
    %62 = tpu.matmul %59, %60, %cst_30 {dimension_numbers = #tpu.dot_dimension_numbers<[2], [2], [1], [1], [0, 0, 0, 1, 1, 1], [0], [0]>} : vector<2x8x8xf32>, vector<2x8x8xf32>, vector<2x8x8xf32> -> vector<2x8x8xf32>
    "tpu.trace_stop"() : () -> ()
    %cst_31 = arith.constant dense<0xFF800000> : vector<2x8xf32>
    %63 = vector.multi_reduction <maximumf>, %62, %cst_31 [2] : vector<2x8x8xf32> to vector<2x8xf32>
    %64 = vector.shape_cast %63 : vector<2x8xf32> to vector<2x8x1xf32>
    %65 = vector.broadcast %64 : vector<2x8x1xf32> to vector<2x8x8xf32>
    %66 = arith.subf %62, %65 : vector<2x8x8xf32>
    %67 = math.exp %66 : vector<2x8x8xf32>
    %cst_32 = arith.constant dense<0.000000e+00> : vector<2x8xf32>
    %68 = vector.multi_reduction <add>, %67, %cst_32 [2] : vector<2x8x8xf32> to vector<2x8xf32>
    %69 = vector.shape_cast %68 : vector<2x8xf32> to vector<2x8x1xf32>
    %70 = tpu.reciprocal %69 {approx = true} : vector<2x8x1xf32> -> vector<2x8x1xf32>
    %71 = vector.broadcast %70 : vector<2x8x1xf32> to vector<2x8x8xf32>
    %72 = arith.mulf %67, %71 : vector<2x8x8xf32>
    "tpu.trace_start"() <{level = 10 : i32, message = "bqk,bkd->bqd"}> : () -> ()
    %cst_33 = arith.constant dense<0.000000e+00> : vector<2x8x8xf32>
    %73 = tpu.matmul %72, %61, %cst_33 {dimension_numbers = #tpu.dot_dimension_numbers<[2], [1], [1], [2], [0, 0, 0, 1, 1, 2], [0], [0]>} : vector<2x8x8xf32>, vector<2x8x8xf32>, vector<2x8x8xf32> -> vector<2x8x8xf32>
    "tpu.trace_stop"() : () -> ()
    %74 = vector.extract_strided_slice %26 {offsets = [0, 0, 24], sizes = [2, 8, 8], strides = [1, 1, 1]} : vector<2x8x32xf32> to vector<2x8x8xf32>
    %75 = vector.extract_strided_slice %27 {offsets = [0, 0, 24], sizes = [2, 8, 8], strides = [1, 1, 1]} : vector<2x8x32xf32> to vector<2x8x8xf32>
    %76 = vector.extract_strided_slice %28 {offsets = [0, 0, 24], sizes = [2, 8, 8], strides = [1, 1, 1]} : vector<2x8x32xf32> to vector<2x8x8xf32>
    "tpu.trace_start"() <{level = 10 : i32, message = "bqd,bkd->bqk"}> : () -> ()
    %cst_34 = arith.constant dense<0.000000e+00> : vector<2x8x8xf32>
    %77 = tpu.matmul %74, %75, %cst_34 {dimension_numbers = #tpu.dot_dimension_numbers<[2], [2], [1], [1], [0, 0, 0, 1, 1, 1], [0], [0]>} : vector<2x8x8xf32>, vector<2x8x8xf32>, vector<2x8x8xf32> -> vector<2x8x8xf32>
    "tpu.trace_stop"() : () -> ()
    %cst_35 = arith.constant dense<0xFF800000> : vector<2x8xf32>
    %78 = vector.multi_reduction <maximumf>, %77, %cst_35 [2] : vector<2x8x8xf32> to vector<2x8xf32>
    %79 = vector.shape_cast %78 : vector<2x8xf32> to vector<2x8x1xf32>
    %80 = vector.broadcast %79 : vector<2x8x1xf32> to vector<2x8x8xf32>
    %81 = arith.subf %77, %80 : vector<2x8x8xf32>
    %82 = math.exp %81 : vector<2x8x8xf32>
    %cst_36 = arith.constant dense<0.000000e+00> : vector<2x8xf32>
    %83 = vector.multi_reduction <add>, %82, %cst_36 [2] : vector<2x8x8xf32> to vector<2x8xf32>
    %84 = vector.shape_cast %83 : vector<2x8xf32> to vector<2x8x1xf32>
    %85 = tpu.reciprocal %84 {approx = true} : vector<2x8x1xf32> -> vector<2x8x1xf32>
    %86 = vector.broadcast %85 : vector<2x8x1xf32> to vector<2x8x8xf32>
    %87 = arith.mulf %82, %86 : vector<2x8x8xf32>
    "tpu.trace_start"() <{level = 10 : i32, message = "bqk,bkd->bqd"}> : () -> ()
    %cst_37 = arith.constant dense<0.000000e+00> : vector<2x8x8xf32>
    %88 = tpu.matmul %87, %76, %cst_37 {dimension_numbers = #tpu.dot_dimension_numbers<[2], [1], [1], [2], [0, 0, 0, 1, 1, 2], [0], [0]>} : vector<2x8x8xf32>, vector<2x8x8xf32>, vector<2x8x8xf32> -> vector<2x8x8xf32>
    "tpu.trace_stop"() : () -> ()
    %89 = tpu.concatenate %43, %58, %73, %88 in 2 : vector<2x8x8xf32>, vector<2x8x8xf32>, vector<2x8x8xf32>, vector<2x8x8xf32> -> vector<2x8x32xf32>
    %90 = vector.shape_cast %89 : vector<2x8x32xf32> to vector<16x32xf32>
    %91 = arith.truncf %90 : vector<16x32xf32> to vector<16x32xbf16>
    %c0_38 = arith.constant 0 : index
    %c0_39 = arith.constant 0 : index
    %c0_40 = arith.constant 0 : index
    %92 = vector.load %arg13[%c0_38, %c0_39, %c0_40] : memref<1x32x32xbf16, #tpu.memory_space<vmem>>, vector<1x32x32xbf16>
    %93 = vector.shape_cast %92 : vector<1x32x32xbf16> to vector<32x32xbf16>
    %cst_41 = arith.constant dense<0.000000e+00> : vector<16x32xf32>
    %94 = tpu.matmul %91, %93, %cst_41 {dimension_numbers = #tpu.dot_dimension_numbers<[1], [0], [0], [1], [0, 0, 1, 1], [], []>} : vector<16x32xbf16>, vector<32x32xbf16>, vector<16x32xf32> -> vector<16x32xf32>
    %c0_42 = arith.constant 0 : index
    %c0_43 = arith.constant 0 : index
    %c0_44 = arith.constant 0 : index
    %95 = vector.load %arg14[%c0_42, %c0_43, %c0_44] : memref<1x1x32xf32, #tpu.memory_space<vmem>>, vector<1x1x32xf32>
    %96 = vector.shape_cast %95 : vector<1x1x32xf32> to vector<1x32xf32>
    %97 = vector.broadcast %96 : vector<1x32xf32> to vector<16x32xf32>
    %98 = arith.addf %94, %97 : vector<16x32xf32>
    %99 = arith.addf %3, %98 : vector<16x32xf32>
    %c0_45 = arith.constant 0 : index
    %c0_46 = arith.constant 0 : index
    %c0_47 = arith.constant 0 : index
    %100 = vector.load %arg15[%c0_45, %c0_46, %c0_47] : memref<1x1x32xf32, #tpu.memory_space<vmem>>, vector<1x1x32xf32>
    %101 = vector.shape_cast %100 : vector<1x1x32xf32> to vector<1x32xf32>
    %c0_48 = arith.constant 0 : index
    %c0_49 = arith.constant 0 : index
    %c0_50 = arith.constant 0 : index
    %102 = vector.load %arg16[%c0_48, %c0_49, %c0_50] : memref<1x1x32xf32, #tpu.memory_space<vmem>>, vector<1x1x32xf32>
    %103 = vector.shape_cast %102 : vector<1x1x32xf32> to vector<1x32xf32>
    %cst_51 = arith.constant dense<0.000000e+00> : vector<16xf32>
    %104 = vector.multi_reduction <add>, %99, %cst_51 [1] : vector<16x32xf32> to vector<16xf32>
    %105 = vector.shape_cast %104 : vector<16xf32> to vector<16x1xf32>
    %cst_52 = arith.constant 3.200000e+01 : f32
    %106 = vector.broadcast %cst_52 : f32 to vector<16x1xf32>
    %107 = arith.divf %105, %106 : vector<16x1xf32>
    %108 = vector.broadcast %107 : vector<16x1xf32> to vector<16x32xf32>
    %109 = arith.subf %99, %108 : vector<16x32xf32>
    %110 = arith.mulf %109, %109 : vector<16x32xf32>
    %cst_53 = arith.constant dense<0.000000e+00> : vector<16xf32>
    %111 = vector.multi_reduction <add>, %110, %cst_53 [1] : vector<16x32xf32> to vector<16xf32>
    %112 = vector.shape_cast %111 : vector<16xf32> to vector<16x1xf32>
    %cst_54 = arith.constant 3.200000e+01 : f32
    %113 = vector.broadcast %cst_54 : f32 to vector<16x1xf32>
    %114 = arith.divf %112, %113 : vector<16x1xf32>
    %cst_55 = arith.constant 9.99999974E-6 : f32
    %115 = vector.broadcast %cst_55 : f32 to vector<16x1xf32>
    %116 = arith.addf %114, %115 : vector<16x1xf32>
    %117 = math.rsqrt %116 : vector<16x1xf32>
    %118 = vector.broadcast %117 : vector<16x1xf32> to vector<16x32xf32>
    %119 = arith.mulf %109, %118 : vector<16x32xf32>
    %120 = vector.broadcast %101 : vector<1x32xf32> to vector<16x32xf32>
    %121 = arith.mulf %119, %120 : vector<16x32xf32>
    %122 = vector.broadcast %103 : vector<1x32xf32> to vector<16x32xf32>
    %123 = arith.addf %121, %122 : vector<16x32xf32>
    %124 = arith.truncf %123 : vector<16x32xf32> to vector<16x32xbf16>
    %c0_56 = arith.constant 0 : index
    %c0_57 = arith.constant 0 : index
    %c0_58 = arith.constant 0 : index
    %125 = vector.load %arg17[%c0_56, %c0_57, %c0_58] : memref<1x32x2048xbf16, #tpu.memory_space<vmem>>, vector<1x32x2048xbf16>
    %126 = vector.shape_cast %125 : vector<1x32x2048xbf16> to vector<32x2048xbf16>
    %cst_59 = arith.constant dense<0.000000e+00> : vector<16x2048xf32>
    %127 = tpu.matmul %124, %126, %cst_59 {dimension_numbers = #tpu.dot_dimension_numbers<[1], [0], [0], [1], [0, 0, 1, 1], [], []>} : vector<16x32xbf16>, vector<32x2048xbf16>, vector<16x2048xf32> -> vector<16x2048xf32>
    %c0_60 = arith.constant 0 : index
    %c0_61 = arith.constant 0 : index
    %c0_62 = arith.constant 0 : index
    %128 = vector.load %arg18[%c0_60, %c0_61, %c0_62] : memref<1x1x2048xf32, #tpu.memory_space<vmem>>, vector<1x1x2048xf32>
    %129 = vector.shape_cast %128 : vector<1x1x2048xf32> to vector<1x2048xf32>
    %130 = vector.broadcast %129 : vector<1x2048xf32> to vector<16x2048xf32>
    %131 = arith.addf %127, %130 : vector<16x2048xf32>
    %cst_63 = arith.constant 0.000000e+00 : f32
    %132 = vector.broadcast %cst_63 : f32 to vector<16x2048xf32>
    %133 = arith.maximumf %131, %132 : vector<16x2048xf32>
    %134 = arith.truncf %133 : vector<16x2048xf32> to vector<16x2048xbf16>
    %c0_64 = arith.constant 0 : index
    %c0_65 = arith.constant 0 : index
    %c0_66 = arith.constant 0 : index
    %135 = vector.load %arg19[%c0_64, %c0_65, %c0_66] : memref<1x2048x32xbf16, #tpu.memory_space<vmem>>, vector<1x2048x32xbf16>
    %136 = vector.shape_cast %135 : vector<1x2048x32xbf16> to vector<2048x32xbf16>
    %cst_67 = arith.constant dense<0.000000e+00> : vector<16x32xf32>
    %137 = tpu.matmul %134, %136, %cst_67 {dimension_numbers = #tpu.dot_dimension_numbers<[1], [0], [0], [1], [0, 0, 1, 1], [], []>} : vector<16x2048xbf16>, vector<2048x32xbf16>, vector<16x32xf32> -> vector<16x32xf32>
    %c0_68 = arith.constant 0 : index
    %c0_69 = arith.constant 0 : index
    %c0_70 = arith.constant 0 : index
    %138 = vector.load %arg20[%c0_68, %c0_69, %c0_70] : memref<1x1x32xf32, #tpu.memory_space<vmem>>, vector<1x1x32xf32>
    %139 = vector.shape_cast %138 : vector<1x1x32xf32> to vector<1x32xf32>
    %140 = vector.broadcast %139 : vector<1x32xf32> to vector<16x32xf32>
    %141 = arith.addf %137, %140 : vector<16x32xf32>
    %142 = arith.addf %123, %141 : vector<16x32xf32>
    %c0_71 = arith.constant 0 : index
    %c0_72 = arith.constant 0 : index
    %c0_73 = arith.constant 0 : index
    %143 = vector.load %arg21[%c0_71, %c0_72, %c0_73] : memref<1x1x32xf32, #tpu.memory_space<vmem>>, vector<1x1x32xf32>
    %144 = vector.shape_cast %143 : vector<1x1x32xf32> to vector<1x32xf32>
    %c0_74 = arith.constant 0 : index
    %c0_75 = arith.constant 0 : index
    %c0_76 = arith.constant 0 : index
    %145 = vector.load %arg22[%c0_74, %c0_75, %c0_76] : memref<1x1x32xf32, #tpu.memory_space<vmem>>, vector<1x1x32xf32>
    %146 = vector.shape_cast %145 : vector<1x1x32xf32> to vector<1x32xf32>
    %cst_77 = arith.constant dense<0.000000e+00> : vector<16xf32>
    %147 = vector.multi_reduction <add>, %142, %cst_77 [1] : vector<16x32xf32> to vector<16xf32>
    %148 = vector.shape_cast %147 : vector<16xf32> to vector<16x1xf32>
    %cst_78 = arith.constant 3.200000e+01 : f32
    %149 = vector.broadcast %cst_78 : f32 to vector<16x1xf32>
    %150 = arith.divf %148, %149 : vector<16x1xf32>
    %151 = vector.broadcast %150 : vector<16x1xf32> to vector<16x32xf32>
    %152 = arith.subf %142, %151 : vector<16x32xf32>
    %153 = arith.mulf %152, %152 : vector<16x32xf32>
    %cst_79 = arith.constant dense<0.000000e+00> : vector<16xf32>
    %154 = vector.multi_reduction <add>, %153, %cst_79 [1] : vector<16x32xf32> to vector<16xf32>
    %155 = vector.shape_cast %154 : vector<16xf32> to vector<16x1xf32>
    %cst_80 = arith.constant 3.200000e+01 : f32
    %156 = vector.broadcast %cst_80 : f32 to vector<16x1xf32>
    %157 = arith.divf %155, %156 : vector<16x1xf32>
    %cst_81 = arith.constant 9.99999974E-6 : f32
    %158 = vector.broadcast %cst_81 : f32 to vector<16x1xf32>
    %159 = arith.addf %157, %158 : vector<16x1xf32>
    %160 = math.rsqrt %159 : vector<16x1xf32>
    %161 = vector.broadcast %160 : vector<16x1xf32> to vector<16x32xf32>
    %162 = arith.mulf %152, %161 : vector<16x32xf32>
    %163 = vector.broadcast %144 : vector<1x32xf32> to vector<16x32xf32>
    %164 = arith.mulf %162, %163 : vector<16x32xf32>
    %165 = vector.broadcast %146 : vector<1x32xf32> to vector<16x32xf32>
    %166 = arith.addf %164, %165 : vector<16x32xf32>
    %c0_82 = arith.constant 0 : index
    %c0_83 = arith.constant 0 : index
    %167 = vector.load %arg24[%c0_82, %c0_83] : memref<16x32xf32, #tpu.memory_space<vmem>>, vector<16x32xf32>
    tpu.vector_store %arg24[%c0_82, %c0_83], %166 {strides = array<i32>} : memref<16x32xf32, #tpu.memory_space<vmem>>, vector<16x32xf32>,
    %c1_i32 = arith.constant 1 : i32
    %168 = arith.cmpi eq, %arg1, %c1_i32 : i32
    %169 = arith.extui %168 : i1 to i32
    %c0_i32_84 = arith.constant 0 : i32
    %170 = arith.cmpi ne, %169, %c0_i32_84 : i32
    scf.if %170 {
      %171 = vector.shape_cast %166 : vector<16x32xf32> to vector<2x8x32xf32>
      %172 = vector.extract_strided_slice %171 {offsets = [0, 7, 0], sizes = [2, 1, 32], strides = [1, 1, 1]} : vector<2x8x32xf32> to vector<2x1x32xf32>
      %173 = vector.shape_cast %172 : vector<2x1x32xf32> to vector<2x32xf32>
      %174 = arith.truncf %173 : vector<2x32xf32> to vector<2x32xbf16>
      %c0_85 = arith.constant 0 : index
      %c0_86 = arith.constant 0 : index
      %175 = vector.load %arg5[%c0_85, %c0_86] : memref<32x128xbf16, #tpu.memory_space<vmem>>, vector<32x128xbf16>
      %cst_87 = arith.constant dense<0.000000e+00> : vector<2x128xf32>
      %176 = tpu.matmul %174, %175, %cst_87 {dimension_numbers = #tpu.dot_dimension_numbers<[1], [0], [0], [1], [0, 0, 1, 1], [], []>} : vector<2x32xbf16>, vector<32x128xbf16>, vector<2x128xf32> -> vector<2x128xf32>
      %c0_88 = arith.constant 0 : index
      %c0_89 = arith.constant 0 : index
      %177 = vector.load %arg6[%c0_88, %c0_89] : memref<1x128xf32, #tpu.memory_space<vmem>>, vector<1x128xf32>
      %178 = vector.broadcast %177 : vector<1x128xf32> to vector<2x128xf32>
      %179 = arith.addf %176, %178 : vector<2x128xf32>
      %180 = math.tanh %179 : vector<2x128xf32>
      %c0_90 = arith.constant 0 : index
      %c0_91 = arith.constant 0 : index
      %181 = vector.load %arg23[%c0_90, %c0_91] : memref<2x128xf32, #tpu.memory_space<vmem>>, vector<2x128xf32>
      tpu.vector_store %arg23[%c0_90, %c0_91], %180 {strides = array<i32>} : memref<2x128xf32, #tpu.memory_space<vmem>>, vector<2x128xf32>,
    } else {
    }
    return
  }
  func.func @transform_0(%arg0: i32, %arg1: i32) -> (i32, i32, i32) {
    %c0_i32 = arith.constant 0 : i32
    %c0_i32_0 = arith.constant 0 : i32
    %c0_i32_1 = arith.constant 0 : i32
    return %arg0, %c0_i32, %c0_i32_0 : i32, i32, i32
  }
  func.func @transform_1(%arg0: i32, %arg1: i32) -> (i32, i32) {
    %c0_i32 = arith.constant 0 : i32
    %c0_i32_0 = arith.constant 0 : i32
    %c0_i32_1 = arith.constant 0 : i32
    return %c0_i32, %c0_i32_0 : i32, i32
  }
  func.func @transform_2(%arg0: i32, %arg1: i32) -> (i32, i32) {
    %c0_i32 = arith.constant 0 : i32
    %c0_i32_0 = arith.constant 0 : i32
    %c0_i32_1 = arith.constant 0 : i32
    return %c0_i32, %c0_i32_0 : i32, i32
  }
  func.func @transform_3(%arg0: i32, %arg1: i32) -> (i32, i32) {
    %c0_i32 = arith.constant 0 : i32
    %c0_i32_0 = arith.constant 0 : i32
    %c0_i32_1 = arith.constant 0 : i32
    return %c0_i32, %c0_i32_0 : i32, i32
  }
  func.func @transform_4(%arg0: i32, %arg1: i32) -> (i32, i32) {
    %c0_i32 = arith.constant 0 : i32
    %c0_i32_0 = arith.constant 0 : i32
    %c0_i32_1 = arith.constant 0 : i32
    return %c0_i32, %c0_i32_0 : i32, i32
  }
  func.func @transform_5(%arg0: i32, %arg1: i32) -> (i32, i32, i32) {
    %c0_i32 = arith.constant 0 : i32
    %c0_i32_0 = arith.constant 0 : i32
    %c0_i32_1 = arith.constant 0 : i32
    return %arg1, %c0_i32, %c0_i32_0 : i32, i32, i32
  }
  func.func @transform_6(%arg0: i32, %arg1: i32) -> (i32, i32, i32) {
    %c0_i32 = arith.constant 0 : i32
    %c0_i32_0 = arith.constant 0 : i32
    %c0_i32_1 = arith.constant 0 : i32
    return %arg1, %c0_i32, %c0_i32_0 : i32, i32, i32
  }
  func.func @transform_7(%arg0: i32, %arg1: i32) -> (i32, i32, i32) {
    %c0_i32 = arith.constant 0 : i32
    %c0_i32_0 = arith.constant 0 : i32
    %c0_i32_1 = arith.constant 0 : i32
    return %arg1, %c0_i32, %c0_i32_0 : i32, i32, i32
  }
  func.func @transform_8(%arg0: i32, %arg1: i32) -> (i32, i32, i32) {
    %c0_i32 = arith.constant 0 : i32
    %c0_i32_0 = arith.constant 0 : i32
    %c0_i32_1 = arith.constant 0 : i32
    return %arg1, %c0_i32, %c0_i32_0 : i32, i32, i32
  }
  func.func @transform_9(%arg0: i32, %arg1: i32) -> (i32, i32, i32) {
    %c0_i32 = arith.constant 0 : i32
    %c0_i32_0 = arith.constant 0 : i32
    %c0_i32_1 = arith.constant 0 : i32
    return %arg1, %c0_i32, %c0_i32_0 : i32, i32, i32
  }
  func.func @transform_10(%arg0: i32, %arg1: i32) -> (i32, i32, i32) {
    %c0_i32 = arith.constant 0 : i32
    %c0_i32_0 = arith.constant 0 : i32
    %c0_i32_1 = arith.constant 0 : i32
    return %arg1, %c0_i32, %c0_i32_0 : i32, i32, i32
  }
  func.func @transform_11(%arg0: i32, %arg1: i32) -> (i32, i32, i32) {
    %c0_i32 = arith.constant 0 : i32
    %c0_i32_0 = arith.constant 0 : i32
    %c0_i32_1 = arith.constant 0 : i32
    return %arg1, %c0_i32, %c0_i32_0 : i32, i32, i32
  }
  func.func @transform_12(%arg0: i32, %arg1: i32) -> (i32, i32, i32) {
    %c0_i32 = arith.constant 0 : i32
    %c0_i32_0 = arith.constant 0 : i32
    %c0_i32_1 = arith.constant 0 : i32
    return %arg1, %c0_i32, %c0_i32_0 : i32, i32, i32
  }
  func.func @transform_13(%arg0: i32, %arg1: i32) -> (i32, i32, i32) {
    %c0_i32 = arith.constant 0 : i32
    %c0_i32_0 = arith.constant 0 : i32
    %c0_i32_1 = arith.constant 0 : i32
    return %arg1, %c0_i32, %c0_i32_0 : i32, i32, i32
  }
  func.func @transform_14(%arg0: i32, %arg1: i32) -> (i32, i32, i32) {
    %c0_i32 = arith.constant 0 : i32
    %c0_i32_0 = arith.constant 0 : i32
    %c0_i32_1 = arith.constant 0 : i32
    return %arg1, %c0_i32, %c0_i32_0 : i32, i32, i32
  }
  func.func @transform_15(%arg0: i32, %arg1: i32) -> (i32, i32, i32) {
    %c0_i32 = arith.constant 0 : i32
    %c0_i32_0 = arith.constant 0 : i32
    %c0_i32_1 = arith.constant 0 : i32
    return %arg1, %c0_i32, %c0_i32_0 : i32, i32, i32
  }
  func.func @transform_16(%arg0: i32, %arg1: i32) -> (i32, i32, i32) {
    %c0_i32 = arith.constant 0 : i32
    %c0_i32_0 = arith.constant 0 : i32
    %c0_i32_1 = arith.constant 0 : i32
    return %arg1, %c0_i32, %c0_i32_0 : i32, i32, i32
  }
  func.func @transform_17(%arg0: i32, %arg1: i32) -> (i32, i32, i32) {
    %c0_i32 = arith.constant 0 : i32
    %c0_i32_0 = arith.constant 0 : i32
    %c0_i32_1 = arith.constant 0 : i32
    return %arg1, %c0_i32, %c0_i32_0 : i32, i32, i32
  }
  func.func @transform_18(%arg0: i32, %arg1: i32) -> (i32, i32, i32) {
    %c0_i32 = arith.constant 0 : i32
    %c0_i32_0 = arith.constant 0 : i32
    %c0_i32_1 = arith.constant 0 : i32
    return %arg1, %c0_i32, %c0_i32_0 : i32, i32, i32
  }
  func.func @transform_19(%arg0: i32, %arg1: i32) -> (i32, i32, i32) {
    %c0_i32 = arith.constant 0 : i32
    %c0_i32_0 = arith.constant 0 : i32
    %c0_i32_1 = arith.constant 0 : i32
    return %arg1, %c0_i32, %c0_i32_0 : i32, i32, i32
  }
  func.func @transform_20(%arg0: i32, %arg1: i32) -> (i32, i32, i32) {
    %c0_i32 = arith.constant 0 : i32
    %c0_i32_0 = arith.constant 0 : i32
    %c0_i32_1 = arith.constant 0 : i32
    return %arg1, %c0_i32, %c0_i32_0 : i32, i32, i32
  }
  func.func @transform_21(%arg0: i32, %arg1: i32) -> (i32, i32) {
    %c0_i32 = arith.constant 0 : i32
    %c0_i32_0 = arith.constant 0 : i32
    return %arg0, %c0_i32 : i32, i32
  }
}

</mosaic_0001>

<llo_original>
// kernel: tpu_custom_call.1
$region0: #{tpu_custom_call.1}
  #allocation0 [shape = 'u32[]', space=smem, size = 0x4, offset = 0x4, fixed_abs, tag = 'smem constant byte address 0x4 - core index']
  #allocation1 [shape = 'u32[144,128]{1,0:T(1,128)}', space=vmem, size = 0x12000, scoped, tag = 'internal scratch']
  #allocation2 [shape = 'f32[16,32]{1,0:T(8,128)}', space=vmem, size = 0x2000, scoped, tag = 'scratch operand']
  %s0 = inlined_call_operand.vmem [shape: f32[2,8,16], index: 0, kind: input, shape index: {}]
  %s1 = inlined_call_operand.vmem [shape: bf16[16,32], index: 1, kind: input, shape index: {}]
  %s2 = inlined_call_operand.vmem [shape: f32[1,32], index: 2, kind: input, shape index: {}]
  %s3 = inlined_call_operand.vmem [shape: bf16[32,128], index: 3, kind: input, shape index: {}]
  %s4 = inlined_call_operand.vmem [shape: f32[1,128], index: 4, kind: input, shape index: {}]
  %s5 = inlined_call_operand.vmem [shape: bf16[2,32,32], index: 5, kind: input, shape index: {}]
  %s6 = inlined_call_operand.vmem [shape: f32[2,1,32], index: 6, kind: input, shape index: {}]
  %s7 = inlined_call_operand.vmem [shape: bf16[2,32,32], index: 7, kind: input, shape index: {}]
  %s8 = inlined_call_operand.vmem [shape: f32[2,1,32], index: 8, kind: input, shape index: {}]
  %s9 = inlined_call_operand.vmem [shape: bf16[2,32,32], index: 9, kind: input, shape index: {}]
  %s10 = inlined_call_operand.vmem [shape: f32[2,1,32], index: 10, kind: input, shape index: {}]
  %s11 = inlined_call_operand.vmem [shape: bf16[2,32,32], index: 11, kind: input, shape index: {}]
  %s12 = inlined_call_operand.vmem [shape: f32[2,1,32], index: 12, kind: input, shape index: {}]
  %s13 = inlined_call_operand.vmem [shape: f32[2,1,32], index: 13, kind: input, shape index: {}]
  %s14 = inlined_call_operand.vmem [shape: f32[2,1,32], index: 14, kind: input, shape index: {}]
  %s15 = inlined_call_operand.vmem [shape: bf16[2,32,2048], index: 15, kind: input, shape index: {}]
  %s16 = inlined_call_operand.vmem [shape: f32[2,1,2048], index: 16, kind: input, shape index: {}]
  %s17 = inlined_call_operand.vmem [shape: bf16[2,2048,32], index: 17, kind: input, shape index: {}]
  %s18 = inlined_call_operand.vmem [shape: f32[2,1,32], index: 18, kind: input, shape index: {}]
  %s19 = inlined_call_operand.vmem [shape: f32[2,1,32], index: 19, kind: input, shape index: {}]
  %s20 = inlined_call_operand.vmem [shape: f32[2,1,32], index: 20, kind: input, shape index: {}]
  %s21 = inlined_call_operand.hbm [shape: f32[2,128], index: 21, kind: output, shape index: {}]
  %s22 = sld [smem:[#allocation0]]
  $region125: #{tpu_custom_call.1} parent=0
    _
  %s24 = ssub.s32 1, %s22
  %s25 = scalar_select 0, %s24, %s22
  $region1: #{tpu_custom_call.1} parent=0
    #allocation3 [shape = 'u8[1024]{0}', space=vmem, size = 0x400, scoped, tag = 'output window, operand 0, single buffered']
    #allocation4 [shape = 's32[2]{0}', space=sflag, size = 0x8, scoped, tag = 'scoped memory for tpu_custom_call.1']
    %26 = vsyncpa [#allocation4], 0
    loop: start=0, step=1, limit=4
    $region2: #{tpu_custom_call.1} parent=1 // loop_pre_header
      _
    $region3: #{tpu_custom_call.1} parent=1 // loop_header
      %s28 = sphi 0, %s32
      %p29 = scmp.ge.s32.totalorder %s28, 4
      %s35 = sphi 0, %s47
      %s36 = sphi 0, %s43
      %s37 = sphi 0, %s35
      %s38 = sphi 0, %s36
      %s39 = sphi 0, %s37
      %s40 = sphi 0, %s38
      %s50 = sphi 0, %s52
      %s53 = sphi 0, %s50
      %s54 = sphi 0, %s53
      %s70 = sphi 0, %s54
      %s74 = sphi 0, %s74
      %s76 = sphi 0, %s74
      %s77 = sphi 0, %s76
      %s91 = sphi 0, %s77
      %s95 = sphi 0, %s95
      %s97 = sphi 0, %s95
      %s98 = sphi 0, %s97
      %s112 = sphi 0, %s98
      %s116 = sphi 0, %s116
      %s118 = sphi 0, %s116
      %s119 = sphi 0, %s118
      %s133 = sphi 0, %s119
      %s137 = sphi 0, %s137
      %s139 = sphi 0, %s137
      %s140 = sphi 0, %s139
      %s154 = sphi 0, %s140
      %s160 = sphi 0, %s162
      %s163 = sphi 0, %s160
      %s164 = sphi 0, %s163
      %s180 = sphi 0, %s164
      %s186 = sphi 0, %s188
      %s189 = sphi 0, %s186
      %s190 = sphi 0, %s189
      %s206 = sphi 0, %s190
      %s212 = sphi 0, %s214
      %s215 = sphi 0, %s212
      %s216 = sphi 0, %s215
      %s232 = sphi 0, %s216
      %s238 = sphi 0, %s240
      %s241 = sphi 0, %s238
      %s242 = sphi 0, %s241
      %s258 = sphi 0, %s242
      %s264 = sphi 0, %s266
      %s267 = sphi 0, %s264
      %s268 = sphi 0, %s267
      %s284 = sphi 0, %s268
      %s290 = sphi 0, %s292
      %s293 = sphi 0, %s290
      %s294 = sphi 0, %s293
      %s310 = sphi 0, %s294
      %s316 = sphi 0, %s318
      %s319 = sphi 0, %s316
      %s320 = sphi 0, %s319
      %s336 = sphi 0, %s320
      %s342 = sphi 0, %s344
      %s345 = sphi 0, %s342
      %s346 = sphi 0, %s345
      %s362 = sphi 0, %s346
      %s368 = sphi 0, %s370
      %s371 = sphi 0, %s368
      %s372 = sphi 0, %s371
      %s388 = sphi 0, %s372
      %s394 = sphi 0, %s396
      %s397 = sphi 0, %s394
      %s398 = sphi 0, %s397
      %s414 = sphi 0, %s398
      %s420 = sphi 0, %s422
      %s423 = sphi 0, %s420
      %s424 = sphi 0, %s423
      %s440 = sphi 0, %s424
      %s446 = sphi 0, %s448
      %s449 = sphi 0, %s446
      %s450 = sphi 0, %s449
      %s466 = sphi 0, %s450
      %s472 = sphi 0, %s474
      %s475 = sphi 0, %s472
      %s476 = sphi 0, %s475
      %s492 = sphi 0, %s476
      %s498 = sphi 0, %s500
      %s501 = sphi 0, %s498
      %s502 = sphi 0, %s501
      %s518 = sphi 0, %s502
      %s524 = sphi 0, %s526
      %s527 = sphi 0, %s524
      %s528 = sphi 0, %s527
      %s544 = sphi 0, %s528
      %s550 = sphi 0, %s552
      %s553 = sphi 0, %s550
      %s554 = sphi 0, %s553
      %s570 = sphi 0, %s554
      %s576 = sphi 0, %s578
      %s579 = sphi 0, %s576
      %s580 = sphi 0, %s579
      %s596 = sphi 0, %s580
    $region4: #{tpu_custom_call.1} parent=1 // loop_header_branch
      %31 = sbr.rel (%p29) target = $region8
    $region5: #{tpu_custom_call.1} parent=1 // loop_body
      %s33 = ssub.s32 %s28, 1
      %s34 = ssub.s32 %s28, 2
      %s41 = sadd.s32 1, %s36
      %p42 = scmp.ge.s32.totalorder %s41, 2
      %s43 = scalar_select %p42, 0, %s41
      %s44 = sadd.s32 1, %s35
      %s45 = scalar_select %p42, %s44, %s35
      %p46 = scmp.ge.s32.totalorder %s45, 1
      %s47 = scalar_select %p46, 0, %s45
      %s48 = ssub.s32 %s35, %s47
      %p49 = scmp.eq.s32.totalorder %s48, 0
      %s51 = sadd.s32 %s50, 1
      %s52 = scalar_select %p49, %s50, %s51
      %p55 = pneg %p49
      %p56 = scmp.eq.s32.totalorder %s28, 1
      %p57 = por %p55, %p56
      %p58 = scmp.ne.s32.totalorder %s50, %s53
      %p59 = scmp.eq.s32.totalorder %s28, 0
      %p60 = por %p58, %p59
      %p61 = scmp.ne.s32.totalorder %s50, %s53
      %p62 = scmp.eq.s32.totalorder %s33, 1
      %p63 = por %p61, %p62
      %p64 = scmp.ne.s32.totalorder %s53, %s54
      %p65 = scmp.eq.s32.totalorder %s33, 0
      %p66 = por %p64, %p65
      %p67 = scmp.ne.s32.totalorder %s53, %s54
      %p68 = scmp.eq.s32.totalorder %s34, 1
      %p69 = por %p67, %p68
      %p71 = scmp.ne.s32.totalorder %s54, %s70
      %p72 = scmp.eq.s32.totalorder %s34, 0
      %p73 = por %p71, %p72
      %s75 = sadd.s32 %s74, 1
      %p78 = scmp.eq.s32.totalorder %s28, 1
      %p79 = scmp.ne.s32.totalorder %s74, %s76
      %p80 = scmp.eq.s32.totalorder %s28, 0
      %p81 = por %p79, %p80
      %p82 = scmp.ne.s32.totalorder %s74, %s76
      %p83 = scmp.eq.s32.totalorder %s33, 1
      %p84 = por %p82, %p83
      %p85 = scmp.ne.s32.totalorder %s76, %s77
      %p86 = scmp.eq.s32.totalorder %s33, 0
      %p87 = por %p85, %p86
      %p88 = scmp.ne.s32.totalorder %s76, %s77
      %p89 = scmp.eq.s32.totalorder %s34, 1
      %p90 = por %p88, %p89
      %p92 = scmp.ne.s32.totalorder %s77, %s91
      %p93 = scmp.eq.s32.totalorder %s34, 0
      %p94 = por %p92, %p93
      %s96 = sadd.s32 %s95, 1
      %p99 = scmp.eq.s32.totalorder %s28, 1
      %p100 = scmp.ne.s32.totalorder %s95, %s97
      %p101 = scmp.eq.s32.totalorder %s28, 0
      %p102 = por %p100, %p101
      %p103 = scmp.ne.s32.totalorder %s95, %s97
      %p104 = scmp.eq.s32.totalorder %s33, 1
      %p105 = por %p103, %p104
      %p106 = scmp.ne.s32.totalorder %s97, %s98
      %p107 = scmp.eq.s32.totalorder %s33, 0
      %p108 = por %p106, %p107
      %p109 = scmp.ne.s32.totalorder %s97, %s98
      %p110 = scmp.eq.s32.totalorder %s34, 1
      %p111 = por %p109, %p110
      %p113 = scmp.ne.s32.totalorder %s98, %s112
      %p114 = scmp.eq.s32.totalorder %s34, 0
      %p115 = por %p113, %p114
      %s117 = sadd.s32 %s116, 1
      %p120 = scmp.eq.s32.totalorder %s28, 1
      %p121 = scmp.ne.s32.totalorder %s116, %s118
      %p122 = scmp.eq.s32.totalorder %s28, 0
      %p123 = por %p121, %p122
      %p124 = scmp.ne.s32.totalorder %s116, %s118
      %p125 = scmp.eq.s32.totalorder %s33, 1
      %p126 = por %p124, %p125
      %p127 = scmp.ne.s32.totalorder %s118, %s119
      %p128 = scmp.eq.s32.totalorder %s33, 0
      %p129 = por %p127, %p128
      %p130 = scmp.ne.s32.totalorder %s118, %s119
      %p131 = scmp.eq.s32.totalorder %s34, 1
      %p132 = por %p130, %p131
      %p134 = scmp.ne.s32.totalorder %s119, %s133
      %p135 = scmp.eq.s32.totalorder %s34, 0
      %p136 = por %p134, %p135
      %s138 = sadd.s32 %s137, 1
      %p141 = scmp.eq.s32.totalorder %s28, 1
      %p142 = scmp.ne.s32.totalorder %s137, %s139
      %p143 = scmp.eq.s32.totalorder %s28, 0
      %p144 = por %p142, %p143
      %p145 = scmp.ne.s32.totalorder %s137, %s139
      %p146 = scmp.eq.s32.totalorder %s33, 1
      %p147 = por %p145, %p146
      %p148 = scmp.ne.s32.totalorder %s139, %s140
      %p149 = scmp.eq.s32.totalorder %s33, 0
      %p150 = por %p148, %p149
      %p151 = scmp.ne.s32.totalorder %s139, %s140
      %p152 = scmp.eq.s32.totalorder %s34, 1
      %p153 = por %p151, %p152
      %p155 = scmp.ne.s32.totalorder %s140, %s154
      %p156 = scmp.eq.s32.totalorder %s34, 0
      %p157 = por %p155, %p156
      %s158 = ssub.s32 %s36, %s43
      %p159 = scmp.eq.s32.totalorder %s158, 0
      %s161 = sadd.s32 %s160, 1
      %s162 = scalar_select %p159, %s160, %s161
      %p165 = pneg %p159
      %p166 = scmp.eq.s32.totalorder %s28, 1
      %p167 = por %p165, %p166
      %p168 = scmp.ne.s32.totalorder %s160, %s163
      %p169 = scmp.eq.s32.totalorder %s28, 0
      %p170 = por %p168, %p169
      %p171 = scmp.ne.s32.totalorder %s160, %s163
      %p172 = scmp.eq.s32.totalorder %s33, 1
      %p173 = por %p171, %p172
      %p174 = scmp.ne.s32.totalorder %s163, %s164
      %p175 = scmp.eq.s32.totalorder %s33, 0
      %p176 = por %p174, %p175
      %p177 = scmp.ne.s32.totalorder %s163, %s164
      %p178 = scmp.eq.s32.totalorder %s34, 1
      %p179 = por %p177, %p178
      %p181 = scmp.ne.s32.totalorder %s164, %s180
      %p182 = scmp.eq.s32.totalorder %s34, 0
      %p183 = por %p181, %p182
      %s184 = ssub.s32 %s36, %s43
      %p185 = scmp.eq.s32.totalorder %s184, 0
      %s187 = sadd.s32 %s186, 1
      %s188 = scalar_select %p185, %s186, %s187
      %p191 = pneg %p185
      %p192 = scmp.eq.s32.totalorder %s28, 1
      %p193 = por %p191, %p192
      %p194 = scmp.ne.s32.totalorder %s186, %s189
      %p195 = scmp.eq.s32.totalorder %s28, 0
      %p196 = por %p194, %p195
      %p197 = scmp.ne.s32.totalorder %s186, %s189
      %p198 = scmp.eq.s32.totalorder %s33, 1
      %p199 = por %p197, %p198
      %p200 = scmp.ne.s32.totalorder %s189, %s190
      %p201 = scmp.eq.s32.totalorder %s33, 0
      %p202 = por %p200, %p201
      %p203 = scmp.ne.s32.totalorder %s189, %s190
      %p204 = scmp.eq.s32.totalorder %s34, 1
      %p205 = por %p203, %p204
      %p207 = scmp.ne.s32.totalorder %s190, %s206
      %p208 = scmp.eq.s32.totalorder %s34, 0
      %p209 = por %p207, %p208
      %s210 = ssub.s32 %s36, %s43
      %p211 = scmp.eq.s32.totalorder %s210, 0
      %s213 = sadd.s32 %s212, 1
      %s214 = scalar_select %p211, %s212, %s213
      %p217 = pneg %p211
      %p218 = scmp.eq.s32.totalorder %s28, 1
      %p219 = por %p217, %p218
      %p220 = scmp.ne.s32.totalorder %s212, %s215
      %p221 = scmp.eq.s32.totalorder %s28, 0
      %p222 = por %p220, %p221
      %p223 = scmp.ne.s32.totalorder %s212, %s215
      %p224 = scmp.eq.s32.totalorder %s33, 1
      %p225 = por %p223, %p224
      %p226 = scmp.ne.s32.totalorder %s215, %s216
      %p227 = scmp.eq.s32.totalorder %s33, 0
      %p228 = por %p226, %p227
      %p229 = scmp.ne.s32.totalorder %s215, %s216
      %p230 = scmp.eq.s32.totalorder %s34, 1
      %p231 = por %p229, %p230
      %p233 = scmp.ne.s32.totalorder %s216, %s232
      %p234 = scmp.eq.s32.totalorder %s34, 0
      %p235 = por %p233, %p234
      %s236 = ssub.s32 %s36, %s43
      %p237 = scmp.eq.s32.totalorder %s236, 0
      %s239 = sadd.s32 %s238, 1
      %s240 = scalar_select %p237, %s238, %s239
      %p243 = pneg %p237
      %p244 = scmp.eq.s32.totalorder %s28, 1
      %p245 = por %p243, %p244
      %p246 = scmp.ne.s32.totalorder %s238, %s241
      %p247 = scmp.eq.s32.totalorder %s28, 0
      %p248 = por %p246, %p247
      %p249 = scmp.ne.s32.totalorder %s238, %s241
      %p250 = scmp.eq.s32.totalorder %s33, 1
      %p251 = por %p249, %p250
      %p252 = scmp.ne.s32.totalorder %s241, %s242
      %p253 = scmp.eq.s32.totalorder %s33, 0
      %p254 = por %p252, %p253
      %p255 = scmp.ne.s32.totalorder %s241, %s242
      %p256 = scmp.eq.s32.totalorder %s34, 1
      %p257 = por %p255, %p256
      %p259 = scmp.ne.s32.totalorder %s242, %s258
      %p260 = scmp.eq.s32.totalorder %s34, 0
      %p261 = por %p259, %p260
      %s262 = ssub.s32 %s36, %s43
      %p263 = scmp.eq.s32.totalorder %s262, 0
      %s265 = sadd.s32 %s264, 1
      %s266 = scalar_select %p263, %s264, %s265
      %p269 = pneg %p263
      %p270 = scmp.eq.s32.totalorder %s28, 1
      %p271 = por %p269, %p270
      %p272 = scmp.ne.s32.totalorder %s264, %s267
      %p273 = scmp.eq.s32.totalorder %s28, 0
      %p274 = por %p272, %p273
      %p275 = scmp.ne.s32.totalorder %s264, %s267
      %p276 = scmp.eq.s32.totalorder %s33, 1
      %p277 = por %p275, %p276
      %p278 = scmp.ne.s32.totalorder %s267, %s268
      %p279 = scmp.eq.s32.totalorder %s33, 0
      %p280 = por %p278, %p279
      %p281 = scmp.ne.s32.totalorder %s267, %s268
      %p282 = scmp.eq.s32.totalorder %s34, 1
      %p283 = por %p281, %p282
      %p285 = scmp.ne.s32.totalorder %s268, %s284
      %p286 = scmp.eq.s32.totalorder %s34, 0
      %p287 = por %p285, %p286
      %s288 = ssub.s32 %s36, %s43
      %p289 = scmp.eq.s32.totalorder %s288, 0
      %s291 = sadd.s32 %s290, 1
      %s292 = scalar_select %p289, %s290, %s291
      %p295 = pneg %p289
      %p296 = scmp.eq.s32.totalorder %s28, 1
      %p297 = por %p295, %p296
      %p298 = scmp.ne.s32.totalorder %s290, %s293
      %p299 = scmp.eq.s32.totalorder %s28, 0
      %p300 = por %p298, %p299
      %p301 = scmp.ne.s32.totalorder %s290, %s293
      %p302 = scmp.eq.s32.totalorder %s33, 1
      %p303 = por %p301, %p302
      %p304 = scmp.ne.s32.totalorder %s293, %s294
      %p305 = scmp.eq.s32.totalorder %s33, 0
      %p306 = por %p304, %p305
      %p307 = scmp.ne.s32.totalorder %s293, %s294
      %p308 = scmp.eq.s32.totalorder %s34, 1
      %p309 = por %p307, %p308
      %p311 = scmp.ne.s32.totalorder %s294, %s310
      %p312 = scmp.eq.s32.totalorder %s34, 0
      %p313 = por %p311, %p312
      %s314 = ssub.s32 %s36, %s43
      %p315 = scmp.eq.s32.totalorder %s314, 0
      %s317 = sadd.s32 %s316, 1
      %s318 = scalar_select %p315, %s316, %s317
      %p321 = pneg %p315
      %p322 = scmp.eq.s32.totalorder %s28, 1
      %p323 = por %p321, %p322
      %p324 = scmp.ne.s32.totalorder %s316, %s319
      %p325 = scmp.eq.s32.totalorder %s28, 0
      %p326 = por %p324, %p325
      %p327 = scmp.ne.s32.totalorder %s316, %s319
      %p328 = scmp.eq.s32.totalorder %s33, 1
      %p329 = por %p327, %p328
      %p330 = scmp.ne.s32.totalorder %s319, %s320
      %p331 = scmp.eq.s32.totalorder %s33, 0
      %p332 = por %p330, %p331
      %p333 = scmp.ne.s32.totalorder %s319, %s320
      %p334 = scmp.eq.s32.totalorder %s34, 1
      %p335 = por %p333, %p334
      %p337 = scmp.ne.s32.totalorder %s320, %s336
      %p338 = scmp.eq.s32.totalorder %s34, 0
      %p339 = por %p337, %p338
      %s340 = ssub.s32 %s36, %s43
      %p341 = scmp.eq.s32.totalorder %s340, 0
      %s343 = sadd.s32 %s342, 1
      %s344 = scalar_select %p341, %s342, %s343
      %p347 = pneg %p341
      %p348 = scmp.eq.s32.totalorder %s28, 1
      %p349 = por %p347, %p348
      %p350 = scmp.ne.s32.totalorder %s342, %s345
      %p351 = scmp.eq.s32.totalorder %s28, 0
      %p352 = por %p350, %p351
      %p353 = scmp.ne.s32.totalorder %s342, %s345
      %p354 = scmp.eq.s32.totalorder %s33, 1
      %p355 = por %p353, %p354
      %p356 = scmp.ne.s32.totalorder %s345, %s346
      %p357 = scmp.eq.s32.totalorder %s33, 0
      %p358 = por %p356, %p357
      %p359 = scmp.ne.s32.totalorder %s345, %s346
      %p360 = scmp.eq.s32.totalorder %s34, 1
      %p361 = por %p359, %p360
      %p363 = scmp.ne.s32.totalorder %s346, %s362
      %p364 = scmp.eq.s32.totalorder %s34, 0
      %p365 = por %p363, %p364
      %s366 = ssub.s32 %s36, %s43
      %p367 = scmp.eq.s32.totalorder %s366, 0
      %s369 = sadd.s32 %s368, 1
      %s370 = scalar_select %p367, %s368, %s369
      %p373 = pneg %p367
      %p374 = scmp.eq.s32.totalorder %s28, 1
      %p375 = por %p373, %p374
      %p376 = scmp.ne.s32.totalorder %s368, %s371
      %p377 = scmp.eq.s32.totalorder %s28, 0
      %p378 = por %p376, %p377
      %p379 = scmp.ne.s32.totalorder %s368, %s371
      %p380 = scmp.eq.s32.totalorder %s33, 1
      %p381 = por %p379, %p380
      %p382 = scmp.ne.s32.totalorder %s371, %s372
      %p383 = scmp.eq.s32.totalorder %s33, 0
      %p384 = por %p382, %p383
      %p385 = scmp.ne.s32.totalorder %s371, %s372
      %p386 = scmp.eq.s32.totalorder %s34, 1
      %p387 = por %p385, %p386
      %p389 = scmp.ne.s32.totalorder %s372, %s388
      %p390 = scmp.eq.s32.totalorder %s34, 0
      %p391 = por %p389, %p390
      %s392 = ssub.s32 %s36, %s43
      %p393 = scmp.eq.s32.totalorder %s392, 0
      %s395 = sadd.s32 %s394, 1
      %s396 = scalar_select %p393, %s394, %s395
      %p399 = pneg %p393
      %p400 = scmp.eq.s32.totalorder %s28, 1
      %p401 = por %p399, %p400
      %p402 = scmp.ne.s32.totalorder %s394, %s397
      %p403 = scmp.eq.s32.totalorder %s28, 0
      %p404 = por %p402, %p403
      %p405 = scmp.ne.s32.totalorder %s394, %s397
      %p406 = scmp.eq.s32.totalorder %s33, 1
      %p407 = por %p405, %p406
      %p408 = scmp.ne.s32.totalorder %s397, %s398
      %p409 = scmp.eq.s32.totalorder %s33, 0
      %p410 = por %p408, %p409
      %p411 = scmp.ne.s32.totalorder %s397, %s398
      %p412 = scmp.eq.s32.totalorder %s34, 1
      %p413 = por %p411, %p412
      %p415 = scmp.ne.s32.totalorder %s398, %s414
      %p416 = scmp.eq.s32.totalorder %s34, 0
      %p417 = por %p415, %p416
      %s418 = ssub.s32 %s36, %s43
      %p419 = scmp.eq.s32.totalorder %s418, 0
      %s421 = sadd.s32 %s420, 1
      %s422 = scalar_select %p419, %s420, %s421
      %p425 = pneg %p419
      %p426 = scmp.eq.s32.totalorder %s28, 1
      %p427 = por %p425, %p426
      %p428 = scmp.ne.s32.totalorder %s420, %s423
      %p429 = scmp.eq.s32.totalorder %s28, 0
      %p430 = por %p428, %p429
      %p431 = scmp.ne.s32.totalorder %s420, %s423
      %p432 = scmp.eq.s32.totalorder %s33, 1
      %p433 = por %p431, %p432
      %p434 = scmp.ne.s32.totalorder %s423, %s424
      %p435 = scmp.eq.s32.totalorder %s33, 0
      %p436 = por %p434, %p435
      %p437 = scmp.ne.s32.totalorder %s423, %s424
      %p438 = scmp.eq.s32.totalorder %s34, 1
      %p439 = por %p437, %p438
      %p441 = scmp.ne.s32.totalorder %s424, %s440
      %p442 = scmp.eq.s32.totalorder %s34, 0
      %p443 = por %p441, %p442
      %s444 = ssub.s32 %s36, %s43
      %p445 = scmp.eq.s32.totalorder %s444, 0
      %s447 = sadd.s32 %s446, 1
      %s448 = scalar_select %p445, %s446, %s447
      %p451 = pneg %p445
      %p452 = scmp.eq.s32.totalorder %s28, 1
      %p453 = por %p451, %p452
      %p454 = scmp.ne.s32.totalorder %s446, %s449
      %p455 = scmp.eq.s32.totalorder %s28, 0
      %p456 = por %p454, %p455
      %p457 = scmp.ne.s32.totalorder %s446, %s449
      %p458 = scmp.eq.s32.totalorder %s33, 1
      %p459 = por %p457, %p458
      %p460 = scmp.ne.s32.totalorder %s449, %s450
      %p461 = scmp.eq.s32.totalorder %s33, 0
      %p462 = por %p460, %p461
      %p463 = scmp.ne.s32.totalorder %s449, %s450
      %p464 = scmp.eq.s32.totalorder %s34, 1
      %p465 = por %p463, %p464
      %p467 = scmp.ne.s32.totalorder %s450, %s466
      %p468 = scmp.eq.s32.totalorder %s34, 0
      %p469 = por %p467, %p468
      %s470 = ssub.s32 %s36, %s43
      %p471 = scmp.eq.s32.totalorder %s470, 0
      %s473 = sadd.s32 %s472, 1
      %s474 = scalar_select %p471, %s472, %s473
      %p477 = pneg %p471
      %p478 = scmp.eq.s32.totalorder %s28, 1
      %p479 = por %p477, %p478
      %p480 = scmp.ne.s32.totalorder %s472, %s475
      %p481 = scmp.eq.s32.totalorder %s28, 0
      %p482 = por %p480, %p481
      %p483 = scmp.ne.s32.totalorder %s472, %s475
      %p484 = scmp.eq.s32.totalorder %s33, 1
      %p485 = por %p483, %p484
      %p486 = scmp.ne.s32.totalorder %s475, %s476
      %p487 = scmp.eq.s32.totalorder %s33, 0
      %p488 = por %p486, %p487
      %p489 = scmp.ne.s32.totalorder %s475, %s476
      %p490 = scmp.eq.s32.totalorder %s34, 1
      %p491 = por %p489, %p490
      %p493 = scmp.ne.s32.totalorder %s476, %s492
      %p494 = scmp.eq.s32.totalorder %s34, 0
      %p495 = por %p493, %p494
      %s496 = ssub.s32 %s36, %s43
      %p497 = scmp.eq.s32.totalorder %s496, 0
      %s499 = sadd.s32 %s498, 1
      %s500 = scalar_select %p497, %s498, %s499
      %p503 = pneg %p497
      %p504 = scmp.eq.s32.totalorder %s28, 1
      %p505 = por %p503, %p504
      %p506 = scmp.ne.s32.totalorder %s498, %s501
      %p507 = scmp.eq.s32.totalorder %s28, 0
      %p508 = por %p506, %p507
      %p509 = scmp.ne.s32.totalorder %s498, %s501
      %p510 = scmp.eq.s32.totalorder %s33, 1
      %p511 = por %p509, %p510
      %p512 = scmp.ne.s32.totalorder %s501, %s502
      %p513 = scmp.eq.s32.totalorder %s33, 0
      %p514 = por %p512, %p513
      %p515 = scmp.ne.s32.totalorder %s501, %s502
      %p516 = scmp.eq.s32.totalorder %s34, 1
      %p517 = por %p515, %p516
      %p519 = scmp.ne.s32.totalorder %s502, %s518
      %p520 = scmp.eq.s32.totalorder %s34, 0
      %p521 = por %p519, %p520
      %s522 = ssub.s32 %s36, %s43
      %p523 = scmp.eq.s32.totalorder %s522, 0
      %s525 = sadd.s32 %s524, 1
      %s526 = scalar_select %p523, %s524, %s525
      %p529 = pneg %p523
      %p530 = scmp.eq.s32.totalorder %s28, 1
      %p531 = por %p529, %p530
      %p532 = scmp.ne.s32.totalorder %s524, %s527
      %p533 = scmp.eq.s32.totalorder %s28, 0
      %p534 = por %p532, %p533
      %p535 = scmp.ne.s32.totalorder %s524, %s527
      %p536 = scmp.eq.s32.totalorder %s33, 1
      %p537 = por %p535, %p536
      %p538 = scmp.ne.s32.totalorder %s527, %s528
      %p539 = scmp.eq.s32.totalorder %s33, 0
      %p540 = por %p538, %p539
      %p541 = scmp.ne.s32.totalorder %s527, %s528
      %p542 = scmp.eq.s32.totalorder %s34, 1
      %p543 = por %p541, %p542
      %p545 = scmp.ne.s32.totalorder %s528, %s544
      %p546 = scmp.eq.s32.totalorder %s34, 0
      %p547 = por %p545, %p546
      %s548 = ssub.s32 %s36, %s43
      %p549 = scmp.eq.s32.totalorder %s548, 0
      %s551 = sadd.s32 %s550, 1
      %s552 = scalar_select %p549, %s550, %s551
      %p555 = pneg %p549
      %p556 = scmp.eq.s32.totalorder %s28, 1
      %p557 = por %p555, %p556
      %p558 = scmp.ne.s32.totalorder %s550, %s553
      %p559 = scmp.eq.s32.totalorder %s28, 0
      %p560 = por %p558, %p559
      %p561 = scmp.ne.s32.totalorder %s550, %s553
      %p562 = scmp.eq.s32.totalorder %s33, 1
      %p563 = por %p561, %p562
      %p564 = scmp.ne.s32.totalorder %s553, %s554
      %p565 = scmp.eq.s32.totalorder %s33, 0
      %p566 = por %p564, %p565
      %p567 = scmp.ne.s32.totalorder %s553, %s554
      %p568 = scmp.eq.s32.totalorder %s34, 1
      %p569 = por %p567, %p568
      %p571 = scmp.ne.s32.totalorder %s554, %s570
      %p572 = scmp.eq.s32.totalorder %s34, 0
      %p573 = por %p571, %p572
      %s574 = ssub.s32 %s35, %s47
      %p575 = scmp.eq.s32.totalorder %s574, 0
      %s577 = sadd.s32 %s576, 1
      %s578 = scalar_select %p575, %s576, %s577
      %p581 = pneg %p575
      %p582 = scmp.eq.s32.totalorder %s28, 1
      %p583 = por %p581, %p582
      %p584 = scmp.ne.s32.totalorder %s576, %s579
      %p585 = scmp.eq.s32.totalorder %s28, 0
      %p586 = por %p584, %p585
      %p587 = scmp.ne.s32.totalorder %s576, %s579
      %p588 = scmp.eq.s32.totalorder %s33, 1
      %p589 = por %p587, %p588
      %p590 = scmp.ne.s32.totalorder %s579, %s580
      %p591 = scmp.eq.s32.totalorder %s33, 0
      %p592 = por %p590, %p591
      %p593 = scmp.ne.s32.totalorder %s579, %s580
      %p594 = scmp.eq.s32.totalorder %s34, 1
      %p595 = por %p593, %p594
      %p597 = scmp.ne.s32.totalorder %s580, %s596
      %p598 = scmp.eq.s32.totalorder %s34, 0
      %p599 = por %p597, %p598
      %p600 = scmp.le.s32.totalorder 1, %s28
      %p601 = scmp.lt.s32.totalorder %s28, 3
      %p602 = pnand %p600, %p601
      %p603 = pneg %p602
      // Predicated region
      $region9: #{tpu_custom_call.1} parent=5 // pred_check
        _
      $region10: #{tpu_custom_call.1} parent=5 // pred_check_branch
        %605 = sbr.rel (%p602) target = $region12
      $region11: #{tpu_custom_call.1} parent=5 // pred_region
        %s606 = ssub.s32 %s28, 1
        // Predicated region
        $region13: #{tpu_custom_call.1} parent=11 // pred_check
          %p607 = pneg %p66
        $region14: #{tpu_custom_call.1} parent=11 // pred_check_branch
          %609 = sbr.rel (%p607) target = $region16
        $region15: #{tpu_custom_call.1} parent=11 // pred_region
          %s610 = smul.u32 2, %s37
          %p611 = scmp.lt.s32.totalorder %s610, 1
          %s612 = scalar_select %p611, %s610, 1
          %s613 = smul.addr %s612, 8
          %s614 = scalar_lea.vmem %s0, %s613
          %s615 = smul.u32 2, %s37
        $region16: #{tpu_custom_call.1} parent=11 // pred_fallthru
          _
        // Predicated region
        $region17: #{tpu_custom_call.1} parent=11 // pred_check
          %p616 = pneg %p87
        $region18: #{tpu_custom_call.1} parent=11 // pred_check_branch
          %618 = sbr.rel (%p616) target = $region20
        $region19: #{tpu_custom_call.1} parent=11 // pred_region
          _
        $region20: #{tpu_custom_call.1} parent=11 // pred_fallthru
          _
        // Predicated region
        $region21: #{tpu_custom_call.1} parent=11 // pred_check
          %p619 = pneg %p108
        $region22: #{tpu_custom_call.1} parent=11 // pred_check_branch
          %621 = sbr.rel (%p619) target = $region24
        $region23: #{tpu_custom_call.1} parent=11 // pred_region
          _
        $region24: #{tpu_custom_call.1} parent=11 // pred_fallthru
          _
        // Predicated region
        $region25: #{tpu_custom_call.1} parent=11 // pred_check
          %p622 = pneg %p129
        $region26: #{tpu_custom_call.1} parent=11 // pred_check_branch
          %624 = sbr.rel (%p622) target = $region28
        $region27: #{tpu_custom_call.1} parent=11 // pred_region
          _
        $region28: #{tpu_custom_call.1} parent=11 // pred_fallthru
          _
        // Predicated region
        $region29: #{tpu_custom_call.1} parent=11 // pred_check
          %p625 = pneg %p150
        $region30: #{tpu_custom_call.1} parent=11 // pred_check_branch
          %627 = sbr.rel (%p625) target = $region32
        $region31: #{tpu_custom_call.1} parent=11 // pred_region
          _
        $region32: #{tpu_custom_call.1} parent=11 // pred_fallthru
          _
      $region12: #{tpu_custom_call.1} parent=5 // pred_fallthru
        _
      %p628 = scmp.lt.s32.totalorder %s28, 2
      // Predicated region
      $region33: #{tpu_custom_call.1} parent=5 // pred_check
        %p629 = pneg %p628
      $region34: #{tpu_custom_call.1} parent=5 // pred_check_branch
        %631 = sbr.rel (%p629) target = $region36
      $region35: #{tpu_custom_call.1} parent=5 // pred_region
        // Predicated region
        $region37: #{tpu_custom_call.1} parent=35 // pred_check
          %p632 = pneg %p170
        $region38: #{tpu_custom_call.1} parent=35 // pred_check_branch
          %634 = sbr.rel (%p632) target = $region40
        $region39: #{tpu_custom_call.1} parent=35 // pred_region
          %p635 = scmp.lt.s32.totalorder %s36, 1
          %s636 = scalar_select %p635, %s36, 1
          %s637 = smul.addr %s636, 4
          %s638 = smul.addr %s637, 4
          %s639 = scalar_lea.vmem %s5, %s638
        $region40: #{tpu_custom_call.1} parent=35 // pred_fallthru
          _
        // Predicated region
        $region41: #{tpu_custom_call.1} parent=35 // pred_check
          %p640 = pneg %p196
        $region42: #{tpu_custom_call.1} parent=35 // pred_check_branch
          %642 = sbr.rel (%p640) target = $region44
        $region43: #{tpu_custom_call.1} parent=35 // pred_region
          %p643 = scmp.lt.s32.totalorder %s36, 1
          %s644 = scalar_select %p643, %s36, 1
          %s645 = scalar_lea.vmem %s6, %s644
        $region44: #{tpu_custom_call.1} parent=35 // pred_fallthru
          _
        // Predicated region
        $region45: #{tpu_custom_call.1} parent=35 // pred_check
          %p646 = pneg %p222
        $region46: #{tpu_custom_call.1} parent=35 // pred_check_branch
          %648 = sbr.rel (%p646) target = $region48
        $region47: #{tpu_custom_call.1} parent=35 // pred_region
          %p649 = scmp.lt.s32.totalorder %s36, 1
          %s650 = scalar_select %p649, %s36, 1
          %s651 = smul.addr %s650, 4
          %s652 = smul.addr %s651, 4
          %s653 = scalar_lea.vmem %s7, %s652
        $region48: #{tpu_custom_call.1} parent=35 // pred_fallthru
          _
        // Predicated region
        $region49: #{tpu_custom_call.1} parent=35 // pred_check
          %p654 = pneg %p248
        $region50: #{tpu_custom_call.1} parent=35 // pred_check_branch
          %656 = sbr.rel (%p654) target = $region52
        $region51: #{tpu_custom_call.1} parent=35 // pred_region
          %p657 = scmp.lt.s32.totalorder %s36, 1
          %s658 = scalar_select %p657, %s36, 1
          %s659 = scalar_lea.vmem %s8, %s658
        $region52: #{tpu_custom_call.1} parent=35 // pred_fallthru
          _
        // Predicated region
        $region53: #{tpu_custom_call.1} parent=35 // pred_check
          %p660 = pneg %p274
        $region54: #{tpu_custom_call.1} parent=35 // pred_check_branch
          %662 = sbr.rel (%p660) target = $region56
        $region55: #{tpu_custom_call.1} parent=35 // pred_region
          %p663 = scmp.lt.s32.totalorder %s36, 1
          %s664 = scalar_select %p663, %s36, 1
          %s665 = smul.addr %s664, 4
          %s666 = smul.addr %s665, 4
          %s667 = scalar_lea.vmem %s9, %s666
        $region56: #{tpu_custom_call.1} parent=35 // pred_fallthru
          _
        // Predicated region
        $region57: #{tpu_custom_call.1} parent=35 // pred_check
          %p668 = pneg %p300
        $region58: #{tpu_custom_call.1} parent=35 // pred_check_branch
          %670 = sbr.rel (%p668) target = $region60
        $region59: #{tpu_custom_call.1} parent=35 // pred_region
          %p671 = scmp.lt.s32.totalorder %s36, 1
          %s672 = scalar_select %p671, %s36, 1
          %s673 = scalar_lea.vmem %s10, %s672
        $region60: #{tpu_custom_call.1} parent=35 // pred_fallthru
          _
        // Predicated region
        $region61: #{tpu_custom_call.1} parent=35 // pred_check
          %p674 = pneg %p326
        $region62: #{tpu_custom_call.1} parent=35 // pred_check_branch
          %676 = sbr.rel (%p674) target = $region64
        $region63: #{tpu_custom_call.1} parent=35 // pred_region
          %p677 = scmp.lt.s32.totalorder %s36, 1
          %s678 = scalar_select %p677, %s36, 1
          %s679 = smul.addr %s678, 4
          %s680 = smul.addr %s679, 4
          %s681 = scalar_lea.vmem %s11, %s680
        $region64: #{tpu_custom_call.1} parent=35 // pred_fallthru
          _
        // Predicated region
        $region65: #{tpu_custom_call.1} parent=35 // pred_check
          %p682 = pneg %p352
        $region66: #{tpu_custom_call.1} parent=35 // pred_check_branch
          %684 = sbr.rel (%p682) target = $region68
        $region67: #{tpu_custom_call.1} parent=35 // pred_region
          %p685 = scmp.lt.s32.totalorder %s36, 1
          %s686 = scalar_select %p685, %s36, 1
          %s687 = scalar_lea.vmem %s12, %s686
        $region68: #{tpu_custom_call.1} parent=35 // pred_fallthru
          _
        // Predicated region
        $region69: #{tpu_custom_call.1} parent=35 // pred_check
          %p688 = pneg %p378
        $region70: #{tpu_custom_call.1} parent=35 // pred_check_branch
          %690 = sbr.rel (%p688) target = $region72
        $region71: #{tpu_custom_call.1} parent=35 // pred_region
          %p691 = scmp.lt.s32.totalorder %s36, 1
          %s692 = scalar_select %p691, %s36, 1
          %s693 = scalar_lea.vmem %s13, %s692
        $region72: #{tpu_custom_call.1} parent=35 // pred_fallthru
          _
        // Predicated region
        $region73: #{tpu_custom_call.1} parent=35 // pred_check
          %p694 = pneg %p404
        $region74: #{tpu_custom_call.1} parent=35 // pred_check_branch
          %696 = sbr.rel (%p694) target = $region76
        $region75: #{tpu_custom_call.1} parent=35 // pred_region
          %p697 = scmp.lt.s32.totalorder %s36, 1
          %s698 = scalar_select %p697, %s36, 1
          %s699 = scalar_lea.vmem %s14, %s698
        $region76: #{tpu_custom_call.1} parent=35 // pred_fallthru
          _
        // Predicated region
        $region77: #{tpu_custom_call.1} parent=35 // pred_check
          %p700 = pneg %p430
        $region78: #{tpu_custom_call.1} parent=35 // pred_check_branch
          %702 = sbr.rel (%p700) target = $region80
        $region79: #{tpu_custom_call.1} parent=35 // pred_region
          %p703 = scmp.lt.s32.totalorder %s36, 1
          %s704 = scalar_select %p703, %s36, 1
          %s705 = smul.addr %s704, 64
          %s706 = smul.addr %s705, 4
          %s707 = scalar_lea.vmem %s15, %s706
        $region80: #{tpu_custom_call.1} parent=35 // pred_fallthru
          _
        // Predicated region
        $region81: #{tpu_custom_call.1} parent=35 // pred_check
          %p708 = pneg %p456
        $region82: #{tpu_custom_call.1} parent=35 // pred_check_branch
          %710 = sbr.rel (%p708) target = $region84
        $region83: #{tpu_custom_call.1} parent=35 // pred_region
          %p711 = scmp.lt.s32.totalorder %s36, 1
          %s712 = scalar_select %p711, %s36, 1
          %s713 = smul.addr %s712, 16
          %s714 = scalar_lea.vmem %s16, %s713
        $region84: #{tpu_custom_call.1} parent=35 // pred_fallthru
          _
        // Predicated region
        $region85: #{tpu_custom_call.1} parent=35 // pred_check
          %p715 = pneg %p482
        $region86: #{tpu_custom_call.1} parent=35 // pred_check_branch
          %717 = sbr.rel (%p715) target = $region88
        $region87: #{tpu_custom_call.1} parent=35 // pred_region
          %p718 = scmp.lt.s32.totalorder %s36, 1
          %s719 = scalar_select %p718, %s36, 1
          %s720 = smul.addr %s719, 256
          %s721 = smul.addr %s720, 4
          %s722 = scalar_lea.vmem %s17, %s721
        $region88: #{tpu_custom_call.1} parent=35 // pred_fallthru
          _
        // Predicated region
        $region89: #{tpu_custom_call.1} parent=35 // pred_check
          %p723 = pneg %p508
        $region90: #{tpu_custom_call.1} parent=35 // pred_check_branch
          %725 = sbr.rel (%p723) target = $region92
        $region91: #{tpu_custom_call.1} parent=35 // pred_region
          %p726 = scmp.lt.s32.totalorder %s36, 1
          %s727 = scalar_select %p726, %s36, 1
          %s728 = scalar_lea.vmem %s18, %s727
        $region92: #{tpu_custom_call.1} parent=35 // pred_fallthru
          _
        // Predicated region
        $region93: #{tpu_custom_call.1} parent=35 // pred_check
          %p729 = pneg %p534
        $region94: #{tpu_custom_call.1} parent=35 // pred_check_branch
          %731 = sbr.rel (%p729) target = $region96
        $region95: #{tpu_custom_call.1} parent=35 // pred_region
          %p732 = scmp.lt.s32.totalorder %s36, 1
          %s733 = scalar_select %p732, %s36, 1
          %s734 = scalar_lea.vmem %s19, %s733
        $region96: #{tpu_custom_call.1} parent=35 // pred_fallthru
          _
        // Predicated region
        $region97: #{tpu_custom_call.1} parent=35 // pred_check
          %p735 = pneg %p560
        $region98: #{tpu_custom_call.1} parent=35 // pred_check_branch
          %737 = sbr.rel (%p735) target = $region100
        $region99: #{tpu_custom_call.1} parent=35 // pred_region
          %p738 = scmp.lt.s32.totalorder %s36, 1
          %s739 = scalar_select %p738, %s36, 1
          %s740 = scalar_lea.vmem %s20, %s739
        $region100: #{tpu_custom_call.1} parent=35 // pred_fallthru
          _
      $region36: #{tpu_custom_call.1} parent=5 // pred_fallthru
        _
      %p741 = scmp.le.s32.totalorder 1, %s28
      %p742 = scmp.lt.s32.totalorder %s28, 3
      %p743 = pnand %p741, %p742
      %p744 = pneg %p743
      // Predicated region
      $region101: #{tpu_custom_call.1} parent=5 // pred_check
        _
      $region102: #{tpu_custom_call.1} parent=5 // pred_check_branch
        %746 = sbr.rel (%p743) target = $region104
      $region103: #{tpu_custom_call.1} parent=5 // pred_region
        %s747 = ssub.s32 %s28, 1
        %s748 = smul.u32 2, %s37
        %p749 = scmp.lt.s32.totalorder %s748, 1
        %s750 = scalar_select %p749, %s748, 1
        %s751 = smul.addr %s750, 8
        %s752 = scalar_lea.vmem %s0, %s751
        %p753 = pneg %p66
        %p754 = pneg %p63
        %p755 = pneg %p87
        %p756 = pneg %p84
        %p757 = pneg %p108
        %p758 = pneg %p105
        %p759 = pneg %p129
        %p760 = pneg %p126
        %p761 = pneg %p150
        %p762 = pneg %p147
        %p763 = scmp.lt.s32.totalorder %s38, 1
        %s764 = scalar_select %p763, %s38, 1
        %s765 = smul.addr %s764, 4
        %s766 = smul.addr %s765, 4
        %s767 = scalar_lea.vmem %s5, %s766
        %p768 = pneg %p176
        %p769 = pneg %p173
        %p770 = scmp.lt.s32.totalorder %s38, 1
        %s771 = scalar_select %p770, %s38, 1
        %s772 = scalar_lea.vmem %s6, %s771
        %p773 = pneg %p202
        %p774 = pneg %p199
        %p775 = scmp.lt.s32.totalorder %s38, 1
        %s776 = scalar_select %p775, %s38, 1
        %s777 = smul.addr %s776, 4
        %s778 = smul.addr %s777, 4
        %s779 = scalar_lea.vmem %s7, %s778
        %p780 = pneg %p228
        %p781 = pneg %p225
        %p782 = scmp.lt.s32.totalorder %s38, 1
        %s783 = scalar_select %p782, %s38, 1
        %s784 = scalar_lea.vmem %s8, %s783
        %p785 = pneg %p254
        %p786 = pneg %p251
        %p787 = scmp.lt.s32.totalorder %s38, 1
        %s788 = scalar_select %p787, %s38, 1
        %s789 = smul.addr %s788, 4
        %s790 = smul.addr %s789, 4
        %s791 = scalar_lea.vmem %s9, %s790
        %p792 = pneg %p280
        %p793 = pneg %p277
        %p794 = scmp.lt.s32.totalorder %s38, 1
        %s795 = scalar_select %p794, %s38, 1
        %s796 = scalar_lea.vmem %s10, %s795
        %p797 = pneg %p306
        %p798 = pneg %p303
        %p799 = scmp.lt.s32.totalorder %s38, 1
        %s800 = scalar_select %p799, %s38, 1
        %s801 = smul.addr %s800, 4
        %s802 = smul.addr %s801, 4
        %s803 = scalar_lea.vmem %s11, %s802
        %p804 = pneg %p332
        %p805 = pneg %p329
        %p806 = scmp.lt.s32.totalorder %s38, 1
        %s807 = scalar_select %p806, %s38, 1
        %s808 = scalar_lea.vmem %s12, %s807
        %p809 = pneg %p358
        %p810 = pneg %p355
        %p811 = scmp.lt.s32.totalorder %s38, 1
        %s812 = scalar_select %p811, %s38, 1
        %s813 = scalar_lea.vmem %s13, %s812
        %p814 = pneg %p384
        %p815 = pneg %p381
        %p816 = scmp.lt.s32.totalorder %s38, 1
        %s817 = scalar_select %p816, %s38, 1
        %s818 = scalar_lea.vmem %s14, %s817
        %p819 = pneg %p410
        %p820 = pneg %p407
        %p821 = scmp.lt.s32.totalorder %s38, 1
        %s822 = scalar_select %p821, %s38, 1
        %s823 = smul.addr %s822, 64
        %s824 = smul.addr %s823, 4
        %s825 = scalar_lea.vmem %s15, %s824
        %p826 = pneg %p436
        %p827 = pneg %p433
        %p828 = scmp.lt.s32.totalorder %s38, 1
        %s829 = scalar_select %p828, %s38, 1
        %s830 = smul.addr %s829, 16
        %s831 = scalar_lea.vmem %s16, %s830
        %p832 = pneg %p462
        %p833 = pneg %p459
        %p834 = scmp.lt.s32.totalorder %s38, 1
        %s835 = scalar_select %p834, %s38, 1
        %s836 = smul.addr %s835, 256
        %s837 = smul.addr %s836, 4
        %s838 = scalar_lea.vmem %s17, %s837
        %p839 = pneg %p488
        %p840 = pneg %p485
        %p841 = scmp.lt.s32.totalorder %s38, 1
        %s842 = scalar_select %p841, %s38, 1
        %s843 = scalar_lea.vmem %s18, %s842
        %p844 = pneg %p514
        %p845 = pneg %p511
        %p846 = scmp.lt.s32.totalorder %s38, 1
        %s847 = scalar_select %p846, %s38, 1
        %s848 = scalar_lea.vmem %s19, %s847
        %p849 = pneg %p540
        %p850 = pneg %p537
        %p851 = scmp.lt.s32.totalorder %s38, 1
        %s852 = scalar_select %p851, %s38, 1
        %s853 = scalar_lea.vmem %s20, %s852
        %p854 = pneg %p566
        %p855 = pneg %p563
        %p856 = pneg %p592
        %p857 = pneg %p589
        %s858 = smul.u32 2, %s37
        %p859 = scmp.lt.s32.totalorder %s858, 1
        %s860 = scalar_select %p859, %s858, 1
        %s861 = smul.addr %s860, 8
        %s862 = scalar_lea.vmem %s0, %s861
        %s863 = smul.u32 2, %s37
        %p864 = scmp.lt.s32.totalorder %s38, 1
        %s865 = scalar_select %p864, %s38, 1
        %s866 = smul.addr %s865, 4
        %s867 = smul.addr %s866, 4
        %s868 = scalar_lea.vmem %s5, %s867
        %p869 = scmp.lt.s32.totalorder %s38, 1
        %s870 = scalar_select %p869, %s38, 1
        %s871 = scalar_lea.vmem %s6, %s870
        %p872 = scmp.lt.s32.totalorder %s38, 1
        %s873 = scalar_select %p872, %s38, 1
        %s874 = smul.addr %s873, 4
        %s875 = smul.addr %s874, 4
        %s876 = scalar_lea.vmem %s7, %s875
        %p877 = scmp.lt.s32.totalorder %s38, 1
        %s878 = scalar_select %p877, %s38, 1
        %s879 = scalar_lea.vmem %s8, %s878
        %p880 = scmp.lt.s32.totalorder %s38, 1
        %s881 = scalar_select %p880, %s38, 1
        %s882 = smul.addr %s881, 4
        %s883 = smul.addr %s882, 4
        %s884 = scalar_lea.vmem %s9, %s883
        %p885 = scmp.lt.s32.totalorder %s38, 1
        %s886 = scalar_select %p885, %s38, 1
        %s887 = scalar_lea.vmem %s10, %s886
        %p888 = scmp.lt.s32.totalorder %s38, 1
        %s889 = scalar_select %p888, %s38, 1
        %s890 = smul.addr %s889, 4
        %s891 = smul.addr %s890, 4
        %s892 = scalar_lea.vmem %s11, %s891
        %p893 = scmp.lt.s32.totalorder %s38, 1
        %s894 = scalar_select %p893, %s38, 1
        %s895 = scalar_lea.vmem %s12, %s894
        %p896 = scmp.lt.s32.totalorder %s38, 1
        %s897 = scalar_select %p896, %s38, 1
        %s898 = scalar_lea.vmem %s13, %s897
        %p899 = scmp.lt.s32.totalorder %s38, 1
        %s900 = scalar_select %p899, %s38, 1
        %s901 = scalar_lea.vmem %s14, %s900
        %p902 = scmp.lt.s32.totalorder %s38, 1
        %s903 = scalar_select %p902, %s38, 1
        %s904 = smul.addr %s903, 64
        %s905 = smul.addr %s904, 4
        %s906 = scalar_lea.vmem %s15, %s905
        %p907 = scmp.lt.s32.totalorder %s38, 1
        %s908 = scalar_select %p907, %s38, 1
        %s909 = smul.addr %s908, 16
        %s910 = scalar_lea.vmem %s16, %s909
        %p911 = scmp.lt.s32.totalorder %s38, 1
        %s912 = scalar_select %p911, %s38, 1
        %s913 = smul.addr %s912, 256
        %s914 = smul.addr %s913, 4
        %s915 = scalar_lea.vmem %s17, %s914
        %p916 = scmp.lt.s32.totalorder %s38, 1
        %s917 = scalar_select %p916, %s38, 1
        %s918 = scalar_lea.vmem %s18, %s917
        %p919 = scmp.lt.s32.totalorder %s38, 1
        %s920 = scalar_select %p919, %s38, 1
        %s921 = scalar_lea.vmem %s19, %s920
        %p922 = scmp.lt.s32.totalorder %s38, 1
        %s923 = scalar_select %p922, %s38, 1
        %s924 = scalar_lea.vmem %s20, %s923
        %p926 = scmp.eq.s32.totalorder %s38, 0
        // Predicated region
        $region105: #{tpu_custom_call.1} parent=103 // pred_check
          %p927 = pneg %p926
        $region106: #{tpu_custom_call.1} parent=103 // pred_check_branch
          %929 = sbr.rel (%p927) target = $region108
        $region107: #{tpu_custom_call.1} parent=103 // pred_region
          %v930 = vld [vmem:[%s862] sm:$0xff]
          %v931 = vld [vmem:[%s862 + $0x8] sm:$0xff]
          %v932 = vpack.c.bf16 %v931, %v930
          %v933 = vld [vmem:[%s1] sm:$0xf]
          %v934 = vld [vmem:[%s1 + $0x4] sm:$0xf]
          %v935 = vld [vmem:[%s2] sm:$0x1]
          %v937 = vlaneseq
          %v938 = vshrl.u32 %v937, 7
          %v939 = vsub.s32 0, %v938
          %v940 = vrot.slane %v935, %v939
          %v944 = vunpack.c.l.b16 %v933
          %v945 = vunpack.c.l.b16 %v934
          %v946 = vpack.c.b16 %v945, %v944
          %vm948 = vcmask 130048
          %v950 = vsel %vm948, %v932, 0
          %952 = vmatprep.subr.bf16.mxu0 0
          %953 = vmatpush1.bf16.msra.mxu0 %v946
          %954 = vmatprep.subr.bf16.mxu0 0
          %955 = vmatpush1.bf16.msra.mxu0 0
          %956 = vmatprep.subr.bf16.mxu0 0
          %957 = vmatpush1.bf16.msra.mxu0 0
          %958 = vmatprep.subr.bf16.mxu0 0
          %959 = vmatpush1.bf16.msra.mxu0 0
          %960 = vmatprep.subr.bf16.mxu0 0
          %961 = vmatpush1.bf16.msra.mxu0 0
          %962 = vmatprep.subr.bf16.mxu0 0
          %963 = vmatpush1.bf16.msra.mxu0 0
          %964 = vmatprep.subr.bf16.mxu0 0
          %965 = vmatpush1.bf16.msra.mxu0 0
          %966 = vmatprep.subr.bf16.mxu0 0
          %967 = vmatpush1.bf16.msra.mxu0 0
          %968 = vmatprep.subr.bf16.mxu0 0
          %969 = vmatpush1.bf16.msra.mxu0 0
          %970 = vmatprep.subr.bf16.mxu0 0
          %971 = vmatpush1.bf16.msra.mxu0 0
          %972 = vmatprep.subr.bf16.mxu0 0
          %973 = vmatpush1.bf16.msra.mxu0 0
          %974 = vmatprep.subr.bf16.mxu0 0
          %975 = vmatpush1.bf16.msra.mxu0 0
          %976 = vmatprep.subr.bf16.mxu0 0
          %977 = vmatpush1.bf16.msra.mxu0 0
          %978 = vmatprep.subr.bf16.mxu0 0
          %979 = vmatpush1.bf16.msra.mxu0 0
          %980 = vmatprep.subr.bf16.mxu0 0
          %981 = vmatpush1.bf16.msra.mxu0 0
          %982 = vmatprep.subr.bf16.mxu0 0
          %983 = vmatpush1.bf16.msra.mxu0 0
          %984 = vmatprep.mubr.bf16.mxu0 0
          %985 = vmatmul.mubr.bf16.gmra.mrb[0].mxu0 %v950
          %v986 = vpop.f32.mrb[0].mxu0
          %v987 = vadd.f32 %v940, %v986
          %v988 = vpop.f32.mrb[0].mxu0
          %v989 = vpop.f32.mrb[0].mxu0
          %v990 = vadd.f32 %v940, %v989
          %v991 = vpop.f32.mrb[0].mxu0
          %992 = vdwg.mxu0
          %v993 = vtanh.pop %v987
          %v994 = vtanh.pop %v990
          %vm995 = vcmask 261120
          %996 = vst.msk [vmem:[#allocation2] sm:$0xff] %vm995, %v993
          %997 = vst.msk [vmem:[#allocation2 + $0x8] sm:$0xff] %vm995, %v994
        $region108: #{tpu_custom_call.1} parent=103 // pred_fallthru
          _
        %v998 = vld [vmem:[#allocation2] sm:$0xff]
        %v999 = vld [vmem:[#allocation2 + $0x8] sm:$0xff]
        %v1000 = vpack.c.bf16 %v999, %v998
        %v1001 = vld [vmem:[%s868] sm:$0xf]
        %v1002 = vld [vmem:[%s868 + $0x4] sm:$0xf]
        %v1003 = vld [vmem:[%s868 + $0x8] sm:$0xf]
        %v1004 = vld [vmem:[%s868 + $0xc] sm:$0xf]
        %v1005 = vld [vmem:[%s871] sm:$0x1]
        %v1007 = vlaneseq
        %v1008 = vshrl.u32 %v1007, 7
        %v1009 = vsub.s32 0, %v1008
        %v1010 = vrot.slane %v1005, %v1009
        %v1016 = vunpack.c.l.b16 %v1001
        %v1017 = vunpack.c.l.b16 %v1002
        %v1018 = vunpack.c.l.b16 %v1003
        %v1019 = vunpack.c.l.b16 %v1004
        %v1020 = vpack.c.b16 %v1017, %v1016
        %v1021 = vpack.c.b16 %v1019, %v1018
        %vm1024 = vcmask 261120
        %v1026 = vsel %vm1024, %v1000, 0
        %1028 = vmatprep.subr.bf16.mxu0 0
        %1029 = vmatpush1.bf16.msra.mxu0 %v1020
        %1030 = vmatprep.subr.bf16.mxu0 0
        %1031 = vmatpush1.bf16.msra.mxu0 %v1021
        %1032 = vmatprep.subr.bf16.mxu0 0
        %1033 = vmatpush1.bf16.msra.mxu0 0
        %1034 = vmatprep.subr.bf16.mxu0 0
        %1035 = vmatpush1.bf16.msra.mxu0 0
        %1036 = vmatprep.subr.bf16.mxu0 0
        %1037 = vmatpush1.bf16.msra.mxu0 0
        %1038 = vmatprep.subr.bf16.mxu0 0
        %1039 = vmatpush1.bf16.msra.mxu0 0
        %1040 = vmatprep.subr.bf16.mxu0 0
        %1041 = vmatpush1.bf16.msra.mxu0 0
        %1042 = vmatprep.subr.bf16.mxu0 0
        %1043 = vmatpush1.bf16.msra.mxu0 0
        %1044 = vmatprep.subr.bf16.mxu0 0
        %1045 = vmatpush1.bf16.msra.mxu0 0
        %1046 = vmatprep.subr.bf16.mxu0 0
        %1047 = vmatpush1.bf16.msra.mxu0 0
        %1048 = vmatprep.subr.bf16.mxu0 0
        %1049 = vmatpush1.bf16.msra.mxu0 0
        %1050 = vmatprep.subr.bf16.mxu0 0
        %1051 = vmatpush1.bf16.msra.mxu0 0
        %1052 = vmatprep.subr.bf16.mxu0 0
        %1053 = vmatpush1.bf16.msra.mxu0 0
        %1054 = vmatprep.subr.bf16.mxu0 0
        %1055 = vmatpush1.bf16.msra.mxu0 0
        %1056 = vmatprep.subr.bf16.mxu0 0
        %1057 = vmatpush1.bf16.msra.mxu0 0
        %1058 = vmatprep.subr.bf16.mxu0 0
        %1059 = vmatpush1.bf16.msra.mxu0 0
        %1060 = vmatprep.mubr.bf16.mxu0 0
        %1061 = vmatmul.mubr.bf16.gmra.mrb[0].mxu0 %v1026
        %v1062 = vpop.f32.mrb[0].mxu0
        %v1063 = vadd.f32 %v1010, %v1062
        %v1064 = vpop.f32.mrb[0].mxu0
        %v1065 = vpop.f32.mrb[0].mxu0
        %v1066 = vadd.f32 %v1010, %v1065
        %v1067 = vpop.f32.mrb[0].mxu0
        %1068 = vdwg.mxu0
        %v1069 = vld [vmem:[%s876] sm:$0xf]
        %v1070 = vld [vmem:[%s876 + $0x4] sm:$0xf]
        %v1071 = vld [vmem:[%s876 + $0x8] sm:$0xf]
        %v1072 = vld [vmem:[%s876 + $0xc] sm:$0xf]
        %v1073 = vld [vmem:[%s879] sm:$0x1]
        %v1075 = vlaneseq
        %v1076 = vshrl.u32 %v1075, 7
        %v1077 = vsub.s32 0, %v1076
        %v1078 = vrot.slane %v1073, %v1077
        %v1084 = vunpack.c.l.b16 %v1069
        %v1085 = vunpack.c.l.b16 %v1070
        %v1086 = vunpack.c.l.b16 %v1071
        %v1087 = vunpack.c.l.b16 %v1072
        %v1088 = vpack.c.b16 %v1085, %v1084
        %v1089 = vpack.c.b16 %v1087, %v1086
        %1092 = vmatprep.subr.bf16.mxu0 0
        %1093 = vmatpush1.bf16.msra.mxu0 %v1088
        %1094 = vmatprep.subr.bf16.mxu0 0
        %1095 = vmatpush1.bf16.msra.mxu0 %v1089
        %1096 = vmatprep.subr.bf16.mxu0 0
        %1097 = vmatpush1.bf16.msra.mxu0 0
        %1098 = vmatprep.subr.bf16.mxu0 0
        %1099 = vmatpush1.bf16.msra.mxu0 0
        %1100 = vmatprep.subr.bf16.mxu0 0
        %1101 = vmatpush1.bf16.msra.mxu0 0
        %1102 = vmatprep.subr.bf16.mxu0 0
        %1103 = vmatpush1.bf16.msra.mxu0 0
        %1104 = vmatprep.subr.bf16.mxu0 0
        %1105 = vmatpush1.bf16.msra.mxu0 0
        %1106 = vmatprep.subr.bf16.mxu0 0
        %1107 = vmatpush1.bf16.msra.mxu0 0
        %1108 = vmatprep.subr.bf16.mxu0 0
        %1109 = vmatpush1.bf16.msra.mxu0 0
        %1110 = vmatprep.subr.bf16.mxu0 0
        %1111 = vmatpush1.bf16.msra.mxu0 0
        %1112 = vmatprep.subr.bf16.mxu0 0
        %1113 = vmatpush1.bf16.msra.mxu0 0
        %1114 = vmatprep.subr.bf16.mxu0 0
        %1115 = vmatpush1.bf16.msra.mxu0 0
        %1116 = vmatprep.subr.bf16.mxu0 0
        %1117 = vmatpush1.bf16.msra.mxu0 0
        %1118 = vmatprep.subr.bf16.mxu0 0
        %1119 = vmatpush1.bf16.msra.mxu0 0
        %1120 = vmatprep.subr.bf16.mxu0 0
        %1121 = vmatpush1.bf16.msra.mxu0 0
        %1122 = vmatprep.subr.bf16.mxu0 0
        %1123 = vmatpush1.bf16.msra.mxu0 0
        %1124 = vmatprep.mubr.bf16.mxu0 0
        %1125 = vmatmul.mubr.bf16.gmra.mrb[0].mxu0 %v1026
        %v1126 = vpop.f32.mrb[0].mxu0
        %v1127 = vadd.f32 %v1078, %v1126
        %v1128 = vpop.f32.mrb[0].mxu0
        %v1129 = vpop.f32.mrb[0].mxu0
        %v1130 = vadd.f32 %v1078, %v1129
        %v1131 = vpop.f32.mrb[0].mxu0
        %1132 = vdwg.mxu0
        %v1133 = vld [vmem:[%s884] sm:$0xf]
        %v1134 = vld [vmem:[%s884 + $0x4] sm:$0xf]
        %v1135 = vld [vmem:[%s884 + $0x8] sm:$0xf]
        %v1136 = vld [vmem:[%s884 + $0xc] sm:$0xf]
        %v1137 = vld [vmem:[%s887] sm:$0x1]
        %v1139 = vlaneseq
        %v1140 = vshrl.u32 %v1139, 7
        %v1141 = vsub.s32 0, %v1140
        %v1142 = vrot.slane %v1137, %v1141
        %v1148 = vunpack.c.l.b16 %v1133
        %v1149 = vunpack.c.l.b16 %v1134
        %v1150 = vunpack.c.l.b16 %v1135
        %v1151 = vunpack.c.l.b16 %v1136
        %v1152 = vpack.c.b16 %v1149, %v1148
        %v1153 = vpack.c.b16 %v1151, %v1150
        %1156 = vmatprep.subr.bf16.mxu0 0
        %1157 = vmatpush1.bf16.msra.mxu0 %v1152
        %1158 = vmatprep.subr.bf16.mxu0 0
        %1159 = vmatpush1.bf16.msra.mxu0 %v1153
        %1160 = vmatprep.subr.bf16.mxu0 0
        %1161 = vmatpush1.bf16.msra.mxu0 0
        %1162 = vmatprep.subr.bf16.mxu0 0
        %1163 = vmatpush1.bf16.msra.mxu0 0
        %1164 = vmatprep.subr.bf16.mxu0 0
        %1165 = vmatpush1.bf16.msra.mxu0 0
        %1166 = vmatprep.subr.bf16.mxu0 0
        %1167 = vmatpush1.bf16.msra.mxu0 0
        %1168 = vmatprep.subr.bf16.mxu0 0
        %1169 = vmatpush1.bf16.msra.mxu0 0
        %1170 = vmatprep.subr.bf16.mxu0 0
        %1171 = vmatpush1.bf16.msra.mxu0 0
        %1172 = vmatprep.subr.bf16.mxu0 0
        %1173 = vmatpush1.bf16.msra.mxu0 0
        %1174 = vmatprep.subr.bf16.mxu0 0
        %1175 = vmatpush1.bf16.msra.mxu0 0
        %1176 = vmatprep.subr.bf16.mxu0 0
        %1177 = vmatpush1.bf16.msra.mxu0 0
        %1178 = vmatprep.subr.bf16.mxu0 0
        %1179 = vmatpush1.bf16.msra.mxu0 0
        %1180 = vmatprep.subr.bf16.mxu0 0
        %1181 = vmatpush1.bf16.msra.mxu0 0
        %1182 = vmatprep.subr.bf16.mxu0 0
        %1183 = vmatpush1.bf16.msra.mxu0 0
        %1184 = vmatprep.subr.bf16.mxu0 0
        %1185 = vmatpush1.bf16.msra.mxu0 0
        %1186 = vmatprep.subr.bf16.mxu0 0
        %1187 = vmatpush1.bf16.msra.mxu0 0
        %1188 = vmatprep.mubr.bf16.mxu0 0
        %1189 = vmatmul.mubr.bf16.gmra.mrb[0].mxu0 %v1026
        %v1190 = vpop.f32.mrb[0].mxu0
        %v1191 = vadd.f32 %v1142, %v1190
        %v1192 = vpop.f32.mrb[0].mxu0
        %v1193 = vpop.f32.mrb[0].mxu0
        %v1194 = vadd.f32 %v1142, %v1193
        %v1195 = vpop.f32.mrb[0].mxu0
        %1196 = vdwg.mxu0
        %vm1197 = vcmask 64512
        %v1199 = vsel %vm1197, %v1063, 0
        %v1202 = vsel %vm1197, %v1127, 0
        %1204 = vmatprep.subr.mxu0 0.0
        %1205 = vmatpush1.xpose.msra.mxu0 %v1202
        %1206 = vmatprep.subr.mxu0 0.0
        %1207 = vmatpush1.xpose.msra.mxu0 0.0
        %1208 = vmatprep.subr.mxu0 0.0
        %1209 = vmatpush1.xpose.msra.mxu0 0.0
        %1210 = vmatprep.subr.mxu0 0.0
        %1211 = vmatpush1.xpose.msra.mxu0 0.0
        %1212 = vmatprep.subr.mxu0 0.0
        %1213 = vmatpush1.xpose.msra.mxu0 0.0
        %1214 = vmatprep.subr.mxu0 0.0
        %1215 = vmatpush1.xpose.msra.mxu0 0.0
        %1216 = vmatprep.subr.mxu0 0.0
        %1217 = vmatpush1.xpose.msra.mxu0 0.0
        %1218 = vmatprep.subr.mxu0 0.0
        %1219 = vmatpush1.xpose.msra.mxu0 0.0
        %1220 = vmatprep.subr.mxu0 0.0
        %1221 = vmatpush1.xpose.msra.mxu0 0.0
        %1222 = vmatprep.subr.mxu0 0.0
        %1223 = vmatpush1.xpose.msra.mxu0 0.0
        %1224 = vmatprep.subr.mxu0 0.0
        %1225 = vmatpush1.xpose.msra.mxu0 0.0
        %1226 = vmatprep.subr.mxu0 0.0
        %1227 = vmatpush1.xpose.msra.mxu0 0.0
        %1228 = vmatprep.subr.mxu0 0.0
        %1229 = vmatpush1.xpose.msra.mxu0 0.0
        %1230 = vmatprep.subr.mxu0 0.0
        %1231 = vmatpush1.xpose.msra.mxu0 0.0
        %1232 = vmatprep.subr.mxu0 0.0
        %1233 = vmatpush1.xpose.msra.mxu0 0.0
        %1234 = vmatprep.subr.mxu0 0.0
        %1235 = vmatpush1.xpose.msra.mxu0 0.0
        %1236 = vmatprep.subr.mxu0 0.0
        %1237 = vmatpush1.xpose.msra.mxu0 0.0
        %1238 = vmatprep.subr.mxu0 0.0
        %1239 = vmatpush1.xpose.msra.mxu0 0.0
        %1240 = vmatprep.subr.mxu0 0.0
        %1241 = vmatpush1.xpose.msra.mxu0 0.0
        %1242 = vmatprep.subr.mxu0 0.0
        %1243 = vmatpush1.xpose.msra.mxu0 0.0
        %1244 = vmatprep.subr.mxu0 0.0
        %1245 = vmatpush1.xpose.msra.mxu0 0.0
        %1246 = vmatprep.subr.mxu0 0.0
        %1247 = vmatpush1.xpose.msra.mxu0 0.0
        %1248 = vmatprep.subr.mxu0 0.0
        %1249 = vmatpush1.xpose.msra.mxu0 0.0
        %1250 = vmatprep.subr.mxu0 0.0
        %1251 = vmatpush1.xpose.msra.mxu0 0.0
        %1252 = vmatprep.subr.mxu0 0.0
        %1253 = vmatpush1.xpose.msra.mxu0 0.0
        %1254 = vmatprep.subr.mxu0 0.0
        %1255 = vmatpush1.xpose.msra.mxu0 0.0
        %1256 = vmatprep.subr.mxu0 0.0
        %1257 = vmatpush1.xpose.msra.mxu0 0.0
        %1258 = vmatprep.subr.mxu0 0.0
        %1259 = vmatpush1.xpose.msra.mxu0 0.0
        %1260 = vmatprep.subr.mxu0 0.0
        %1261 = vmatpush1.xpose.msra.mxu0 0.0
        %1262 = vmatprep.subr.mxu0 0.0
        %1263 = vmatpush1.xpose.msra.mxu0 0.0
        %1264 = vmatprep.subr.mxu0 0.0
        %1265 = vmatpush1.xpose.msra.mxu0 0.0
        %1266 = vmatprep.subr.mxu0 0.0
        %1267 = vmatpush1.xpose.msra.mxu0 0.0
        %1268 = vmatprep.mubr.f32.mxu0 0.0
        %1269 = vmatmul.mubr.f32.gmra.mrb[0].mxu0 %v1199
        %v1270 = vpop.f32.mrb[0].mxu0
        %v1271 = vadd.f32 0.0, %v1270
        %v1272 = vpop.f32.mrb[0].mxu0
        %1273 = vdwg.mxu0
        %v1275 = vsel %vm1197, %v1066, 0
        %v1278 = vsel %vm1197, %v1130, 0
        %1280 = vmatprep.subr.mxu0 0.0
        %1281 = vmatpush1.xpose.msra.mxu0 %v1278
        %1282 = vmatprep.subr.mxu0 0.0
        %1283 = vmatpush1.xpose.msra.mxu0 0.0
        %1284 = vmatprep.subr.mxu0 0.0
        %1285 = vmatpush1.xpose.msra.mxu0 0.0
        %1286 = vmatprep.subr.mxu0 0.0
        %1287 = vmatpush1.xpose.msra.mxu0 0.0
        %1288 = vmatprep.subr.mxu0 0.0
        %1289 = vmatpush1.xpose.msra.mxu0 0.0
        %1290 = vmatprep.subr.mxu0 0.0
        %1291 = vmatpush1.xpose.msra.mxu0 0.0
        %1292 = vmatprep.subr.mxu0 0.0
        %1293 = vmatpush1.xpose.msra.mxu0 0.0
        %1294 = vmatprep.subr.mxu0 0.0
        %1295 = vmatpush1.xpose.msra.mxu0 0.0
        %1296 = vmatprep.subr.mxu0 0.0
        %1297 = vmatpush1.xpose.msra.mxu0 0.0
        %1298 = vmatprep.subr.mxu0 0.0
        %1299 = vmatpush1.xpose.msra.mxu0 0.0
        %1300 = vmatprep.subr.mxu0 0.0
        %1301 = vmatpush1.xpose.msra.mxu0 0.0
        %1302 = vmatprep.subr.mxu0 0.0
        %1303 = vmatpush1.xpose.msra.mxu0 0.0
        %1304 = vmatprep.subr.mxu0 0.0
        %1305 = vmatpush1.xpose.msra.mxu0 0.0
        %1306 = vmatprep.subr.mxu0 0.0
        %1307 = vmatpush1.xpose.msra.mxu0 0.0
        %1308 = vmatprep.subr.mxu0 0.0
        %1309 = vmatpush1.xpose.msra.mxu0 0.0
        %1310 = vmatprep.subr.mxu0 0.0
        %1311 = vmatpush1.xpose.msra.mxu0 0.0
        %1312 = vmatprep.subr.mxu0 0.0
        %1313 = vmatpush1.xpose.msra.mxu0 0.0
        %1314 = vmatprep.subr.mxu0 0.0
        %1315 = vmatpush1.xpose.msra.mxu0 0.0
        %1316 = vmatprep.subr.mxu0 0.0
        %1317 = vmatpush1.xpose.msra.mxu0 0.0
        %1318 = vmatprep.subr.mxu0 0.0
        %1319 = vmatpush1.xpose.msra.mxu0 0.0
        %1320 = vmatprep.subr.mxu0 0.0
        %1321 = vmatpush1.xpose.msra.mxu0 0.0
        %1322 = vmatprep.subr.mxu0 0.0
        %1323 = vmatpush1.xpose.msra.mxu0 0.0
        %1324 = vmatprep.subr.mxu0 0.0
        %1325 = vmatpush1.xpose.msra.mxu0 0.0
        %1326 = vmatprep.subr.mxu0 0.0
        %1327 = vmatpush1.xpose.msra.mxu0 0.0
        %1328 = vmatprep.subr.mxu0 0.0
        %1329 = vmatpush1.xpose.msra.mxu0 0.0
        %1330 = vmatprep.subr.mxu0 0.0
        %1331 = vmatpush1.xpose.msra.mxu0 0.0
        %1332 = vmatprep.subr.mxu0 0.0
        %1333 = vmatpush1.xpose.msra.mxu0 0.0
        %1334 = vmatprep.subr.mxu0 0.0
        %1335 = vmatpush1.xpose.msra.mxu0 0.0
        %1336 = vmatprep.subr.mxu0 0.0
        %1337 = vmatpush1.xpose.msra.mxu0 0.0
        %1338 = vmatprep.subr.mxu0 0.0
        %1339 = vmatpush1.xpose.msra.mxu0 0.0
        %1340 = vmatprep.subr.mxu0 0.0
        %1341 = vmatpush1.xpose.msra.mxu0 0.0
        %1342 = vmatprep.subr.mxu0 0.0
        %1343 = vmatpush1.xpose.msra.mxu0 0.0
        %1344 = vmatprep.mubr.f32.mxu0 0.0
        %1345 = vmatmul.mubr.f32.gmra.mrb[0].mxu0 %v1275
        %v1346 = vpop.f32.mrb[0].mxu0
        %v1347 = vadd.f32 0.0, %v1346
        %v1348 = vpop.f32.mrb[0].mxu0
        %1349 = vdwg.mxu0
        %v1350 = vsel %vm1197, %v1271, -inf
        %1351 = vmax.xlane.f32.xlu0 %v1350
        %v1352 = vpop.xlane.xlu0 %1351
        %v1353 = vsel %vm1197, %v1347, -inf
        %1354 = vmax.xlane.f32.xlu0 %v1353
        %v1355 = vpop.xlane.xlu0 %1354
        %v1356 = vsub.f32 %v1271, %v1352
        %v1357 = vsub.f32 %v1347, %v1355
        %v1358 = vmul.f32 %v1356, 1.442695
        %v1359 = vpow.pop %v1358
        %v1360 = vmul.f32 %v1357, 1.442695
        %v1361 = vpow.pop %v1360
        %v1362 = vsel %vm1197, %v1359, 0.0
        %1363 = vadd.xlane.f32.xlu0 %v1362
        %v1364 = vpop.xlane.xlu0 %1363
        %v1365 = vsel %vm1197, %v1361, 0.0
        %1366 = vadd.xlane.f32.xlu0 %v1365
        %v1367 = vpop.xlane.xlu0 %1366
        %v1368 = vrcp.pop %v1364
        %v1369 = vrcp.pop %v1367
        %v1370 = vmul.f32 %v1359, %v1368
        %v1371 = vmul.f32 %v1361, %v1369
        %v1373 = vsel %vm1197, %v1370, 0
        %1375 = vmatprep.subr.mxu0 0.0
        %1376 = vmatpush1.msra.mxu0 %v1191
        %1377 = vmatprep.subr.mxu0 0.0
        %1378 = vmatpush1.msra.mxu0 0.0
        %1379 = vmatprep.subr.mxu0 0.0
        %1380 = vmatpush1.msra.mxu0 0.0
        %1381 = vmatprep.subr.mxu0 0.0
        %1382 = vmatpush1.msra.mxu0 0.0
        %1383 = vmatprep.subr.mxu0 0.0
        %1384 = vmatpush1.msra.mxu0 0.0
        %1385 = vmatprep.subr.mxu0 0.0
        %1386 = vmatpush1.msra.mxu0 0.0
        %1387 = vmatprep.subr.mxu0 0.0
        %1388 = vmatpush1.msra.mxu0 0.0
        %1389 = vmatprep.subr.mxu0 0.0
        %1390 = vmatpush1.msra.mxu0 0.0
        %1391 = vmatprep.subr.mxu0 0.0
        %1392 = vmatpush1.msra.mxu0 0.0
        %1393 = vmatprep.subr.mxu0 0.0
        %1394 = vmatpush1.msra.mxu0 0.0
        %1395 = vmatprep.subr.mxu0 0.0
        %1396 = vmatpush1.msra.mxu0 0.0
        %1397 = vmatprep.subr.mxu0 0.0
        %1398 = vmatpush1.msra.mxu0 0.0
        %1399 = vmatprep.subr.mxu0 0.0
        %1400 = vmatpush1.msra.mxu0 0.0
        %1401 = vmatprep.subr.mxu0 0.0
        %1402 = vmatpush1.msra.mxu0 0.0
        %1403 = vmatprep.subr.mxu0 0.0
        %1404 = vmatpush1.msra.mxu0 0.0
        %1405 = vmatprep.subr.mxu0 0.0
        %1406 = vmatpush1.msra.mxu0 0.0
        %1407 = vmatprep.subr.mxu0 0.0
        %1408 = vmatpush1.msra.mxu0 0.0
        %1409 = vmatprep.subr.mxu0 0.0
        %1410 = vmatpush1.msra.mxu0 0.0
        %1411 = vmatprep.subr.mxu0 0.0
        %1412 = vmatpush1.msra.mxu0 0.0
        %1413 = vmatprep.subr.mxu0 0.0
        %1414 = vmatpush1.msra.mxu0 0.0
        %1415 = vmatprep.subr.mxu0 0.0
        %1416 = vmatpush1.msra.mxu0 0.0
        %1417 = vmatprep.subr.mxu0 0.0
        %1418 = vmatpush1.msra.mxu0 0.0
        %1419 = vmatprep.subr.mxu0 0.0
        %1420 = vmatpush1.msra.mxu0 0.0
        %1421 = vmatprep.subr.mxu0 0.0
        %1422 = vmatpush1.msra.mxu0 0.0
        %1423 = vmatprep.subr.mxu0 0.0
        %1424 = vmatpush1.msra.mxu0 0.0
        %1425 = vmatprep.subr.mxu0 0.0
        %1426 = vmatpush1.msra.mxu0 0.0
        %1427 = vmatprep.subr.mxu0 0.0
        %1428 = vmatpush1.msra.mxu0 0.0
        %1429 = vmatprep.subr.mxu0 0.0
        %1430 = vmatpush1.msra.mxu0 0.0
        %1431 = vmatprep.subr.mxu0 0.0
        %1432 = vmatpush1.msra.mxu0 0.0
        %1433 = vmatprep.subr.mxu0 0.0
        %1434 = vmatpush1.msra.mxu0 0.0
        %1435 = vmatprep.subr.mxu0 0.0
        %1436 = vmatpush1.msra.mxu0 0.0
        %1437 = vmatprep.subr.mxu0 0.0
        %1438 = vmatpush1.msra.mxu0 0.0
        %1439 = vmatprep.mubr.f32.mxu0 0.0
        %1440 = vmatmul.mubr.f32.gmra.mrb[0].mxu0 %v1373
        %v1441 = vpop.f32.mrb[0].mxu0
        %v1442 = vadd.f32 0.0, %v1441
        %v1443 = vpop.f32.mrb[0].mxu0
        %1444 = vdwg.mxu0
        %v1446 = vsel %vm1197, %v1371, 0
        %1448 = vmatprep.subr.mxu0 0.0
        %1449 = vmatpush1.msra.mxu0 %v1194
        %1450 = vmatprep.subr.mxu0 0.0
        %1451 = vmatpush1.msra.mxu0 0.0
        %1452 = vmatprep.subr.mxu0 0.0
        %1453 = vmatpush1.msra.mxu0 0.0
        %1454 = vmatprep.subr.mxu0 0.0
        %1455 = vmatpush1.msra.mxu0 0.0
        %1456 = vmatprep.subr.mxu0 0.0
        %1457 = vmatpush1.msra.mxu0 0.0
        %1458 = vmatprep.subr.mxu0 0.0
        %1459 = vmatpush1.msra.mxu0 0.0
        %1460 = vmatprep.subr.mxu0 0.0
        %1461 = vmatpush1.msra.mxu0 0.0
        %1462 = vmatprep.subr.mxu0 0.0
        %1463 = vmatpush1.msra.mxu0 0.0
        %1464 = vmatprep.subr.mxu0 0.0
        %1465 = vmatpush1.msra.mxu0 0.0
        %1466 = vmatprep.subr.mxu0 0.0
        %1467 = vmatpush1.msra.mxu0 0.0
        %1468 = vmatprep.subr.mxu0 0.0
        %1469 = vmatpush1.msra.mxu0 0.0
        %1470 = vmatprep.subr.mxu0 0.0
        %1471 = vmatpush1.msra.mxu0 0.0
        %1472 = vmatprep.subr.mxu0 0.0
        %1473 = vmatpush1.msra.mxu0 0.0
        %1474 = vmatprep.subr.mxu0 0.0
        %1475 = vmatpush1.msra.mxu0 0.0
        %1476 = vmatprep.subr.mxu0 0.0
        %1477 = vmatpush1.msra.mxu0 0.0
        %1478 = vmatprep.subr.mxu0 0.0
        %1479 = vmatpush1.msra.mxu0 0.0
        %1480 = vmatprep.subr.mxu0 0.0
        %1481 = vmatpush1.msra.mxu0 0.0
        %1482 = vmatprep.subr.mxu0 0.0
        %1483 = vmatpush1.msra.mxu0 0.0
        %1484 = vmatprep.subr.mxu0 0.0
        %1485 = vmatpush1.msra.mxu0 0.0
        %1486 = vmatprep.subr.mxu0 0.0
        %1487 = vmatpush1.msra.mxu0 0.0
        %1488 = vmatprep.subr.mxu0 0.0
        %1489 = vmatpush1.msra.mxu0 0.0
        %1490 = vmatprep.subr.mxu0 0.0
        %1491 = vmatpush1.msra.mxu0 0.0
        %1492 = vmatprep.subr.mxu0 0.0
        %1493 = vmatpush1.msra.mxu0 0.0
        %1494 = vmatprep.subr.mxu0 0.0
        %1495 = vmatpush1.msra.mxu0 0.0
        %1496 = vmatprep.subr.mxu0 0.0
        %1497 = vmatpush1.msra.mxu0 0.0
        %1498 = vmatprep.subr.mxu0 0.0
        %1499 = vmatpush1.msra.mxu0 0.0
        %1500 = vmatprep.subr.mxu0 0.0
        %1501 = vmatpush1.msra.mxu0 0.0
        %1502 = vmatprep.subr.mxu0 0.0
        %1503 = vmatpush1.msra.mxu0 0.0
        %1504 = vmatprep.subr.mxu0 0.0
        %1505 = vmatpush1.msra.mxu0 0.0
        %1506 = vmatprep.subr.mxu0 0.0
        %1507 = vmatpush1.msra.mxu0 0.0
        %1508 = vmatprep.subr.mxu0 0.0
        %1509 = vmatpush1.msra.mxu0 0.0
        %1510 = vmatprep.subr.mxu0 0.0
        %1511 = vmatpush1.msra.mxu0 0.0
        %1512 = vmatprep.mubr.f32.mxu0 0.0
        %1513 = vmatmul.mubr.f32.gmra.mrb[0].mxu0 %v1446
        %v1514 = vpop.f32.mrb[0].mxu0
        %v1515 = vadd.f32 0.0, %v1514
        %v1516 = vpop.f32.mrb[0].mxu0
        %1517 = vdwg.mxu0
        %1518 = vrot.lane.b32.xlu0 %v1063, 120
        %v1519 = vpop.permute.xlu0 %1518
        %1520 = vrot.lane.b32.xlu0 %v1127, 120
        %v1521 = vpop.permute.xlu0 %1520
        %v1522 = vsel %vm1197, %v1519, 0
        %v1524 = vsel %vm1197, %v1521, 0
        %1526 = vmatprep.subr.mxu0 0.0
        %1527 = vmatpush1.xpose.msra.mxu0 %v1524
        %1528 = vmatprep.subr.mxu0 0.0
        %1529 = vmatpush1.xpose.msra.mxu0 0.0
        %1530 = vmatprep.subr.mxu0 0.0
        %1531 = vmatpush1.xpose.msra.mxu0 0.0
        %1532 = vmatprep.subr.mxu0 0.0
        %1533 = vmatpush1.xpose.msra.mxu0 0.0
        %1534 = vmatprep.subr.mxu0 0.0
        %1535 = vmatpush1.xpose.msra.mxu0 0.0
        %1536 = vmatprep.subr.mxu0 0.0
        %1537 = vmatpush1.xpose.msra.mxu0 0.0
        %1538 = vmatprep.subr.mxu0 0.0
        %1539 = vmatpush1.xpose.msra.mxu0 0.0
        %1540 = vmatprep.subr.mxu0 0.0
        %1541 = vmatpush1.xpose.msra.mxu0 0.0
        %1542 = vmatprep.subr.mxu0 0.0
        %1543 = vmatpush1.xpose.msra.mxu0 0.0
        %1544 = vmatprep.subr.mxu0 0.0
        %1545 = vmatpush1.xpose.msra.mxu0 0.0
        %1546 = vmatprep.subr.mxu0 0.0
        %1547 = vmatpush1.xpose.msra.mxu0 0.0
        %1548 = vmatprep.subr.mxu0 0.0
        %1549 = vmatpush1.xpose.msra.mxu0 0.0
        %1550 = vmatprep.subr.mxu0 0.0
        %1551 = vmatpush1.xpose.msra.mxu0 0.0
        %1552 = vmatprep.subr.mxu0 0.0
        %1553 = vmatpush1.xpose.msra.mxu0 0.0
        %1554 = vmatprep.subr.mxu0 0.0
        %1555 = vmatpush1.xpose.msra.mxu0 0.0
        %1556 = vmatprep.subr.mxu0 0.0
        %1557 = vmatpush1.xpose.msra.mxu0 0.0
        %1558 = vmatprep.subr.mxu0 0.0
        %1559 = vmatpush1.xpose.msra.mxu0 0.0
        %1560 = vmatprep.subr.mxu0 0.0
        %1561 = vmatpush1.xpose.msra.mxu0 0.0
        %1562 = vmatprep.subr.mxu0 0.0
        %1563 = vmatpush1.xpose.msra.mxu0 0.0
        %1564 = vmatprep.subr.mxu0 0.0
        %1565 = vmatpush1.xpose.msra.mxu0 0.0
        %1566 = vmatprep.subr.mxu0 0.0
        %1567 = vmatpush1.xpose.msra.mxu0 0.0
        %1568 = vmatprep.subr.mxu0 0.0
        %1569 = vmatpush1.xpose.msra.mxu0 0.0
        %1570 = vmatprep.subr.mxu0 0.0
        %1571 = vmatpush1.xpose.msra.mxu0 0.0
        %1572 = vmatprep.subr.mxu0 0.0
        %1573 = vmatpush1.xpose.msra.mxu0 0.0
        %1574 = vmatprep.subr.mxu0 0.0
        %1575 = vmatpush1.xpose.msra.mxu0 0.0
        %1576 = vmatprep.subr.mxu0 0.0
        %1577 = vmatpush1.xpose.msra.mxu0 0.0
        %1578 = vmatprep.subr.mxu0 0.0
        %1579 = vmatpush1.xpose.msra.mxu0 0.0
        %1580 = vmatprep.subr.mxu0 0.0
        %1581 = vmatpush1.xpose.msra.mxu0 0.0
        %1582 = vmatprep.subr.mxu0 0.0
        %1583 = vmatpush1.xpose.msra.mxu0 0.0
        %1584 = vmatprep.subr.mxu0 0.0
        %1585 = vmatpush1.xpose.msra.mxu0 0.0
        %1586 = vmatprep.subr.mxu0 0.0
        %1587 = vmatpush1.xpose.msra.mxu0 0.0
        %1588 = vmatprep.subr.mxu0 0.0
        %1589 = vmatpush1.xpose.msra.mxu0 0.0
        %1590 = vmatprep.mubr.f32.mxu0 0.0
        %1591 = vmatmul.mubr.f32.gmra.mrb[0].mxu0 %v1522
        %v1592 = vpop.f32.mrb[0].mxu0
        %v1593 = vadd.f32 0.0, %v1592
        %v1594 = vpop.f32.mrb[0].mxu0
        %1595 = vdwg.mxu0
        %1596 = vrot.lane.b32.xlu0 %v1066, 120
        %v1597 = vpop.permute.xlu0 %1596
        %1598 = vrot.lane.b32.xlu0 %v1130, 120
        %v1599 = vpop.permute.xlu0 %1598
        %v1600 = vsel %vm1197, %v1597, 0
        %v1602 = vsel %vm1197, %v1599, 0
        %1604 = vmatprep.subr.mxu0 0.0
        %1605 = vmatpush1.xpose.msra.mxu0 %v1602
        %1606 = vmatprep.subr.mxu0 0.0
        %1607 = vmatpush1.xpose.msra.mxu0 0.0
        %1608 = vmatprep.subr.mxu0 0.0
        %1609 = vmatpush1.xpose.msra.mxu0 0.0
        %1610 = vmatprep.subr.mxu0 0.0
        %1611 = vmatpush1.xpose.msra.mxu0 0.0
        %1612 = vmatprep.subr.mxu0 0.0
        %1613 = vmatpush1.xpose.msra.mxu0 0.0
        %1614 = vmatprep.subr.mxu0 0.0
        %1615 = vmatpush1.xpose.msra.mxu0 0.0
        %1616 = vmatprep.subr.mxu0 0.0
        %1617 = vmatpush1.xpose.msra.mxu0 0.0
        %1618 = vmatprep.subr.mxu0 0.0
        %1619 = vmatpush1.xpose.msra.mxu0 0.0
        %1620 = vmatprep.subr.mxu0 0.0
        %1621 = vmatpush1.xpose.msra.mxu0 0.0
        %1622 = vmatprep.subr.mxu0 0.0
        %1623 = vmatpush1.xpose.msra.mxu0 0.0
        %1624 = vmatprep.subr.mxu0 0.0
        %1625 = vmatpush1.xpose.msra.mxu0 0.0
        %1626 = vmatprep.subr.mxu0 0.0
        %1627 = vmatpush1.xpose.msra.mxu0 0.0
        %1628 = vmatprep.subr.mxu0 0.0
        %1629 = vmatpush1.xpose.msra.mxu0 0.0
        %1630 = vmatprep.subr.mxu0 0.0
        %1631 = vmatpush1.xpose.msra.mxu0 0.0
        %1632 = vmatprep.subr.mxu0 0.0
        %1633 = vmatpush1.xpose.msra.mxu0 0.0
        %1634 = vmatprep.subr.mxu0 0.0
        %1635 = vmatpush1.xpose.msra.mxu0 0.0
        %1636 = vmatprep.subr.mxu0 0.0
        %1637 = vmatpush1.xpose.msra.mxu0 0.0
        %1638 = vmatprep.subr.mxu0 0.0
        %1639 = vmatpush1.xpose.msra.mxu0 0.0
        %1640 = vmatprep.subr.mxu0 0.0
        %1641 = vmatpush1.xpose.msra.mxu0 0.0
        %1642 = vmatprep.subr.mxu0 0.0
        %1643 = vmatpush1.xpose.msra.mxu0 0.0
        %1644 = vmatprep.subr.mxu0 0.0
        %1645 = vmatpush1.xpose.msra.mxu0 0.0
        %1646 = vmatprep.subr.mxu0 0.0
        %1647 = vmatpush1.xpose.msra.mxu0 0.0
        %1648 = vmatprep.subr.mxu0 0.0
        %1649 = vmatpush1.xpose.msra.mxu0 0.0
        %1650 = vmatprep.subr.mxu0 0.0
        %1651 = vmatpush1.xpose.msra.mxu0 0.0
        %1652 = vmatprep.subr.mxu0 0.0
        %1653 = vmatpush1.xpose.msra.mxu0 0.0
        %1654 = vmatprep.subr.mxu0 0.0
        %1655 = vmatpush1.xpose.msra.mxu0 0.0
        %1656 = vmatprep.subr.mxu0 0.0
        %1657 = vmatpush1.xpose.msra.mxu0 0.0
        %1658 = vmatprep.subr.mxu0 0.0
        %1659 = vmatpush1.xpose.msra.mxu0 0.0
        %1660 = vmatprep.subr.mxu0 0.0
        %1661 = vmatpush1.xpose.msra.mxu0 0.0
        %1662 = vmatprep.subr.mxu0 0.0
        %1663 = vmatpush1.xpose.msra.mxu0 0.0
        %1664 = vmatprep.subr.mxu0 0.0
        %1665 = vmatpush1.xpose.msra.mxu0 0.0
        %1666 = vmatprep.subr.mxu0 0.0
        %1667 = vmatpush1.xpose.msra.mxu0 0.0
        %1668 = vmatprep.mubr.f32.mxu0 0.0
        %1669 = vmatmul.mubr.f32.gmra.mrb[0].mxu0 %v1600
        %v1670 = vpop.f32.mrb[0].mxu0
        %v1671 = vadd.f32 0.0, %v1670
        %v1672 = vpop.f32.mrb[0].mxu0
        %1673 = vdwg.mxu0
        %v1674 = vsel %vm1197, %v1593, -inf
        %1675 = vmax.xlane.f32.xlu0 %v1674
        %v1676 = vpop.xlane.xlu0 %1675
        %v1677 = vsel %vm1197, %v1671, -inf
        %1678 = vmax.xlane.f32.xlu0 %v1677
        %v1679 = vpop.xlane.xlu0 %1678
        %v1680 = vsub.f32 %v1593, %v1676
        %v1681 = vsub.f32 %v1671, %v1679
        %v1682 = vmul.f32 %v1680, 1.442695
        %v1683 = vpow.pop %v1682
        %v1684 = vmul.f32 %v1681, 1.442695
        %v1685 = vpow.pop %v1684
        %v1686 = vsel %vm1197, %v1683, 0.0
        %1687 = vadd.xlane.f32.xlu0 %v1686
        %v1688 = vpop.xlane.xlu0 %1687
        %v1689 = vsel %vm1197, %v1685, 0.0
        %1690 = vadd.xlane.f32.xlu0 %v1689
        %v1691 = vpop.xlane.xlu0 %1690
        %v1692 = vrcp.pop %v1688
        %v1693 = vrcp.pop %v1691
        %v1694 = vmul.f32 %v1683, %v1692
        %v1695 = vmul.f32 %v1685, %v1693
        %1697 = vrot.lane.b32.xlu0 %v1191, 120
        %v1698 = vpop.permute.xlu0 %1697
        %v1701 = vsel %vm1197, %v1694, 0
        %1703 = vmatprep.subr.mxu0 0.0
        %1704 = vmatpush1.msra.mxu0 %v1698
        %1705 = vmatprep.subr.mxu0 0.0
        %1706 = vmatpush1.msra.mxu0 0.0
        %1707 = vmatprep.subr.mxu0 0.0
        %1708 = vmatpush1.msra.mxu0 0.0
        %1709 = vmatprep.subr.mxu0 0.0
        %1710 = vmatpush1.msra.mxu0 0.0
        %1711 = vmatprep.subr.mxu0 0.0
        %1712 = vmatpush1.msra.mxu0 0.0
        %1713 = vmatprep.subr.mxu0 0.0
        %1714 = vmatpush1.msra.mxu0 0.0
        %1715 = vmatprep.subr.mxu0 0.0
        %1716 = vmatpush1.msra.mxu0 0.0
        %1717 = vmatprep.subr.mxu0 0.0
        %1718 = vmatpush1.msra.mxu0 0.0
        %1719 = vmatprep.subr.mxu0 0.0
        %1720 = vmatpush1.msra.mxu0 0.0
        %1721 = vmatprep.subr.mxu0 0.0
        %1722 = vmatpush1.msra.mxu0 0.0
        %1723 = vmatprep.subr.mxu0 0.0
        %1724 = vmatpush1.msra.mxu0 0.0
        %1725 = vmatprep.subr.mxu0 0.0
        %1726 = vmatpush1.msra.mxu0 0.0
        %1727 = vmatprep.subr.mxu0 0.0
        %1728 = vmatpush1.msra.mxu0 0.0
        %1729 = vmatprep.subr.mxu0 0.0
        %1730 = vmatpush1.msra.mxu0 0.0
        %1731 = vmatprep.subr.mxu0 0.0
        %1732 = vmatpush1.msra.mxu0 0.0
        %1733 = vmatprep.subr.mxu0 0.0
        %1734 = vmatpush1.msra.mxu0 0.0
        %1735 = vmatprep.subr.mxu0 0.0
        %1736 = vmatpush1.msra.mxu0 0.0
        %1737 = vmatprep.subr.mxu0 0.0
        %1738 = vmatpush1.msra.mxu0 0.0
        %1739 = vmatprep.subr.mxu0 0.0
        %1740 = vmatpush1.msra.mxu0 0.0
        %1741 = vmatprep.subr.mxu0 0.0
        %1742 = vmatpush1.msra.mxu0 0.0
        %1743 = vmatprep.subr.mxu0 0.0
        %1744 = vmatpush1.msra.mxu0 0.0
        %1745 = vmatprep.subr.mxu0 0.0
        %1746 = vmatpush1.msra.mxu0 0.0
        %1747 = vmatprep.subr.mxu0 0.0
        %1748 = vmatpush1.msra.mxu0 0.0
        %1749 = vmatprep.subr.mxu0 0.0
        %1750 = vmatpush1.msra.mxu0 0.0
        %1751 = vmatprep.subr.mxu0 0.0
        %1752 = vmatpush1.msra.mxu0 0.0
        %1753 = vmatprep.subr.mxu0 0.0
        %1754 = vmatpush1.msra.mxu0 0.0
        %1755 = vmatprep.subr.mxu0 0.0
        %1756 = vmatpush1.msra.mxu0 0.0
        %1757 = vmatprep.subr.mxu0 0.0
        %1758 = vmatpush1.msra.mxu0 0.0
        %1759 = vmatprep.subr.mxu0 0.0
        %1760 = vmatpush1.msra.mxu0 0.0
        %1761 = vmatprep.subr.mxu0 0.0
        %1762 = vmatpush1.msra.mxu0 0.0
        %1763 = vmatprep.subr.mxu0 0.0
        %1764 = vmatpush1.msra.mxu0 0.0
        %1765 = vmatprep.subr.mxu0 0.0
        %1766 = vmatpush1.msra.mxu0 0.0
        %1767 = vmatprep.mubr.f32.mxu0 0.0
        %1768 = vmatmul.mubr.f32.gmra.mrb[0].mxu0 %v1701
        %v1769 = vpop.f32.mrb[0].mxu0
        %v1770 = vadd.f32 0.0, %v1769
        %v1771 = vpop.f32.mrb[0].mxu0
        %1772 = vdwg.mxu0
        %1774 = vrot.lane.b32.xlu0 %v1194, 120
        %v1775 = vpop.permute.xlu0 %1774
        %v1778 = vsel %vm1197, %v1695, 0
        %1780 = vmatprep.subr.mxu0 0.0
        %1781 = vmatpush1.msra.mxu0 %v1775
        %1782 = vmatprep.subr.mxu0 0.0
        %1783 = vmatpush1.msra.mxu0 0.0
        %1784 = vmatprep.subr.mxu0 0.0
        %1785 = vmatpush1.msra.mxu0 0.0
        %1786 = vmatprep.subr.mxu0 0.0
        %1787 = vmatpush1.msra.mxu0 0.0
        %1788 = vmatprep.subr.mxu0 0.0
        %1789 = vmatpush1.msra.mxu0 0.0
        %1790 = vmatprep.subr.mxu0 0.0
        %1791 = vmatpush1.msra.mxu0 0.0
        %1792 = vmatprep.subr.mxu0 0.0
        %1793 = vmatpush1.msra.mxu0 0.0
        %1794 = vmatprep.subr.mxu0 0.0
        %1795 = vmatpush1.msra.mxu0 0.0
        %1796 = vmatprep.subr.mxu0 0.0
        %1797 = vmatpush1.msra.mxu0 0.0
        %1798 = vmatprep.subr.mxu0 0.0
        %1799 = vmatpush1.msra.mxu0 0.0
        %1800 = vmatprep.subr.mxu0 0.0
        %1801 = vmatpush1.msra.mxu0 0.0
        %1802 = vmatprep.subr.mxu0 0.0
        %1803 = vmatpush1.msra.mxu0 0.0
        %1804 = vmatprep.subr.mxu0 0.0
        %1805 = vmatpush1.msra.mxu0 0.0
        %1806 = vmatprep.subr.mxu0 0.0
        %1807 = vmatpush1.msra.mxu0 0.0
        %1808 = vmatprep.subr.mxu0 0.0
        %1809 = vmatpush1.msra.mxu0 0.0
        %1810 = vmatprep.subr.mxu0 0.0
        %1811 = vmatpush1.msra.mxu0 0.0
        %1812 = vmatprep.subr.mxu0 0.0
        %1813 = vmatpush1.msra.mxu0 0.0
        %1814 = vmatprep.subr.mxu0 0.0
        %1815 = vmatpush1.msra.mxu0 0.0
        %1816 = vmatprep.subr.mxu0 0.0
        %1817 = vmatpush1.msra.mxu0 0.0
        %1818 = vmatprep.subr.mxu0 0.0
        %1819 = vmatpush1.msra.mxu0 0.0
        %1820 = vmatprep.subr.mxu0 0.0
        %1821 = vmatpush1.msra.mxu0 0.0
        %1822 = vmatprep.subr.mxu0 0.0
        %1823 = vmatpush1.msra.mxu0 0.0
        %1824 = vmatprep.subr.mxu0 0.0
        %1825 = vmatpush1.msra.mxu0 0.0
        %1826 = vmatprep.subr.mxu0 0.0
        %1827 = vmatpush1.msra.mxu0 0.0
        %1828 = vmatprep.subr.mxu0 0.0
        %1829 = vmatpush1.msra.mxu0 0.0
        %1830 = vmatprep.subr.mxu0 0.0
        %1831 = vmatpush1.msra.mxu0 0.0
        %1832 = vmatprep.subr.mxu0 0.0
        %1833 = vmatpush1.msra.mxu0 0.0
        %1834 = vmatprep.subr.mxu0 0.0
        %1835 = vmatpush1.msra.mxu0 0.0
        %1836 = vmatprep.subr.mxu0 0.0
        %1837 = vmatpush1.msra.mxu0 0.0
        %1838 = vmatprep.subr.mxu0 0.0
        %1839 = vmatpush1.msra.mxu0 0.0
        %1840 = vmatprep.subr.mxu0 0.0
        %1841 = vmatpush1.msra.mxu0 0.0
        %1842 = vmatprep.subr.mxu0 0.0
        %1843 = vmatpush1.msra.mxu0 0.0
        %1844 = vmatprep.mubr.f32.mxu0 0.0
        %1845 = vmatmul.mubr.f32.gmra.mrb[0].mxu0 %v1778
        %v1846 = vpop.f32.mrb[0].mxu0
        %v1847 = vadd.f32 0.0, %v1846
        %v1848 = vpop.f32.mrb[0].mxu0
        %1849 = vdwg.mxu0
        %1850 = vrot.lane.b32.xlu0 %v1063, 112
        %v1851 = vpop.permute.xlu0 %1850
        %1852 = vrot.lane.b32.xlu0 %v1127, 112
        %v1853 = vpop.permute.xlu0 %1852
        %v1854 = vsel %vm1197, %v1851, 0
        %v1856 = vsel %vm1197, %v1853, 0
        %1858 = vmatprep.subr.mxu0 0.0
        %1859 = vmatpush1.xpose.msra.mxu0 %v1856
        %1860 = vmatprep.subr.mxu0 0.0
        %1861 = vmatpush1.xpose.msra.mxu0 0.0
        %1862 = vmatprep.subr.mxu0 0.0
        %1863 = vmatpush1.xpose.msra.mxu0 0.0
        %1864 = vmatprep.subr.mxu0 0.0
        %1865 = vmatpush1.xpose.msra.mxu0 0.0
        %1866 = vmatprep.subr.mxu0 0.0
        %1867 = vmatpush1.xpose.msra.mxu0 0.0
        %1868 = vmatprep.subr.mxu0 0.0
        %1869 = vmatpush1.xpose.msra.mxu0 0.0
        %1870 = vmatprep.subr.mxu0 0.0
        %1871 = vmatpush1.xpose.msra.mxu0 0.0
        %1872 = vmatprep.subr.mxu0 0.0
        %1873 = vmatpush1.xpose.msra.mxu0 0.0
        %1874 = vmatprep.subr.mxu0 0.0
        %1875 = vmatpush1.xpose.msra.mxu0 0.0
        %1876 = vmatprep.subr.mxu0 0.0
        %1877 = vmatpush1.xpose.msra.mxu0 0.0
        %1878 = vmatprep.subr.mxu0 0.0
        %1879 = vmatpush1.xpose.msra.mxu0 0.0
        %1880 = vmatprep.subr.mxu0 0.0
        %1881 = vmatpush1.xpose.msra.mxu0 0.0
        %1882 = vmatprep.subr.mxu0 0.0
        %1883 = vmatpush1.xpose.msra.mxu0 0.0
        %1884 = vmatprep.subr.mxu0 0.0
        %1885 = vmatpush1.xpose.msra.mxu0 0.0
        %1886 = vmatprep.subr.mxu0 0.0
        %1887 = vmatpush1.xpose.msra.mxu0 0.0
        %1888 = vmatprep.subr.mxu0 0.0
        %1889 = vmatpush1.xpose.msra.mxu0 0.0
        %1890 = vmatprep.subr.mxu0 0.0
        %1891 = vmatpush1.xpose.msra.mxu0 0.0
        %1892 = vmatprep.subr.mxu0 0.0
        %1893 = vmatpush1.xpose.msra.mxu0 0.0
        %1894 = vmatprep.subr.mxu0 0.0
        %1895 = vmatpush1.xpose.msra.mxu0 0.0
        %1896 = vmatprep.subr.mxu0 0.0
        %1897 = vmatpush1.xpose.msra.mxu0 0.0
        %1898 = vmatprep.subr.mxu0 0.0
        %1899 = vmatpush1.xpose.msra.mxu0 0.0
        %1900 = vmatprep.subr.mxu0 0.0
        %1901 = vmatpush1.xpose.msra.mxu0 0.0
        %1902 = vmatprep.subr.mxu0 0.0
        %1903 = vmatpush1.xpose.msra.mxu0 0.0
        %1904 = vmatprep.subr.mxu0 0.0
        %1905 = vmatpush1.xpose.msra.mxu0 0.0
        %1906 = vmatprep.subr.mxu0 0.0
        %1907 = vmatpush1.xpose.msra.mxu0 0.0
        %1908 = vmatprep.subr.mxu0 0.0
        %1909 = vmatpush1.xpose.msra.mxu0 0.0
        %1910 = vmatprep.subr.mxu0 0.0
        %1911 = vmatpush1.xpose.msra.mxu0 0.0
        %1912 = vmatprep.subr.mxu0 0.0
        %1913 = vmatpush1.xpose.msra.mxu0 0.0
        %1914 = vmatprep.subr.mxu0 0.0
        %1915 = vmatpush1.xpose.msra.mxu0 0.0
        %1916 = vmatprep.subr.mxu0 0.0
        %1917 = vmatpush1.xpose.msra.mxu0 0.0
        %1918 = vmatprep.subr.mxu0 0.0
        %1919 = vmatpush1.xpose.msra.mxu0 0.0
        %1920 = vmatprep.subr.mxu0 0.0
        %1921 = vmatpush1.xpose.msra.mxu0 0.0
        %1922 = vmatprep.mubr.f32.mxu0 0.0
        %1923 = vmatmul.mubr.f32.gmra.mrb[0].mxu0 %v1854
        %v1924 = vpop.f32.mrb[0].mxu0
        %v1925 = vadd.f32 0.0, %v1924
        %v1926 = vpop.f32.mrb[0].mxu0
        %1927 = vdwg.mxu0
        %1928 = vrot.lane.b32.xlu0 %v1066, 112
        %v1929 = vpop.permute.xlu0 %1928
        %1930 = vrot.lane.b32.xlu0 %v1130, 112
        %v1931 = vpop.permute.xlu0 %1930
        %v1932 = vsel %vm1197, %v1929, 0
        %v1934 = vsel %vm1197, %v1931, 0
        %1936 = vmatprep.subr.mxu0 0.0
        %1937 = vmatpush1.xpose.msra.mxu0 %v1934
        %1938 = vmatprep.subr.mxu0 0.0
        %1939 = vmatpush1.xpose.msra.mxu0 0.0
        %1940 = vmatprep.subr.mxu0 0.0
        %1941 = vmatpush1.xpose.msra.mxu0 0.0
        %1942 = vmatprep.subr.mxu0 0.0
        %1943 = vmatpush1.xpose.msra.mxu0 0.0
        %1944 = vmatprep.subr.mxu0 0.0
        %1945 = vmatpush1.xpose.msra.mxu0 0.0
        %1946 = vmatprep.subr.mxu0 0.0
        %1947 = vmatpush1.xpose.msra.mxu0 0.0
        %1948 = vmatprep.subr.mxu0 0.0
        %1949 = vmatpush1.xpose.msra.mxu0 0.0
        %1950 = vmatprep.subr.mxu0 0.0
        %1951 = vmatpush1.xpose.msra.mxu0 0.0
        %1952 = vmatprep.subr.mxu0 0.0
        %1953 = vmatpush1.xpose.msra.mxu0 0.0
        %1954 = vmatprep.subr.mxu0 0.0
        %1955 = vmatpush1.xpose.msra.mxu0 0.0
        %1956 = vmatprep.subr.mxu0 0.0
        %1957 = vmatpush1.xpose.msra.mxu0 0.0
        %1958 = vmatprep.subr.mxu0 0.0
        %1959 = vmatpush1.xpose.msra.mxu0 0.0
        %1960 = vmatprep.subr.mxu0 0.0
        %1961 = vmatpush1.xpose.msra.mxu0 0.0
        %1962 = vmatprep.subr.mxu0 0.0
        %1963 = vmatpush1.xpose.msra.mxu0 0.0
        %1964 = vmatprep.subr.mxu0 0.0
        %1965 = vmatpush1.xpose.msra.mxu0 0.0
        %1966 = vmatprep.subr.mxu0 0.0
        %1967 = vmatpush1.xpose.msra.mxu0 0.0
        %1968 = vmatprep.subr.mxu0 0.0
        %1969 = vmatpush1.xpose.msra.mxu0 0.0
        %1970 = vmatprep.subr.mxu0 0.0
        %1971 = vmatpush1.xpose.msra.mxu0 0.0
        %1972 = vmatprep.subr.mxu0 0.0
        %1973 = vmatpush1.xpose.msra.mxu0 0.0
        %1974 = vmatprep.subr.mxu0 0.0
        %1975 = vmatpush1.xpose.msra.mxu0 0.0
        %1976 = vmatprep.subr.mxu0 0.0
        %1977 = vmatpush1.xpose.msra.mxu0 0.0
        %1978 = vmatprep.subr.mxu0 0.0
        %1979 = vmatpush1.xpose.msra.mxu0 0.0
        %1980 = vmatprep.subr.mxu0 0.0
        %1981 = vmatpush1.xpose.msra.mxu0 0.0
        %1982 = vmatprep.subr.mxu0 0.0
        %1983 = vmatpush1.xpose.msra.mxu0 0.0
        %1984 = vmatprep.subr.mxu0 0.0
        %1985 = vmatpush1.xpose.msra.mxu0 0.0
        %1986 = vmatprep.subr.mxu0 0.0
        %1987 = vmatpush1.xpose.msra.mxu0 0.0
        %1988 = vmatprep.subr.mxu0 0.0
        %1989 = vmatpush1.xpose.msra.mxu0 0.0
        %1990 = vmatprep.subr.mxu0 0.0
        %1991 = vmatpush1.xpose.msra.mxu0 0.0
        %1992 = vmatprep.subr.mxu0 0.0
        %1993 = vmatpush1.xpose.msra.mxu0 0.0
        %1994 = vmatprep.subr.mxu0 0.0
        %1995 = vmatpush1.xpose.msra.mxu0 0.0
        %1996 = vmatprep.subr.mxu0 0.0
        %1997 = vmatpush1.xpose.msra.mxu0 0.0
        %1998 = vmatprep.subr.mxu0 0.0
        %1999 = vmatpush1.xpose.msra.mxu0 0.0
        %2000 = vmatprep.mubr.f32.mxu0 0.0
        %2001 = vmatmul.mubr.f32.gmra.mrb[0].mxu0 %v1932
        %v2002 = vpop.f32.mrb[0].mxu0
        %v2003 = vadd.f32 0.0, %v2002
        %v2004 = vpop.f32.mrb[0].mxu0
        %2005 = vdwg.mxu0
        %v2006 = vsel %vm1197, %v1925, -inf
        %2007 = vmax.xlane.f32.xlu0 %v2006
        %v2008 = vpop.xlane.xlu0 %2007
        %v2009 = vsel %vm1197, %v2003, -inf
        %2010 = vmax.xlane.f32.xlu0 %v2009
        %v2011 = vpop.xlane.xlu0 %2010
        %v2012 = vsub.f32 %v1925, %v2008
        %v2013 = vsub.f32 %v2003, %v2011
        %v2014 = vmul.f32 %v2012, 1.442695
        %v2015 = vpow.pop %v2014
        %v2016 = vmul.f32 %v2013, 1.442695
        %v2017 = vpow.pop %v2016
        %v2018 = vsel %vm1197, %v2015, 0.0
        %2019 = vadd.xlane.f32.xlu0 %v2018
        %v2020 = vpop.xlane.xlu0 %2019
        %v2021 = vsel %vm1197, %v2017, 0.0
        %2022 = vadd.xlane.f32.xlu0 %v2021
        %v2023 = vpop.xlane.xlu0 %2022
        %v2024 = vrcp.pop %v2020
        %v2025 = vrcp.pop %v2023
        %v2026 = vmul.f32 %v2015, %v2024
        %v2027 = vmul.f32 %v2017, %v2025
        %2028 = vrot.lane.b32.xlu0 %v1191, 112
        %v2029 = vpop.permute.xlu0 %2028
        %v2032 = vsel %vm1197, %v2026, 0
        %2034 = vmatprep.subr.mxu0 0.0
        %2035 = vmatpush1.msra.mxu0 %v2029
        %2036 = vmatprep.subr.mxu0 0.0
        %2037 = vmatpush1.msra.mxu0 0.0
        %2038 = vmatprep.subr.mxu0 0.0
        %2039 = vmatpush1.msra.mxu0 0.0
        %2040 = vmatprep.subr.mxu0 0.0
        %2041 = vmatpush1.msra.mxu0 0.0
        %2042 = vmatprep.subr.mxu0 0.0
        %2043 = vmatpush1.msra.mxu0 0.0
        %2044 = vmatprep.subr.mxu0 0.0
        %2045 = vmatpush1.msra.mxu0 0.0
        %2046 = vmatprep.subr.mxu0 0.0
        %2047 = vmatpush1.msra.mxu0 0.0
        %2048 = vmatprep.subr.mxu0 0.0
        %2049 = vmatpush1.msra.mxu0 0.0
        %2050 = vmatprep.subr.mxu0 0.0
        %2051 = vmatpush1.msra.mxu0 0.0
        %2052 = vmatprep.subr.mxu0 0.0
        %2053 = vmatpush1.msra.mxu0 0.0
        %2054 = vmatprep.subr.mxu0 0.0
        %2055 = vmatpush1.msra.mxu0 0.0
        %2056 = vmatprep.subr.mxu0 0.0
        %2057 = vmatpush1.msra.mxu0 0.0
        %2058 = vmatprep.subr.mxu0 0.0
        %2059 = vmatpush1.msra.mxu0 0.0
        %2060 = vmatprep.subr.mxu0 0.0
        %2061 = vmatpush1.msra.mxu0 0.0
        %2062 = vmatprep.subr.mxu0 0.0
        %2063 = vmatpush1.msra.mxu0 0.0
        %2064 = vmatprep.subr.mxu0 0.0
        %2065 = vmatpush1.msra.mxu0 0.0
        %2066 = vmatprep.subr.mxu0 0.0
        %2067 = vmatpush1.msra.mxu0 0.0
        %2068 = vmatprep.subr.mxu0 0.0
        %2069 = vmatpush1.msra.mxu0 0.0
        %2070 = vmatprep.subr.mxu0 0.0
        %2071 = vmatpush1.msra.mxu0 0.0
        %2072 = vmatprep.subr.mxu0 0.0
        %2073 = vmatpush1.msra.mxu0 0.0
        %2074 = vmatprep.subr.mxu0 0.0
        %2075 = vmatpush1.msra.mxu0 0.0
        %2076 = vmatprep.subr.mxu0 0.0
        %2077 = vmatpush1.msra.mxu0 0.0
        %2078 = vmatprep.subr.mxu0 0.0
        %2079 = vmatpush1.msra.mxu0 0.0
        %2080 = vmatprep.subr.mxu0 0.0
        %2081 = vmatpush1.msra.mxu0 0.0
        %2082 = vmatprep.subr.mxu0 0.0
        %2083 = vmatpush1.msra.mxu0 0.0
        %2084 = vmatprep.subr.mxu0 0.0
        %2085 = vmatpush1.msra.mxu0 0.0
        %2086 = vmatprep.subr.mxu0 0.0
        %2087 = vmatpush1.msra.mxu0 0.0
        %2088 = vmatprep.subr.mxu0 0.0
        %2089 = vmatpush1.msra.mxu0 0.0
        %2090 = vmatprep.subr.mxu0 0.0
        %2091 = vmatpush1.msra.mxu0 0.0
        %2092 = vmatprep.subr.mxu0 0.0
        %2093 = vmatpush1.msra.mxu0 0.0
        %2094 = vmatprep.subr.mxu0 0.0
        %2095 = vmatpush1.msra.mxu0 0.0
        %2096 = vmatprep.subr.mxu0 0.0
        %2097 = vmatpush1.msra.mxu0 0.0
        %2098 = vmatprep.mubr.f32.mxu0 0.0
        %2099 = vmatmul.mubr.f32.gmra.mrb[0].mxu0 %v2032
        %v2100 = vpop.f32.mrb[0].mxu0
        %v2101 = vadd.f32 0.0, %v2100
        %v2102 = vpop.f32.mrb[0].mxu0
        %2103 = vdwg.mxu0
        %2104 = vrot.lane.b32.xlu0 %v1194, 112
        %v2105 = vpop.permute.xlu0 %2104
        %v2108 = vsel %vm1197, %v2027, 0
        %2110 = vmatprep.subr.mxu0 0.0
        %2111 = vmatpush1.msra.mxu0 %v2105
        %2112 = vmatprep.subr.mxu0 0.0
        %2113 = vmatpush1.msra.mxu0 0.0
        %2114 = vmatprep.subr.mxu0 0.0
        %2115 = vmatpush1.msra.mxu0 0.0
        %2116 = vmatprep.subr.mxu0 0.0
        %2117 = vmatpush1.msra.mxu0 0.0
        %2118 = vmatprep.subr.mxu0 0.0
        %2119 = vmatpush1.msra.mxu0 0.0
        %2120 = vmatprep.subr.mxu0 0.0
        %2121 = vmatpush1.msra.mxu0 0.0
        %2122 = vmatprep.subr.mxu0 0.0
        %2123 = vmatpush1.msra.mxu0 0.0
        %2124 = vmatprep.subr.mxu0 0.0
        %2125 = vmatpush1.msra.mxu0 0.0
        %2126 = vmatprep.subr.mxu0 0.0
        %2127 = vmatpush1.msra.mxu0 0.0
        %2128 = vmatprep.subr.mxu0 0.0
        %2129 = vmatpush1.msra.mxu0 0.0
        %2130 = vmatprep.subr.mxu0 0.0
        %2131 = vmatpush1.msra.mxu0 0.0
        %2132 = vmatprep.subr.mxu0 0.0
        %2133 = vmatpush1.msra.mxu0 0.0
        %2134 = vmatprep.subr.mxu0 0.0
        %2135 = vmatpush1.msra.mxu0 0.0
        %2136 = vmatprep.subr.mxu0 0.0
        %2137 = vmatpush1.msra.mxu0 0.0
        %2138 = vmatprep.subr.mxu0 0.0
        %2139 = vmatpush1.msra.mxu0 0.0
        %2140 = vmatprep.subr.mxu0 0.0
        %2141 = vmatpush1.msra.mxu0 0.0
        %2142 = vmatprep.subr.mxu0 0.0
        %2143 = vmatpush1.msra.mxu0 0.0
        %2144 = vmatprep.subr.mxu0 0.0
        %2145 = vmatpush1.msra.mxu0 0.0
        %2146 = vmatprep.subr.mxu0 0.0
        %2147 = vmatpush1.msra.mxu0 0.0
        %2148 = vmatprep.subr.mxu0 0.0
        %2149 = vmatpush1.msra.mxu0 0.0
        %2150 = vmatprep.subr.mxu0 0.0
        %2151 = vmatpush1.msra.mxu0 0.0
        %2152 = vmatprep.subr.mxu0 0.0
        %2153 = vmatpush1.msra.mxu0 0.0
        %2154 = vmatprep.subr.mxu0 0.0
        %2155 = vmatpush1.msra.mxu0 0.0
        %2156 = vmatprep.subr.mxu0 0.0
        %2157 = vmatpush1.msra.mxu0 0.0
        %2158 = vmatprep.subr.mxu0 0.0
        %2159 = vmatpush1.msra.mxu0 0.0
        %2160 = vmatprep.subr.mxu0 0.0
        %2161 = vmatpush1.msra.mxu0 0.0
        %2162 = vmatprep.subr.mxu0 0.0
        %2163 = vmatpush1.msra.mxu0 0.0
        %2164 = vmatprep.subr.mxu0 0.0
        %2165 = vmatpush1.msra.mxu0 0.0
        %2166 = vmatprep.subr.mxu0 0.0
        %2167 = vmatpush1.msra.mxu0 0.0
        %2168 = vmatprep.subr.mxu0 0.0
        %2169 = vmatpush1.msra.mxu0 0.0
        %2170 = vmatprep.subr.mxu0 0.0
        %2171 = vmatpush1.msra.mxu0 0.0
        %2172 = vmatprep.subr.mxu0 0.0
        %2173 = vmatpush1.msra.mxu0 0.0
        %2174 = vmatprep.mubr.f32.mxu0 0.0
        %2175 = vmatmul.mubr.f32.gmra.mrb[0].mxu0 %v2108
        %v2176 = vpop.f32.mrb[0].mxu0
        %v2177 = vadd.f32 0.0, %v2176
        %v2178 = vpop.f32.mrb[0].mxu0
        %2179 = vdwg.mxu0
        %2180 = vrot.lane.b32.xlu0 %v1063, 104
        %v2181 = vpop.permute.xlu0 %2180
        %2182 = vrot.lane.b32.xlu0 %v1127, 104
        %v2183 = vpop.permute.xlu0 %2182
        %v2184 = vsel %vm1197, %v2181, 0
        %v2186 = vsel %vm1197, %v2183, 0
        %2188 = vmatprep.subr.mxu0 0.0
        %2189 = vmatpush1.xpose.msra.mxu0 %v2186
        %2190 = vmatprep.subr.mxu0 0.0
        %2191 = vmatpush1.xpose.msra.mxu0 0.0
        %2192 = vmatprep.subr.mxu0 0.0
        %2193 = vmatpush1.xpose.msra.mxu0 0.0
        %2194 = vmatprep.subr.mxu0 0.0
        %2195 = vmatpush1.xpose.msra.mxu0 0.0
        %2196 = vmatprep.subr.mxu0 0.0
        %2197 = vmatpush1.xpose.msra.mxu0 0.0
        %2198 = vmatprep.subr.mxu0 0.0
        %2199 = vmatpush1.xpose.msra.mxu0 0.0
        %2200 = vmatprep.subr.mxu0 0.0
        %2201 = vmatpush1.xpose.msra.mxu0 0.0
        %2202 = vmatprep.subr.mxu0 0.0
        %2203 = vmatpush1.xpose.msra.mxu0 0.0
        %2204 = vmatprep.subr.mxu0 0.0
        %2205 = vmatpush1.xpose.msra.mxu0 0.0
        %2206 = vmatprep.subr.mxu0 0.0
        %2207 = vmatpush1.xpose.msra.mxu0 0.0
        %2208 = vmatprep.subr.mxu0 0.0
        %2209 = vmatpush1.xpose.msra.mxu0 0.0
        %2210 = vmatprep.subr.mxu0 0.0
        %2211 = vmatpush1.xpose.msra.mxu0 0.0
        %2212 = vmatprep.subr.mxu0 0.0
        %2213 = vmatpush1.xpose.msra.mxu0 0.0
        %2214 = vmatprep.subr.mxu0 0.0
        %2215 = vmatpush1.xpose.msra.mxu0 0.0
        %2216 = vmatprep.subr.mxu0 0.0
        %2217 = vmatpush1.xpose.msra.mxu0 0.0
        %2218 = vmatprep.subr.mxu0 0.0
        %2219 = vmatpush1.xpose.msra.mxu0 0.0
        %2220 = vmatprep.subr.mxu0 0.0
        %2221 = vmatpush1.xpose.msra.mxu0 0.0
        %2222 = vmatprep.subr.mxu0 0.0
        %2223 = vmatpush1.xpose.msra.mxu0 0.0
        %2224 = vmatprep.subr.mxu0 0.0
        %2225 = vmatpush1.xpose.msra.mxu0 0.0
        %2226 = vmatprep.subr.mxu0 0.0
        %2227 = vmatpush1.xpose.msra.mxu0 0.0
        %2228 = vmatprep.subr.mxu0 0.0
        %2229 = vmatpush1.xpose.msra.mxu0 0.0
        %2230 = vmatprep.subr.mxu0 0.0
        %2231 = vmatpush1.xpose.msra.mxu0 0.0
        %2232 = vmatprep.subr.mxu0 0.0
        %2233 = vmatpush1.xpose.msra.mxu0 0.0
        %2234 = vmatprep.subr.mxu0 0.0
        %2235 = vmatpush1.xpose.msra.mxu0 0.0
        %2236 = vmatprep.subr.mxu0 0.0
        %2237 = vmatpush1.xpose.msra.mxu0 0.0
        %2238 = vmatprep.subr.mxu0 0.0
        %2239 = vmatpush1.xpose.msra.mxu0 0.0
        %2240 = vmatprep.subr.mxu0 0.0
        %2241 = vmatpush1.xpose.msra.mxu0 0.0
        %2242 = vmatprep.subr.mxu0 0.0
        %2243 = vmatpush1.xpose.msra.mxu0 0.0
        %2244 = vmatprep.subr.mxu0 0.0
        %2245 = vmatpush1.xpose.msra.mxu0 0.0
        %2246 = vmatprep.subr.mxu0 0.0
        %2247 = vmatpush1.xpose.msra.mxu0 0.0
        %2248 = vmatprep.subr.mxu0 0.0
        %2249 = vmatpush1.xpose.msra.mxu0 0.0
        %2250 = vmatprep.subr.mxu0 0.0
        %2251 = vmatpush1.xpose.msra.mxu0 0.0
        %2252 = vmatprep.mubr.f32.mxu0 0.0
        %2253 = vmatmul.mubr.f32.gmra.mrb[0].mxu0 %v2184
        %v2254 = vpop.f32.mrb[0].mxu0
        %v2255 = vadd.f32 0.0, %v2254
        %v2256 = vpop.f32.mrb[0].mxu0
        %2257 = vdwg.mxu0
        %2258 = vrot.lane.b32.xlu0 %v1066, 104
        %v2259 = vpop.permute.xlu0 %2258
        %2260 = vrot.lane.b32.xlu0 %v1130, 104
        %v2261 = vpop.permute.xlu0 %2260
        %v2262 = vsel %vm1197, %v2259, 0
        %v2264 = vsel %vm1197, %v2261, 0
        %2266 = vmatprep.subr.mxu0 0.0
        %2267 = vmatpush1.xpose.msra.mxu0 %v2264
        %2268 = vmatprep.subr.mxu0 0.0
        %2269 = vmatpush1.xpose.msra.mxu0 0.0
        %2270 = vmatprep.subr.mxu0 0.0
        %2271 = vmatpush1.xpose.msra.mxu0 0.0
        %2272 = vmatprep.subr.mxu0 0.0
        %2273 = vmatpush1.xpose.msra.mxu0 0.0
        %2274 = vmatprep.subr.mxu0 0.0
        %2275 = vmatpush1.xpose.msra.mxu0 0.0
        %2276 = vmatprep.subr.mxu0 0.0
        %2277 = vmatpush1.xpose.msra.mxu0 0.0
        %2278 = vmatprep.subr.mxu0 0.0
        %2279 = vmatpush1.xpose.msra.mxu0 0.0
        %2280 = vmatprep.subr.mxu0 0.0
        %2281 = vmatpush1.xpose.msra.mxu0 0.0
        %2282 = vmatprep.subr.mxu0 0.0
        %2283 = vmatpush1.xpose.msra.mxu0 0.0
        %2284 = vmatprep.subr.mxu0 0.0
        %2285 = vmatpush1.xpose.msra.mxu0 0.0
        %2286 = vmatprep.subr.mxu0 0.0
        %2287 = vmatpush1.xpose.msra.mxu0 0.0
        %2288 = vmatprep.subr.mxu0 0.0
        %2289 = vmatpush1.xpose.msra.mxu0 0.0
        %2290 = vmatprep.subr.mxu0 0.0
        %2291 = vmatpush1.xpose.msra.mxu0 0.0
        %2292 = vmatprep.subr.mxu0 0.0
        %2293 = vmatpush1.xpose.msra.mxu0 0.0
        %2294 = vmatprep.subr.mxu0 0.0
        %2295 = vmatpush1.xpose.msra.mxu0 0.0
        %2296 = vmatprep.subr.mxu0 0.0
        %2297 = vmatpush1.xpose.msra.mxu0 0.0
        %2298 = vmatprep.subr.mxu0 0.0
        %2299 = vmatpush1.xpose.msra.mxu0 0.0
        %2300 = vmatprep.subr.mxu0 0.0
        %2301 = vmatpush1.xpose.msra.mxu0 0.0
        %2302 = vmatprep.subr.mxu0 0.0
        %2303 = vmatpush1.xpose.msra.mxu0 0.0
        %2304 = vmatprep.subr.mxu0 0.0
        %2305 = vmatpush1.xpose.msra.mxu0 0.0
        %2306 = vmatprep.subr.mxu0 0.0
        %2307 = vmatpush1.xpose.msra.mxu0 0.0
        %2308 = vmatprep.subr.mxu0 0.0
        %2309 = vmatpush1.xpose.msra.mxu0 0.0
        %2310 = vmatprep.subr.mxu0 0.0
        %2311 = vmatpush1.xpose.msra.mxu0 0.0
        %2312 = vmatprep.subr.mxu0 0.0
        %2313 = vmatpush1.xpose.msra.mxu0 0.0
        %2314 = vmatprep.subr.mxu0 0.0
        %2315 = vmatpush1.xpose.msra.mxu0 0.0
        %2316 = vmatprep.subr.mxu0 0.0
        %2317 = vmatpush1.xpose.msra.mxu0 0.0
        %2318 = vmatprep.subr.mxu0 0.0
        %2319 = vmatpush1.xpose.msra.mxu0 0.0
        %2320 = vmatprep.subr.mxu0 0.0
        %2321 = vmatpush1.xpose.msra.mxu0 0.0
        %2322 = vmatprep.subr.mxu0 0.0
        %2323 = vmatpush1.xpose.msra.mxu0 0.0
        %2324 = vmatprep.subr.mxu0 0.0
        %2325 = vmatpush1.xpose.msra.mxu0 0.0
        %2326 = vmatprep.subr.mxu0 0.0
        %2327 = vmatpush1.xpose.msra.mxu0 0.0
        %2328 = vmatprep.subr.mxu0 0.0
        %2329 = vmatpush1.xpose.msra.mxu0 0.0
        %2330 = vmatprep.mubr.f32.mxu0 0.0
        %2331 = vmatmul.mubr.f32.gmra.mrb[0].mxu0 %v2262
        %v2332 = vpop.f32.mrb[0].mxu0
        %v2333 = vadd.f32 0.0, %v2332
        %v2334 = vpop.f32.mrb[0].mxu0
        %2335 = vdwg.mxu0
        %v2336 = vsel %vm1197, %v2255, -inf
        %2337 = vmax.xlane.f32.xlu0 %v2336
        %v2338 = vpop.xlane.xlu0 %2337
        %v2339 = vsel %vm1197, %v2333, -inf
        %2340 = vmax.xlane.f32.xlu0 %v2339
        %v2341 = vpop.xlane.xlu0 %2340
        %v2342 = vsub.f32 %v2255, %v2338
        %v2343 = vsub.f32 %v2333, %v2341
        %v2344 = vmul.f32 %v2342, 1.442695
        %v2345 = vpow.pop %v2344
        %v2346 = vmul.f32 %v2343, 1.442695
        %v2347 = vpow.pop %v2346
        %v2348 = vsel %vm1197, %v2345, 0.0
        %2349 = vadd.xlane.f32.xlu0 %v2348
        %v2350 = vpop.xlane.xlu0 %2349
        %v2351 = vsel %vm1197, %v2347, 0.0
        %2352 = vadd.xlane.f32.xlu0 %v2351
        %v2353 = vpop.xlane.xlu0 %2352
        %v2354 = vrcp.pop %v2350
        %v2355 = vrcp.pop %v2353
        %v2356 = vmul.f32 %v2345, %v2354
        %v2357 = vmul.f32 %v2347, %v2355
        %2358 = vrot.lane.b32.xlu0 %v1191, 104
        %v2359 = vpop.permute.xlu0 %2358
        %v2362 = vsel %vm1197, %v2356, 0
        %2364 = vmatprep.subr.mxu0 0.0
        %2365 = vmatpush1.msra.mxu0 %v2359
        %2366 = vmatprep.subr.mxu0 0.0
        %2367 = vmatpush1.msra.mxu0 0.0
        %2368 = vmatprep.subr.mxu0 0.0
        %2369 = vmatpush1.msra.mxu0 0.0
        %2370 = vmatprep.subr.mxu0 0.0
        %2371 = vmatpush1.msra.mxu0 0.0
        %2372 = vmatprep.subr.mxu0 0.0
        %2373 = vmatpush1.msra.mxu0 0.0
        %2374 = vmatprep.subr.mxu0 0.0
        %2375 = vmatpush1.msra.mxu0 0.0
        %2376 = vmatprep.subr.mxu0 0.0
        %2377 = vmatpush1.msra.mxu0 0.0
        %2378 = vmatprep.subr.mxu0 0.0
        %2379 = vmatpush1.msra.mxu0 0.0
        %2380 = vmatprep.subr.mxu0 0.0
        %2381 = vmatpush1.msra.mxu0 0.0
        %2382 = vmatprep.subr.mxu0 0.0
        %2383 = vmatpush1.msra.mxu0 0.0
        %2384 = vmatprep.subr.mxu0 0.0
        %2385 = vmatpush1.msra.mxu0 0.0
        %2386 = vmatprep.subr.mxu0 0.0
        %2387 = vmatpush1.msra.mxu0 0.0
        %2388 = vmatprep.subr.mxu0 0.0
        %2389 = vmatpush1.msra.mxu0 0.0
        %2390 = vmatprep.subr.mxu0 0.0
        %2391 = vmatpush1.msra.mxu0 0.0
        %2392 = vmatprep.subr.mxu0 0.0
        %2393 = vmatpush1.msra.mxu0 0.0
        %2394 = vmatprep.subr.mxu0 0.0
        %2395 = vmatpush1.msra.mxu0 0.0
        %2396 = vmatprep.subr.mxu0 0.0
        %2397 = vmatpush1.msra.mxu0 0.0
        %2398 = vmatprep.subr.mxu0 0.0
        %2399 = vmatpush1.msra.mxu0 0.0
        %2400 = vmatprep.subr.mxu0 0.0
        %2401 = vmatpush1.msra.mxu0 0.0
        %2402 = vmatprep.subr.mxu0 0.0
        %2403 = vmatpush1.msra.mxu0 0.0
        %2404 = vmatprep.subr.mxu0 0.0
        %2405 = vmatpush1.msra.mxu0 0.0
        %2406 = vmatprep.subr.mxu0 0.0
        %2407 = vmatpush1.msra.mxu0 0.0
        %2408 = vmatprep.subr.mxu0 0.0
        %2409 = vmatpush1.msra.mxu0 0.0
        %2410 = vmatprep.subr.mxu0 0.0
        %2411 = vmatpush1.msra.mxu0 0.0
        %2412 = vmatprep.subr.mxu0 0.0
        %2413 = vmatpush1.msra.mxu0 0.0
        %2414 = vmatprep.subr.mxu0 0.0
        %2415 = vmatpush1.msra.mxu0 0.0
        %2416 = vmatprep.subr.mxu0 0.0
        %2417 = vmatpush1.msra.mxu0 0.0
        %2418 = vmatprep.subr.mxu0 0.0
        %2419 = vmatpush1.msra.mxu0 0.0
        %2420 = vmatprep.subr.mxu0 0.0
        %2421 = vmatpush1.msra.mxu0 0.0
        %2422 = vmatprep.subr.mxu0 0.0
        %2423 = vmatpush1.msra.mxu0 0.0
        %2424 = vmatprep.subr.mxu0 0.0
        %2425 = vmatpush1.msra.mxu0 0.0
        %2426 = vmatprep.subr.mxu0 0.0
        %2427 = vmatpush1.msra.mxu0 0.0
        %2428 = vmatprep.mubr.f32.mxu0 0.0
        %2429 = vmatmul.mubr.f32.gmra.mrb[0].mxu0 %v2362
        %v2430 = vpop.f32.mrb[0].mxu0
        %v2431 = vadd.f32 0.0, %v2430
        %v2432 = vpop.f32.mrb[0].mxu0
        %2433 = vdwg.mxu0
        %2434 = vrot.lane.b32.xlu0 %v1194, 104
        %v2435 = vpop.permute.xlu0 %2434
        %v2438 = vsel %vm1197, %v2357, 0
        %2440 = vmatprep.subr.mxu0 0.0
        %2441 = vmatpush1.msra.mxu0 %v2435
        %2442 = vmatprep.subr.mxu0 0.0
        %2443 = vmatpush1.msra.mxu0 0.0
        %2444 = vmatprep.subr.mxu0 0.0
        %2445 = vmatpush1.msra.mxu0 0.0
        %2446 = vmatprep.subr.mxu0 0.0
        %2447 = vmatpush1.msra.mxu0 0.0
        %2448 = vmatprep.subr.mxu0 0.0
        %2449 = vmatpush1.msra.mxu0 0.0
        %2450 = vmatprep.subr.mxu0 0.0
        %2451 = vmatpush1.msra.mxu0 0.0
        %2452 = vmatprep.subr.mxu0 0.0
        %2453 = vmatpush1.msra.mxu0 0.0
        %2454 = vmatprep.subr.mxu0 0.0
        %2455 = vmatpush1.msra.mxu0 0.0
        %2456 = vmatprep.subr.mxu0 0.0
        %2457 = vmatpush1.msra.mxu0 0.0
        %2458 = vmatprep.subr.mxu0 0.0
        %2459 = vmatpush1.msra.mxu0 0.0
        %2460 = vmatprep.subr.mxu0 0.0
        %2461 = vmatpush1.msra.mxu0 0.0
        %2462 = vmatprep.subr.mxu0 0.0
        %2463 = vmatpush1.msra.mxu0 0.0
        %2464 = vmatprep.subr.mxu0 0.0
        %2465 = vmatpush1.msra.mxu0 0.0
        %2466 = vmatprep.subr.mxu0 0.0
        %2467 = vmatpush1.msra.mxu0 0.0
        %2468 = vmatprep.subr.mxu0 0.0
        %2469 = vmatpush1.msra.mxu0 0.0
        %2470 = vmatprep.subr.mxu0 0.0
        %2471 = vmatpush1.msra.mxu0 0.0
        %2472 = vmatprep.subr.mxu0 0.0
        %2473 = vmatpush1.msra.mxu0 0.0
        %2474 = vmatprep.subr.mxu0 0.0
        %2475 = vmatpush1.msra.mxu0 0.0
        %2476 = vmatprep.subr.mxu0 0.0
        %2477 = vmatpush1.msra.mxu0 0.0
        %2478 = vmatprep.subr.mxu0 0.0
        %2479 = vmatpush1.msra.mxu0 0.0
        %2480 = vmatprep.subr.mxu0 0.0
        %2481 = vmatpush1.msra.mxu0 0.0
        %2482 = vmatprep.subr.mxu0 0.0
        %2483 = vmatpush1.msra.mxu0 0.0
        %2484 = vmatprep.subr.mxu0 0.0
        %2485 = vmatpush1.msra.mxu0 0.0
        %2486 = vmatprep.subr.mxu0 0.0
        %2487 = vmatpush1.msra.mxu0 0.0
        %2488 = vmatprep.subr.mxu0 0.0
        %2489 = vmatpush1.msra.mxu0 0.0
        %2490 = vmatprep.subr.mxu0 0.0
        %2491 = vmatpush1.msra.mxu0 0.0
        %2492 = vmatprep.subr.mxu0 0.0
        %2493 = vmatpush1.msra.mxu0 0.0
        %2494 = vmatprep.subr.mxu0 0.0
        %2495 = vmatpush1.msra.mxu0 0.0
        %2496 = vmatprep.subr.mxu0 0.0
        %2497 = vmatpush1.msra.mxu0 0.0
        %2498 = vmatprep.subr.mxu0 0.0
        %2499 = vmatpush1.msra.mxu0 0.0
        %2500 = vmatprep.subr.mxu0 0.0
        %2501 = vmatpush1.msra.mxu0 0.0
        %2502 = vmatprep.subr.mxu0 0.0
        %2503 = vmatpush1.msra.mxu0 0.0
        %2504 = vmatprep.mubr.f32.mxu0 0.0
        %2505 = vmatmul.mubr.f32.gmra.mrb[0].mxu0 %v2438
        %v2506 = vpop.f32.mrb[0].mxu0
        %v2507 = vadd.f32 0.0, %v2506
        %v2508 = vpop.f32.mrb[0].mxu0
        %2509 = vdwg.mxu0
        %2512 = vrot.lane.b32.xlu0 %v1770, 8
        %v2513 = vpop.permute.xlu0 %2512
        %2514 = vrot.lane.b32.xlu0 %v1847, 8
        %v2515 = vpop.permute.xlu0 %2514
        %2520 = vrot.lane.b32.xlu0 %v2101, 16
        %v2521 = vpop.permute.xlu0 %2520
        %2522 = vrot.lane.b32.xlu0 %v2177, 16
        %v2523 = vpop.permute.xlu0 %2522
        %2528 = vrot.lane.b32.xlu0 %v2431, 24
        %v2529 = vpop.permute.xlu0 %2528
        %2530 = vrot.lane.b32.xlu0 %v2507, 24
        %v2531 = vpop.permute.xlu0 %2530
        %v2534 = vsel %vm1197, %v1442, %v2513
        %v2535 = vsel %vm1197, %v1515, %v2515
        %vm2536 = vcmask 130048
        %v2537 = vsel %vm2536, %v2534, %v2521
        %v2538 = vsel %vm2536, %v2535, %v2523
        %vm2539 = vcmask 195584
        %v2540 = vsel %vm2539, %v2537, %v2529
        %v2541 = vsel %vm2539, %v2538, %v2531
        %v2542 = vpack.c.bf16 %v2541, %v2540
        %v2543 = vld [vmem:[%s892] sm:$0xf]
        %v2544 = vld [vmem:[%s892 + $0x4] sm:$0xf]
        %v2545 = vld [vmem:[%s892 + $0x8] sm:$0xf]
        %v2546 = vld [vmem:[%s892 + $0xc] sm:$0xf]
        %v2547 = vld [vmem:[%s895] sm:$0x1]
        %v2549 = vlaneseq
        %v2550 = vshrl.u32 %v2549, 7
        %v2551 = vsub.s32 0, %v2550
        %v2552 = vrot.slane %v2547, %v2551
        %v2558 = vunpack.c.l.b16 %v2543
        %v2559 = vunpack.c.l.b16 %v2544
        %v2560 = vunpack.c.l.b16 %v2545
        %v2561 = vunpack.c.l.b16 %v2546
        %v2562 = vpack.c.b16 %v2559, %v2558
        %v2563 = vpack.c.b16 %v2561, %v2560
        %v2567 = vsel %vm1024, %v2542, 0
        %2569 = vmatprep.subr.bf16.mxu0 0
        %2570 = vmatpush1.bf16.msra.mxu0 %v2562
        %2571 = vmatprep.subr.bf16.mxu0 0
        %2572 = vmatpush1.bf16.msra.mxu0 %v2563
        %2573 = vmatprep.subr.bf16.mxu0 0
        %2574 = vmatpush1.bf16.msra.mxu0 0
        %2575 = vmatprep.subr.bf16.mxu0 0
        %2576 = vmatpush1.bf16.msra.mxu0 0
        %2577 = vmatprep.subr.bf16.mxu0 0
        %2578 = vmatpush1.bf16.msra.mxu0 0
        %2579 = vmatprep.subr.bf16.mxu0 0
        %2580 = vmatpush1.bf16.msra.mxu0 0
        %2581 = vmatprep.subr.bf16.mxu0 0
        %2582 = vmatpush1.bf16.msra.mxu0 0
        %2583 = vmatprep.subr.bf16.mxu0 0
        %2584 = vmatpush1.bf16.msra.mxu0 0
        %2585 = vmatprep.subr.bf16.mxu0 0
        %2586 = vmatpush1.bf16.msra.mxu0 0
        %2587 = vmatprep.subr.bf16.mxu0 0
        %2588 = vmatpush1.bf16.msra.mxu0 0
        %2589 = vmatprep.subr.bf16.mxu0 0
        %2590 = vmatpush1.bf16.msra.mxu0 0
        %2591 = vmatprep.subr.bf16.mxu0 0
        %2592 = vmatpush1.bf16.msra.mxu0 0
        %2593 = vmatprep.subr.bf16.mxu0 0
        %2594 = vmatpush1.bf16.msra.mxu0 0
        %2595 = vmatprep.subr.bf16.mxu0 0
        %2596 = vmatpush1.bf16.msra.mxu0 0
        %2597 = vmatprep.subr.bf16.mxu0 0
        %2598 = vmatpush1.bf16.msra.mxu0 0
        %2599 = vmatprep.subr.bf16.mxu0 0
        %2600 = vmatpush1.bf16.msra.mxu0 0
        %2601 = vmatprep.mubr.bf16.mxu0 0
        %2602 = vmatmul.mubr.bf16.gmra.mrb[0].mxu0 %v2567
        %v2603 = vpop.f32.mrb[0].mxu0
        %v2604 = vadd.f32 %v2552, %v2603
        %v2605 = vpop.f32.mrb[0].mxu0
        %v2606 = vpop.f32.mrb[0].mxu0
        %v2607 = vadd.f32 %v2552, %v2606
        %v2608 = vpop.f32.mrb[0].mxu0
        %2609 = vdwg.mxu0
        %v2610 = vadd.f32 %v998, %v2604
        %v2611 = vadd.f32 %v999, %v2607
        %v2612 = vld [vmem:[%s898] sm:$0x1]
        %v2613 = vld [vmem:[%s901] sm:$0x1]
        %v2614 = vsel %vm1024, %v2610, 0.0
        %2615 = vadd.xlane.f32.xlu0 %v2614
        %v2616 = vpop.xlane.xlu0 %2615
        %v2617 = vsel %vm1024, %v2611, 0.0
        %2618 = vadd.xlane.f32.xlu0 %v2617
        %v2619 = vpop.xlane.xlu0 %2618
        %v2620 = vrcp.pop 32.0
        %v2621 = vmul.f32 %v2616, %v2620
        %v2622 = vmul.f32 %v2619, %v2620
        %v2623 = vsub.f32 %v2610, %v2621
        %v2624 = vsub.f32 %v2611, %v2622
        %v2625 = vmul.f32 %v2623, %v2623
        %v2626 = vmul.f32 %v2624, %v2624
        %v2627 = vsel %vm1024, %v2625, 0.0
        %2628 = vadd.xlane.f32.xlu0 %v2627
        %v2629 = vpop.xlane.xlu0 %2628
        %v2630 = vsel %vm1024, %v2626, 0.0
        %2631 = vadd.xlane.f32.xlu0 %v2630
        %v2632 = vpop.xlane.xlu0 %2631
        %v2633 = vmul.f32 %v2629, %v2620
        %v2634 = vmul.f32 %v2632, %v2620
        %v2635 = vadd.f32 %v2633, 1e-05
        %v2636 = vadd.f32 %v2634, 1e-05
        %v2637 = vrsqrt.pop %v2635
        %v2638 = vrsqrt.pop %v2636
        %v2639 = vmul.f32 %v2623, %v2637
        %v2640 = vmul.f32 %v2624, %v2638
        %v2642 = vlaneseq
        %v2643 = vshrl.u32 %v2642, 7
        %v2644 = vsub.s32 0, %v2643
        %v2645 = vrot.slane %v2612, %v2644
        %v2647 = vmul.f32 %v2639, %v2645
        %v2648 = vmul.f32 %v2640, %v2645
        %v2650 = vlaneseq
        %v2651 = vshrl.u32 %v2650, 7
        %v2652 = vsub.s32 0, %v2651
        %v2653 = vrot.slane %v2613, %v2652
        %v2655 = vadd.f32 %v2647, %v2653
        %v2656 = vadd.f32 %v2648, %v2653
        %v2657 = vpack.c.bf16 %v2656, %v2655
        %v2658 = vld [vmem:[%s906] sm:$0xff]
        %v2659 = vld [vmem:[%s906 + $0x8] sm:$0xff]
        %v2660 = vld [vmem:[%s906 + $0x10] sm:$0xff]
        %v2661 = vld [vmem:[%s906 + $0x18] sm:$0xff]
        %v2662 = vld [vmem:[%s906 + $0x20] sm:$0xff]
        %v2663 = vld [vmem:[%s906 + $0x28] sm:$0xff]
        %v2664 = vld [vmem:[%s906 + $0x30] sm:$0xff]
        %v2665 = vld [vmem:[%s906 + $0x38] sm:$0xff]
        %v2666 = vld [vmem:[%s906 + $0x40] sm:$0xff]
        %v2667 = vld [vmem:[%s906 + $0x48] sm:$0xff]
        %v2668 = vld [vmem:[%s906 + $0x50] sm:$0xff]
        %v2669 = vld [vmem:[%s906 + $0x58] sm:$0xff]
        %v2670 = vld [vmem:[%s906 + $0x60] sm:$0xff]
        %v2671 = vld [vmem:[%s906 + $0x68] sm:$0xff]
        %v2672 = vld [vmem:[%s906 + $0x70] sm:$0xff]
        %v2673 = vld [vmem:[%s906 + $0x78] sm:$0xff]
        %v2674 = vld [vmem:[%s906 + $0x80] sm:$0xff]
        %v2675 = vld [vmem:[%s906 + $0x88] sm:$0xff]
        %v2676 = vld [vmem:[%s906 + $0x90] sm:$0xff]
        %v2677 = vld [vmem:[%s906 + $0x98] sm:$0xff]
        %v2678 = vld [vmem:[%s906 + $0xa0] sm:$0xff]
        %v2679 = vld [vmem:[%s906 + $0xa8] sm:$0xff]
        %v2680 = vld [vmem:[%s906 + $0xb0] sm:$0xff]
        %v2681 = vld [vmem:[%s906 + $0xb8] sm:$0xff]
        %v2682 = vld [vmem:[%s906 + $0xc0] sm:$0xff]
        %v2683 = vld [vmem:[%s906 + $0xc8] sm:$0xff]
        %v2684 = vld [vmem:[%s906 + $0xd0] sm:$0xff]
        %v2685 = vld [vmem:[%s906 + $0xd8] sm:$0xff]
        %v2686 = vld [vmem:[%s906 + $0xe0] sm:$0xff]
        %v2687 = vld [vmem:[%s906 + $0xe8] sm:$0xff]
        %v2688 = vld [vmem:[%s906 + $0xf0] sm:$0xff]
        %v2689 = vld [vmem:[%s906 + $0xf8] sm:$0xff]
        %v2690 = vld [vmem:[%s910] sm:$0xff]
        %v2691 = vld [vmem:[%s910 + $0x8] sm:$0xff]
        %v2694 = vlaneseq
        %v2695 = vshrl.u32 %v2694, 7
        %v2696 = vsub.s32 0, %v2695
        %v2697 = vrot.slane %v2690, %v2696
        %v2698 = vlaneseq
        %v2699 = vshrl.u32 %v2698, 7
        %v2700 = vsub.s32 1, %v2699
        %v2701 = vrot.slane %v2690, %v2700
        %v2702 = vlaneseq
        %v2703 = vshrl.u32 %v2702, 7
        %v2704 = vsub.s32 2, %v2703
        %v2705 = vrot.slane %v2690, %v2704
        %v2706 = vlaneseq
        %v2707 = vshrl.u32 %v2706, 7
        %v2708 = vsub.s32 3, %v2707
        %v2709 = vrot.slane %v2690, %v2708
        %v2710 = vlaneseq
        %v2711 = vshrl.u32 %v2710, 7
        %v2712 = vsub.s32 4, %v2711
        %v2713 = vrot.slane %v2690, %v2712
        %v2714 = vlaneseq
        %v2715 = vshrl.u32 %v2714, 7
        %v2716 = vsub.s32 5, %v2715
        %v2717 = vrot.slane %v2690, %v2716
        %v2718 = vlaneseq
        %v2719 = vshrl.u32 %v2718, 7
        %v2720 = vsub.s32 6, %v2719
        %v2721 = vrot.slane %v2690, %v2720
        %v2722 = vlaneseq
        %v2723 = vshrl.u32 %v2722, 7
        %v2724 = vsub.s32 7, %v2723
        %v2725 = vrot.slane %v2690, %v2724
        %v2726 = vlaneseq
        %v2727 = vshrl.u32 %v2726, 7
        %v2728 = vsub.s32 0, %v2727
        %v2729 = vrot.slane %v2691, %v2728
        %v2730 = vlaneseq
        %v2731 = vshrl.u32 %v2730, 7
        %v2732 = vsub.s32 1, %v2731
        %v2733 = vrot.slane %v2691, %v2732
        %v2734 = vlaneseq
        %v2735 = vshrl.u32 %v2734, 7
        %v2736 = vsub.s32 2, %v2735
        %v2737 = vrot.slane %v2691, %v2736
        %v2738 = vlaneseq
        %v2739 = vshrl.u32 %v2738, 7
        %v2740 = vsub.s32 3, %v2739
        %v2741 = vrot.slane %v2691, %v2740
        %v2742 = vlaneseq
        %v2743 = vshrl.u32 %v2742, 7
        %v2744 = vsub.s32 4, %v2743
        %v2745 = vrot.slane %v2691, %v2744
        %v2746 = vlaneseq
        %v2747 = vshrl.u32 %v2746, 7
        %v2748 = vsub.s32 5, %v2747
        %v2749 = vrot.slane %v2691, %v2748
        %v2750 = vlaneseq
        %v2751 = vshrl.u32 %v2750, 7
        %v2752 = vsub.s32 6, %v2751
        %v2753 = vrot.slane %v2691, %v2752
        %v2754 = vlaneseq
        %v2755 = vshrl.u32 %v2754, 7
        %v2756 = vsub.s32 7, %v2755
        %v2757 = vrot.slane %v2691, %v2756
        %v2806 = vunpack.c.l.b16 %v2658
        %v2807 = vunpack.c.h.b16 %v2658
        %v2808 = vunpack.c.l.b16 %v2659
        %v2809 = vunpack.c.h.b16 %v2659
        %v2810 = vunpack.c.l.b16 %v2660
        %v2811 = vunpack.c.h.b16 %v2660
        %v2812 = vunpack.c.l.b16 %v2661
        %v2813 = vunpack.c.h.b16 %v2661
        %v2814 = vunpack.c.l.b16 %v2662
        %v2815 = vunpack.c.h.b16 %v2662
        %v2816 = vunpack.c.l.b16 %v2663
        %v2817 = vunpack.c.h.b16 %v2663
        %v2818 = vunpack.c.l.b16 %v2664
        %v2819 = vunpack.c.h.b16 %v2664
        %v2820 = vunpack.c.l.b16 %v2665
        %v2821 = vunpack.c.h.b16 %v2665
        %v2822 = vunpack.c.l.b16 %v2666
        %v2823 = vunpack.c.h.b16 %v2666
        %v2824 = vunpack.c.l.b16 %v2667
        %v2825 = vunpack.c.h.b16 %v2667
        %v2826 = vunpack.c.l.b16 %v2668
        %v2827 = vunpack.c.h.b16 %v2668
        %v2828 = vunpack.c.l.b16 %v2669
        %v2829 = vunpack.c.h.b16 %v2669
        %v2830 = vunpack.c.l.b16 %v2670
        %v2831 = vunpack.c.h.b16 %v2670
        %v2832 = vunpack.c.l.b16 %v2671
        %v2833 = vunpack.c.h.b16 %v2671
        %v2834 = vunpack.c.l.b16 %v2672
        %v2835 = vunpack.c.h.b16 %v2672
        %v2836 = vunpack.c.l.b16 %v2673
        %v2837 = vunpack.c.h.b16 %v2673
        %v2838 = vunpack.c.l.b16 %v2674
        %v2839 = vunpack.c.h.b16 %v2674
        %v2840 = vunpack.c.l.b16 %v2675
        %v2841 = vunpack.c.h.b16 %v2675
        %v2842 = vunpack.c.l.b16 %v2676
        %v2843 = vunpack.c.h.b16 %v2676
        %v2844 = vunpack.c.l.b16 %v2677
        %v2845 = vunpack.c.h.b16 %v2677
        %v2846 = vunpack.c.l.b16 %v2678
        %v2847 = vunpack.c.h.b16 %v2678
        %v2848 = vunpack.c.l.b16 %v2679
        %v2849 = vunpack.c.h.b16 %v2679
        %v2850 = vunpack.c.l.b16 %v2680
        %v2851 = vunpack.c.h.b16 %v2680
        %v2852 = vunpack.c.l.b16 %v2681
        %v2853 = vunpack.c.h.b16 %v2681
        %v2854 = vunpack.c.l.b16 %v2682
        %v2855 = vunpack.c.h.b16 %v2682
        %v2856 = vunpack.c.l.b16 %v2683
        %v2857 = vunpack.c.h.b16 %v2683
        %v2858 = vunpack.c.l.b16 %v2684
        %v2859 = vunpack.c.h.b16 %v2684
        %v2860 = vunpack.c.l.b16 %v2685
        %v2861 = vunpack.c.h.b16 %v2685
        %v2862 = vunpack.c.l.b16 %v2686
        %v2863 = vunpack.c.h.b16 %v2686
        %v2864 = vunpack.c.l.b16 %v2687
        %v2865 = vunpack.c.h.b16 %v2687
        %v2866 = vunpack.c.l.b16 %v2688
        %v2867 = vunpack.c.h.b16 %v2688
        %v2868 = vunpack.c.l.b16 %v2689
        %v2869 = vunpack.c.h.b16 %v2689
        %v2870 = vpack.c.b16 %v2822, %v2806
        %v2871 = vpack.c.b16 %v2823, %v2807
        %v2872 = vpack.c.b16 %v2824, %v2808
        %v2873 = vpack.c.b16 %v2825, %v2809
        %v2874 = vpack.c.b16 %v2826, %v2810
        %v2875 = vpack.c.b16 %v2827, %v2811
        %v2876 = vpack.c.b16 %v2828, %v2812
        %v2877 = vpack.c.b16 %v2829, %v2813
        %v2878 = vpack.c.b16 %v2830, %v2814
        %v2879 = vpack.c.b16 %v2831, %v2815
        %v2880 = vpack.c.b16 %v2832, %v2816
        %v2881 = vpack.c.b16 %v2833, %v2817
        %v2882 = vpack.c.b16 %v2834, %v2818
        %v2883 = vpack.c.b16 %v2835, %v2819
        %v2884 = vpack.c.b16 %v2836, %v2820
        %v2885 = vpack.c.b16 %v2837, %v2821
        %v2886 = vpack.c.b16 %v2854, %v2838
        %v2887 = vpack.c.b16 %v2855, %v2839
        %v2888 = vpack.c.b16 %v2856, %v2840
        %v2889 = vpack.c.b16 %v2857, %v2841
        %v2890 = vpack.c.b16 %v2858, %v2842
        %v2891 = vpack.c.b16 %v2859, %v2843
        %v2892 = vpack.c.b16 %v2860, %v2844
        %v2893 = vpack.c.b16 %v2861, %v2845
        %v2894 = vpack.c.b16 %v2862, %v2846
        %v2895 = vpack.c.b16 %v2863, %v2847
        %v2896 = vpack.c.b16 %v2864, %v2848
        %v2897 = vpack.c.b16 %v2865, %v2849
        %v2898 = vpack.c.b16 %v2866, %v2850
        %v2899 = vpack.c.b16 %v2867, %v2851
        %v2900 = vpack.c.b16 %v2868, %v2852
        %v2901 = vpack.c.b16 %v2869, %v2853
        %v2935 = vsel %vm1024, %v2657, 0
        %2937 = vmatprep.subr.bf16.mxu0 %v2871
        %2938 = vmatpush1.bf16.msra.mxu0 %v2870
        %2939 = vmatprep.subr.bf16.mxu0 %v2887
        %2940 = vmatpush1.bf16.msra.mxu0 %v2886
        %2941 = vmatprep.subr.bf16.mxu0 0
        %2942 = vmatpush1.bf16.msra.mxu0 0
        %2943 = vmatprep.subr.bf16.mxu0 0
        %2944 = vmatpush1.bf16.msra.mxu0 0
        %2945 = vmatprep.subr.bf16.mxu0 0
        %2946 = vmatpush1.bf16.msra.mxu0 0
        %2947 = vmatprep.subr.bf16.mxu0 0
        %2948 = vmatpush1.bf16.msra.mxu0 0
        %2949 = vmatprep.subr.bf16.mxu0 0
        %2950 = vmatpush1.bf16.msra.mxu0 0
        %2951 = vmatprep.subr.bf16.mxu0 0
        %2952 = vmatpush1.bf16.msra.mxu0 0
        %2953 = vmatprep.subr.bf16.mxu0 0
        %2954 = vmatpush1.bf16.msra.mxu0 0
        %2955 = vmatprep.subr.bf16.mxu0 0
        %2956 = vmatpush1.bf16.msra.mxu0 0
        %2957 = vmatprep.subr.bf16.mxu0 0
        %2958 = vmatpush1.bf16.msra.mxu0 0
        %2959 = vmatprep.subr.bf16.mxu0 0
        %2960 = vmatpush1.bf16.msra.mxu0 0
        %2961 = vmatprep.subr.bf16.mxu0 0
        %2962 = vmatpush1.bf16.msra.mxu0 0
        %2963 = vmatprep.subr.bf16.mxu0 0
        %2964 = vmatpush1.bf16.msra.mxu0 0
        %2965 = vmatprep.subr.bf16.mxu0 0
        %2966 = vmatpush1.bf16.msra.mxu0 0
        %2967 = vmatprep.subr.bf16.mxu0 0
        %2968 = vmatpush1.bf16.msra.mxu0 0
        %2969 = vmatprep.mubr.bf16.mxu0 0
        %2970 = vmatmul.mubr.bf16.gmra.mrb[0].mxu0 %v2935
        %v2971 = vpop.f32.mrb[0].mxu0
        %v2972 = vadd.f32 %v2697, %v2971
        %v2973 = vpop.f32.mrb[0].mxu0
        %v2974 = vadd.f32 %v2701, %v2973
        %v2975 = vpop.f32.mrb[0].mxu0
        %v2976 = vadd.f32 %v2697, %v2975
        %v2977 = vpop.f32.mrb[0].mxu0
        %v2978 = vadd.f32 %v2701, %v2977
        %2979 = vdwg.mxu0
        %2980 = vmatprep.subr.bf16.mxu0 %v2873
        %2981 = vmatpush1.bf16.msra.mxu0 %v2872
        %2982 = vmatprep.subr.bf16.mxu0 %v2889
        %2983 = vmatpush1.bf16.msra.mxu0 %v2888
        %2984 = vmatprep.subr.bf16.mxu0 0
        %2985 = vmatpush1.bf16.msra.mxu0 0
        %2986 = vmatprep.subr.bf16.mxu0 0
        %2987 = vmatpush1.bf16.msra.mxu0 0
        %2988 = vmatprep.subr.bf16.mxu0 0
        %2989 = vmatpush1.bf16.msra.mxu0 0
        %2990 = vmatprep.subr.bf16.mxu0 0
        %2991 = vmatpush1.bf16.msra.mxu0 0
        %2992 = vmatprep.subr.bf16.mxu0 0
        %2993 = vmatpush1.bf16.msra.mxu0 0
        %2994 = vmatprep.subr.bf16.mxu0 0
        %2995 = vmatpush1.bf16.msra.mxu0 0
        %2996 = vmatprep.subr.bf16.mxu0 0
        %2997 = vmatpush1.bf16.msra.mxu0 0
        %2998 = vmatprep.subr.bf16.mxu0 0
        %2999 = vmatpush1.bf16.msra.mxu0 0
        %3000 = vmatprep.subr.bf16.mxu0 0
        %3001 = vmatpush1.bf16.msra.mxu0 0
        %3002 = vmatprep.subr.bf16.mxu0 0
        %3003 = vmatpush1.bf16.msra.mxu0 0
        %3004 = vmatprep.subr.bf16.mxu0 0
        %3005 = vmatpush1.bf16.msra.mxu0 0
        %3006 = vmatprep.subr.bf16.mxu0 0
        %3007 = vmatpush1.bf16.msra.mxu0 0
        %3008 = vmatprep.subr.bf16.mxu0 0
        %3009 = vmatpush1.bf16.msra.mxu0 0
        %3010 = vmatprep.subr.bf16.mxu0 0
        %3011 = vmatpush1.bf16.msra.mxu0 0
        %3012 = vmatprep.mubr.bf16.mxu0 0
        %3013 = vmatmul.mubr.bf16.gmra.mrb[0].mxu0 %v2935
        %v3014 = vpop.f32.mrb[0].mxu0
        %v3015 = vadd.f32 %v2705, %v3014
        %v3016 = vpop.f32.mrb[0].mxu0
        %v3017 = vadd.f32 %v2709, %v3016
        %v3018 = vpop.f32.mrb[0].mxu0
        %v3019 = vadd.f32 %v2705, %v3018
        %v3020 = vpop.f32.mrb[0].mxu0
        %v3021 = vadd.f32 %v2709, %v3020
        %3022 = vdwg.mxu0
        %3023 = vmatprep.subr.bf16.mxu0 %v2875
        %3024 = vmatpush1.bf16.msra.mxu0 %v2874
        %3025 = vmatprep.subr.bf16.mxu0 %v2891
        %3026 = vmatpush1.bf16.msra.mxu0 %v2890
        %3027 = vmatprep.subr.bf16.mxu0 0
        %3028 = vmatpush1.bf16.msra.mxu0 0
        %3029 = vmatprep.subr.bf16.mxu0 0
        %3030 = vmatpush1.bf16.msra.mxu0 0
        %3031 = vmatprep.subr.bf16.mxu0 0
        %3032 = vmatpush1.bf16.msra.mxu0 0
        %3033 = vmatprep.subr.bf16.mxu0 0
        %3034 = vmatpush1.bf16.msra.mxu0 0
        %3035 = vmatprep.subr.bf16.mxu0 0
        %3036 = vmatpush1.bf16.msra.mxu0 0
        %3037 = vmatprep.subr.bf16.mxu0 0
        %3038 = vmatpush1.bf16.msra.mxu0 0
        %3039 = vmatprep.subr.bf16.mxu0 0
        %3040 = vmatpush1.bf16.msra.mxu0 0
        %3041 = vmatprep.subr.bf16.mxu0 0
        %3042 = vmatpush1.bf16.msra.mxu0 0
        %3043 = vmatprep.subr.bf16.mxu0 0
        %3044 = vmatpush1.bf16.msra.mxu0 0
        %3045 = vmatprep.subr.bf16.mxu0 0
        %3046 = vmatpush1.bf16.msra.mxu0 0
        %3047 = vmatprep.subr.bf16.mxu0 0
        %3048 = vmatpush1.bf16.msra.mxu0 0
        %3049 = vmatprep.subr.bf16.mxu0 0
        %3050 = vmatpush1.bf16.msra.mxu0 0
        %3051 = vmatprep.subr.bf16.mxu0 0
        %3052 = vmatpush1.bf16.msra.mxu0 0
        %3053 = vmatprep.subr.bf16.mxu0 0
        %3054 = vmatpush1.bf16.msra.mxu0 0
        %3055 = vmatprep.mubr.bf16.mxu0 0
        %3056 = vmatmul.mubr.bf16.gmra.mrb[0].mxu0 %v2935
        %v3057 = vpop.f32.mrb[0].mxu0
        %v3058 = vadd.f32 %v2713, %v3057
        %v3059 = vpop.f32.mrb[0].mxu0
        %v3060 = vadd.f32 %v2717, %v3059
        %v3061 = vpop.f32.mrb[0].mxu0
        %v3062 = vadd.f32 %v2713, %v3061
        %v3063 = vpop.f32.mrb[0].mxu0
        %v3064 = vadd.f32 %v2717, %v3063
        %3065 = vdwg.mxu0
        %3066 = vmatprep.subr.bf16.mxu0 %v2877
        %3067 = vmatpush1.bf16.msra.mxu0 %v2876
        %3068 = vmatprep.subr.bf16.mxu0 %v2893
        %3069 = vmatpush1.bf16.msra.mxu0 %v2892
        %3070 = vmatprep.subr.bf16.mxu0 0
        %3071 = vmatpush1.bf16.msra.mxu0 0
        %3072 = vmatprep.subr.bf16.mxu0 0
        %3073 = vmatpush1.bf16.msra.mxu0 0
        %3074 = vmatprep.subr.bf16.mxu0 0
        %3075 = vmatpush1.bf16.msra.mxu0 0
        %3076 = vmatprep.subr.bf16.mxu0 0
        %3077 = vmatpush1.bf16.msra.mxu0 0
        %3078 = vmatprep.subr.bf16.mxu0 0
        %3079 = vmatpush1.bf16.msra.mxu0 0
        %3080 = vmatprep.subr.bf16.mxu0 0
        %3081 = vmatpush1.bf16.msra.mxu0 0
        %3082 = vmatprep.subr.bf16.mxu0 0
        %3083 = vmatpush1.bf16.msra.mxu0 0
        %3084 = vmatprep.subr.bf16.mxu0 0
        %3085 = vmatpush1.bf16.msra.mxu0 0
        %3086 = vmatprep.subr.bf16.mxu0 0
        %3087 = vmatpush1.bf16.msra.mxu0 0
        %3088 = vmatprep.subr.bf16.mxu0 0
        %3089 = vmatpush1.bf16.msra.mxu0 0
        %3090 = vmatprep.subr.bf16.mxu0 0
        %3091 = vmatpush1.bf16.msra.mxu0 0
        %3092 = vmatprep.subr.bf16.mxu0 0
        %3093 = vmatpush1.bf16.msra.mxu0 0
        %3094 = vmatprep.subr.bf16.mxu0 0
        %3095 = vmatpush1.bf16.msra.mxu0 0
        %3096 = vmatprep.subr.bf16.mxu0 0
        %3097 = vmatpush1.bf16.msra.mxu0 0
        %3098 = vmatprep.mubr.bf16.mxu0 0
        %3099 = vmatmul.mubr.bf16.gmra.mrb[0].mxu0 %v2935
        %v3100 = vpop.f32.mrb[0].mxu0
        %v3101 = vadd.f32 %v2721, %v3100
        %v3102 = vpop.f32.mrb[0].mxu0
        %v3103 = vadd.f32 %v2725, %v3102
        %v3104 = vpop.f32.mrb[0].mxu0
        %v3105 = vadd.f32 %v2721, %v3104
        %v3106 = vpop.f32.mrb[0].mxu0
        %v3107 = vadd.f32 %v2725, %v3106
        %3108 = vdwg.mxu0
        %3109 = vmatprep.subr.bf16.mxu0 %v2879
        %3110 = vmatpush1.bf16.msra.mxu0 %v2878
        %3111 = vmatprep.subr.bf16.mxu0 %v2895
        %3112 = vmatpush1.bf16.msra.mxu0 %v2894
        %3113 = vmatprep.subr.bf16.mxu0 0
        %3114 = vmatpush1.bf16.msra.mxu0 0
        %3115 = vmatprep.subr.bf16.mxu0 0
        %3116 = vmatpush1.bf16.msra.mxu0 0
        %3117 = vmatprep.subr.bf16.mxu0 0
        %3118 = vmatpush1.bf16.msra.mxu0 0
        %3119 = vmatprep.subr.bf16.mxu0 0
        %3120 = vmatpush1.bf16.msra.mxu0 0
        %3121 = vmatprep.subr.bf16.mxu0 0
        %3122 = vmatpush1.bf16.msra.mxu0 0
        %3123 = vmatprep.subr.bf16.mxu0 0
        %3124 = vmatpush1.bf16.msra.mxu0 0
        %3125 = vmatprep.subr.bf16.mxu0 0
        %3126 = vmatpush1.bf16.msra.mxu0 0
        %3127 = vmatprep.subr.bf16.mxu0 0
        %3128 = vmatpush1.bf16.msra.mxu0 0
        %3129 = vmatprep.subr.bf16.mxu0 0
        %3130 = vmatpush1.bf16.msra.mxu0 0
        %3131 = vmatprep.subr.bf16.mxu0 0
        %3132 = vmatpush1.bf16.msra.mxu0 0
        %3133 = vmatprep.subr.bf16.mxu0 0
        %3134 = vmatpush1.bf16.msra.mxu0 0
        %3135 = vmatprep.subr.bf16.mxu0 0
        %3136 = vmatpush1.bf16.msra.mxu0 0
        %3137 = vmatprep.subr.bf16.mxu0 0
        %3138 = vmatpush1.bf16.msra.mxu0 0
        %3139 = vmatprep.subr.bf16.mxu0 0
        %3140 = vmatpush1.bf16.msra.mxu0 0
        %3141 = vmatprep.mubr.bf16.mxu0 0
        %3142 = vmatmul.mubr.bf16.gmra.mrb[0].mxu0 %v2935
        %v3143 = vpop.f32.mrb[0].mxu0
        %v3144 = vadd.f32 %v2729, %v3143
        %v3145 = vpop.f32.mrb[0].mxu0
        %v3146 = vadd.f32 %v2733, %v3145
        %v3147 = vpop.f32.mrb[0].mxu0
        %v3148 = vadd.f32 %v2729, %v3147
        %v3149 = vpop.f32.mrb[0].mxu0
        %v3150 = vadd.f32 %v2733, %v3149
        %3151 = vdwg.mxu0
        %3152 = vmatprep.subr.bf16.mxu0 %v2881
        %3153 = vmatpush1.bf16.msra.mxu0 %v2880
        %3154 = vmatprep.subr.bf16.mxu0 %v2897
        %3155 = vmatpush1.bf16.msra.mxu0 %v2896
        %3156 = vmatprep.subr.bf16.mxu0 0
        %3157 = vmatpush1.bf16.msra.mxu0 0
        %3158 = vmatprep.subr.bf16.mxu0 0
        %3159 = vmatpush1.bf16.msra.mxu0 0
        %3160 = vmatprep.subr.bf16.mxu0 0
        %3161 = vmatpush1.bf16.msra.mxu0 0
        %3162 = vmatprep.subr.bf16.mxu0 0
        %3163 = vmatpush1.bf16.msra.mxu0 0
        %3164 = vmatprep.subr.bf16.mxu0 0
        %3165 = vmatpush1.bf16.msra.mxu0 0
        %3166 = vmatprep.subr.bf16.mxu0 0
        %3167 = vmatpush1.bf16.msra.mxu0 0
        %3168 = vmatprep.subr.bf16.mxu0 0
        %3169 = vmatpush1.bf16.msra.mxu0 0
        %3170 = vmatprep.subr.bf16.mxu0 0
        %3171 = vmatpush1.bf16.msra.mxu0 0
        %3172 = vmatprep.subr.bf16.mxu0 0
        %3173 = vmatpush1.bf16.msra.mxu0 0
        %3174 = vmatprep.subr.bf16.mxu0 0
        %3175 = vmatpush1.bf16.msra.mxu0 0
        %3176 = vmatprep.subr.bf16.mxu0 0
        %3177 = vmatpush1.bf16.msra.mxu0 0
        %3178 = vmatprep.subr.bf16.mxu0 0
        %3179 = vmatpush1.bf16.msra.mxu0 0
        %3180 = vmatprep.subr.bf16.mxu0 0
        %3181 = vmatpush1.bf16.msra.mxu0 0
        %3182 = vmatprep.subr.bf16.mxu0 0
        %3183 = vmatpush1.bf16.msra.mxu0 0
        %3184 = vmatprep.mubr.bf16.mxu0 0
        %3185 = vmatmul.mubr.bf16.gmra.mrb[0].mxu0 %v2935
        %v3186 = vpop.f32.mrb[0].mxu0
        %v3187 = vadd.f32 %v2737, %v3186
        %v3188 = vpop.f32.mrb[0].mxu0
        %v3189 = vadd.f32 %v2741, %v3188
        %v3190 = vpop.f32.mrb[0].mxu0
        %v3191 = vadd.f32 %v2737, %v3190
        %v3192 = vpop.f32.mrb[0].mxu0
        %v3193 = vadd.f32 %v2741, %v3192
        %3194 = vdwg.mxu0
        %3195 = vmatprep.subr.bf16.mxu0 %v2883
        %3196 = vmatpush1.bf16.msra.mxu0 %v2882
        %3197 = vmatprep.subr.bf16.mxu0 %v2899
        %3198 = vmatpush1.bf16.msra.mxu0 %v2898
        %3199 = vmatprep.subr.bf16.mxu0 0
        %3200 = vmatpush1.bf16.msra.mxu0 0
        %3201 = vmatprep.subr.bf16.mxu0 0
        %3202 = vmatpush1.bf16.msra.mxu0 0
        %3203 = vmatprep.subr.bf16.mxu0 0
        %3204 = vmatpush1.bf16.msra.mxu0 0
        %3205 = vmatprep.subr.bf16.mxu0 0
        %3206 = vmatpush1.bf16.msra.mxu0 0
        %3207 = vmatprep.subr.bf16.mxu0 0
        %3208 = vmatpush1.bf16.msra.mxu0 0
        %3209 = vmatprep.subr.bf16.mxu0 0
        %3210 = vmatpush1.bf16.msra.mxu0 0
        %3211 = vmatprep.subr.bf16.mxu0 0
        %3212 = vmatpush1.bf16.msra.mxu0 0
        %3213 = vmatprep.subr.bf16.mxu0 0
        %3214 = vmatpush1.bf16.msra.mxu0 0
        %3215 = vmatprep.subr.bf16.mxu0 0
        %3216 = vmatpush1.bf16.msra.mxu0 0
        %3217 = vmatprep.subr.bf16.mxu0 0
        %3218 = vmatpush1.bf16.msra.mxu0 0
        %3219 = vmatprep.subr.bf16.mxu0 0
        %3220 = vmatpush1.bf16.msra.mxu0 0
        %3221 = vmatprep.subr.bf16.mxu0 0
        %3222 = vmatpush1.bf16.msra.mxu0 0
        %3223 = vmatprep.subr.bf16.mxu0 0
        %3224 = vmatpush1.bf16.msra.mxu0 0
        %3225 = vmatprep.subr.bf16.mxu0 0
        %3226 = vmatpush1.bf16.msra.mxu0 0
        %3227 = vmatprep.mubr.bf16.mxu0 0
        %3228 = vmatmul.mubr.bf16.gmra.mrb[0].mxu0 %v2935
        %v3229 = vpop.f32.mrb[0].mxu0
        %v3230 = vadd.f32 %v2745, %v3229
        %v3231 = vpop.f32.mrb[0].mxu0
        %v3232 = vadd.f32 %v2749, %v3231
        %v3233 = vpop.f32.mrb[0].mxu0
        %v3234 = vadd.f32 %v2745, %v3233
        %v3235 = vpop.f32.mrb[0].mxu0
        %v3236 = vadd.f32 %v2749, %v3235
        %3237 = vdwg.mxu0
        %3238 = vmatprep.subr.bf16.mxu0 %v2885
        %3239 = vmatpush1.bf16.msra.mxu0 %v2884
        %3240 = vmatprep.subr.bf16.mxu0 %v2901
        %3241 = vmatpush1.bf16.msra.mxu0 %v2900
        %3242 = vmatprep.subr.bf16.mxu0 0
        %3243 = vmatpush1.bf16.msra.mxu0 0
        %3244 = vmatprep.subr.bf16.mxu0 0
        %3245 = vmatpush1.bf16.msra.mxu0 0
        %3246 = vmatprep.subr.bf16.mxu0 0
        %3247 = vmatpush1.bf16.msra.mxu0 0
        %3248 = vmatprep.subr.bf16.mxu0 0
        %3249 = vmatpush1.bf16.msra.mxu0 0
        %3250 = vmatprep.subr.bf16.mxu0 0
        %3251 = vmatpush1.bf16.msra.mxu0 0
        %3252 = vmatprep.subr.bf16.mxu0 0
        %3253 = vmatpush1.bf16.msra.mxu0 0
        %3254 = vmatprep.subr.bf16.mxu0 0
        %3255 = vmatpush1.bf16.msra.mxu0 0
        %3256 = vmatprep.subr.bf16.mxu0 0
        %3257 = vmatpush1.bf16.msra.mxu0 0
        %3258 = vmatprep.subr.bf16.mxu0 0
        %3259 = vmatpush1.bf16.msra.mxu0 0
        %3260 = vmatprep.subr.bf16.mxu0 0
        %3261 = vmatpush1.bf16.msra.mxu0 0
        %3262 = vmatprep.subr.bf16.mxu0 0
        %3263 = vmatpush1.bf16.msra.mxu0 0
        %3264 = vmatprep.subr.bf16.mxu0 0
        %3265 = vmatpush1.bf16.msra.mxu0 0
        %3266 = vmatprep.subr.bf16.mxu0 0
        %3267 = vmatpush1.bf16.msra.mxu0 0
        %3268 = vmatprep.subr.bf16.mxu0 0
        %3269 = vmatpush1.bf16.msra.mxu0 0
        %3270 = vmatprep.mubr.bf16.mxu0 0
        %3271 = vmatmul.mubr.bf16.gmra.mrb[0].mxu0 %v2935
        %v3272 = vpop.f32.mrb[0].mxu0
        %v3273 = vadd.f32 %v2753, %v3272
        %v3274 = vpop.f32.mrb[0].mxu0
        %v3275 = vadd.f32 %v2757, %v3274
        %v3276 = vpop.f32.mrb[0].mxu0
        %v3277 = vadd.f32 %v2753, %v3276
        %v3278 = vpop.f32.mrb[0].mxu0
        %v3279 = vadd.f32 %v2757, %v3278
        %3280 = vdwg.mxu0
        %v3281 = vmax.f32 %v2972, 0.0
        %v3282 = vmax.f32 %v2974, 0.0
        %v3283 = vmax.f32 %v3015, 0.0
        %v3284 = vmax.f32 %v3017, 0.0
        %v3285 = vmax.f32 %v3058, 0.0
        %v3286 = vmax.f32 %v3060, 0.0
        %v3287 = vmax.f32 %v3101, 0.0
        %v3288 = vmax.f32 %v3103, 0.0
        %v3289 = vmax.f32 %v3144, 0.0
        %v3290 = vmax.f32 %v3146, 0.0
        %v3291 = vmax.f32 %v3187, 0.0
        %v3292 = vmax.f32 %v3189, 0.0
        %v3293 = vmax.f32 %v3230, 0.0
        %v3294 = vmax.f32 %v3232, 0.0
        %v3295 = vmax.f32 %v3273, 0.0
        %v3296 = vmax.f32 %v3275, 0.0
        %v3297 = vmax.f32 %v2976, 0.0
        %v3298 = vmax.f32 %v2978, 0.0
        %v3299 = vmax.f32 %v3019, 0.0
        %v3300 = vmax.f32 %v3021, 0.0
        %v3301 = vmax.f32 %v3062, 0.0
        %v3302 = vmax.f32 %v3064, 0.0
        %v3303 = vmax.f32 %v3105, 0.0
        %v3304 = vmax.f32 %v3107, 0.0
        %v3305 = vmax.f32 %v3148, 0.0
        %v3306 = vmax.f32 %v3150, 0.0
        %v3307 = vmax.f32 %v3191, 0.0
        %v3308 = vmax.f32 %v3193, 0.0
        %v3309 = vmax.f32 %v3234, 0.0
        %v3310 = vmax.f32 %v3236, 0.0
        %v3311 = vmax.f32 %v3277, 0.0
        %v3312 = vmax.f32 %v3279, 0.0
        %v3313 = vpack.c.bf16 %v3297, %v3281
        %v3314 = vpack.c.bf16 %v3298, %v3282
        %v3315 = vpack.c.bf16 %v3299, %v3283
        %v3316 = vpack.c.bf16 %v3300, %v3284
        %v3317 = vpack.c.bf16 %v3301, %v3285
        %v3318 = vpack.c.bf16 %v3302, %v3286
        %v3319 = vpack.c.bf16 %v3303, %v3287
        %v3320 = vpack.c.bf16 %v3304, %v3288
        %v3321 = vpack.c.bf16 %v3305, %v3289
        %v3322 = vpack.c.bf16 %v3306, %v3290
        %v3323 = vpack.c.bf16 %v3307, %v3291
        %v3324 = vpack.c.bf16 %v3308, %v3292
        %v3325 = vpack.c.bf16 %v3309, %v3293
        %v3326 = vpack.c.bf16 %v3310, %v3294
        %v3327 = vpack.c.bf16 %v3311, %v3295
        %v3328 = vpack.c.bf16 %v3312, %v3296
        %v3329 = vld [vmem:[%s915] sm:$0xf]
        %v3330 = vld [vmem:[%s915 + $0x4] sm:$0xf]
        %v3331 = vld [vmem:[%s915 + $0x8] sm:$0xf]
        %v3332 = vld [vmem:[%s915 + $0xc] sm:$0xf]
        %v3333 = vld [vmem:[%s915 + $0x10] sm:$0xf]
        %v3334 = vld [vmem:[%s915 + $0x14] sm:$0xf]
        %v3335 = vld [vmem:[%s915 + $0x18] sm:$0xf]
        %v3336 = vld [vmem:[%s915 + $0x1c] sm:$0xf]
        %v3337 = vld [vmem:[%s915 + $0x20] sm:$0xf]
        %v3338 = vld [vmem:[%s915 + $0x24] sm:$0xf]
        %v3339 = vld [vmem:[%s915 + $0x28] sm:$0xf]
        %v3340 = vld [vmem:[%s915 + $0x2c] sm:$0xf]
        %v3341 = vld [vmem:[%s915 + $0x30] sm:$0xf]
        %v3342 = vld [vmem:[%s915 + $0x34] sm:$0xf]
        %v3343 = vld [vmem:[%s915 + $0x38] sm:$0xf]
        %v3344 = vld [vmem:[%s915 + $0x3c] sm:$0xf]
        %v3345 = vld [vmem:[%s915 + $0x40] sm:$0xf]
        %v3346 = vld [vmem:[%s915 + $0x44] sm:$0xf]
        %v3347 = vld [vmem:[%s915 + $0x48] sm:$0xf]
        %v3348 = vld [vmem:[%s915 + $0x4c] sm:$0xf]
        %v3349 = vld [vmem:[%s915 + $0x50] sm:$0xf]
        %v3350 = vld [vmem:[%s915 + $0x54] sm:$0xf]
        %v3351 = vld [vmem:[%s915 + $0x58] sm:$0xf]
        %v3352 = vld [vmem:[%s915 + $0x5c] sm:$0xf]
        %v3353 = vld [vmem:[%s915 + $0x60] sm:$0xf]
        %v3354 = vld [vmem:[%s915 + $0x64] sm:$0xf]
        %v3355 = vld [vmem:[%s915 + $0x68] sm:$0xf]
        %v3356 = vld [vmem:[%s915 + $0x6c] sm:$0xf]
        %v3357 = vld [vmem:[%s915 + $0x70] sm:$0xf]
        %v3358 = vld [vmem:[%s915 + $0x74] sm:$0xf]
        %v3359 = vld [vmem:[%s915 + $0x78] sm:$0xf]
        %v3360 = vld [vmem:[%s915 + $0x7c] sm:$0xf]
        %v3361 = vld [vmem:[%s915 + $0x80] sm:$0xf]
        %v3362 = vld [vmem:[%s915 + $0x84] sm:$0xf]
        %v3363 = vld [vmem:[%s915 + $0x88] sm:$0xf]
        %v3364 = vld [vmem:[%s915 + $0x8c] sm:$0xf]
        %v3365 = vld [vmem:[%s915 + $0x90] sm:$0xf]
        %v3366 = vld [vmem:[%s915 + $0x94] sm:$0xf]
        %v3367 = vld [vmem:[%s915 + $0x98] sm:$0xf]
        %v3368 = vld [vmem:[%s915 + $0x9c] sm:$0xf]
        %v3369 = vld [vmem:[%s915 + $0xa0] sm:$0xf]
        %v3370 = vld [vmem:[%s915 + $0xa4] sm:$0xf]
        %v3371 = vld [vmem:[%s915 + $0xa8] sm:$0xf]
        %v3372 = vld [vmem:[%s915 + $0xac] sm:$0xf]
        %v3373 = vld [vmem:[%s915 + $0xb0] sm:$0xf]
        %v3374 = vld [vmem:[%s915 + $0xb4] sm:$0xf]
        %v3375 = vld [vmem:[%s915 + $0xb8] sm:$0xf]
        %v3376 = vld [vmem:[%s915 + $0xbc] sm:$0xf]
        %v3377 = vld [vmem:[%s915 + $0xc0] sm:$0xf]
        %v3378 = vld [vmem:[%s915 + $0xc4] sm:$0xf]
        %v3379 = vld [vmem:[%s915 + $0xc8] sm:$0xf]
        %v3380 = vld [vmem:[%s915 + $0xcc] sm:$0xf]
        %v3381 = vld [vmem:[%s915 + $0xd0] sm:$0xf]
        %v3382 = vld [vmem:[%s915 + $0xd4] sm:$0xf]
        %v3383 = vld [vmem:[%s915 + $0xd8] sm:$0xf]
        %v3384 = vld [vmem:[%s915 + $0xdc] sm:$0xf]
        %v3385 = vld [vmem:[%s915 + $0xe0] sm:$0xf]
        %v3386 = vld [vmem:[%s915 + $0xe4] sm:$0xf]
        %v3387 = vld [vmem:[%s915 + $0xe8] sm:$0xf]
        %v3388 = vld [vmem:[%s915 + $0xec] sm:$0xf]
        %v3389 = vld [vmem:[%s915 + $0xf0] sm:$0xf]
        %v3390 = vld [vmem:[%s915 + $0xf4] sm:$0xf]
        %v3391 = vld [vmem:[%s915 + $0xf8] sm:$0xf]
        %v3392 = vld [vmem:[%s915 + $0xfc] sm:$0xf]
        %v3393 = vld [vmem:[%s915 + $0x100] sm:$0xf]
        %v3394 = vld [vmem:[%s915 + $0x104] sm:$0xf]
        %v3395 = vld [vmem:[%s915 + $0x108] sm:$0xf]
        %v3396 = vld [vmem:[%s915 + $0x10c] sm:$0xf]
        %v3397 = vld [vmem:[%s915 + $0x110] sm:$0xf]
        %v3398 = vld [vmem:[%s915 + $0x114] sm:$0xf]
        %v3399 = vld [vmem:[%s915 + $0x118] sm:$0xf]
        %v3400 = vld [vmem:[%s915 + $0x11c] sm:$0xf]
        %v3401 = vld [vmem:[%s915 + $0x120] sm:$0xf]
        %v3402 = vld [vmem:[%s915 + $0x124] sm:$0xf]
        %v3403 = vld [vmem:[%s915 + $0x128] sm:$0xf]
        %v3404 = vld [vmem:[%s915 + $0x12c] sm:$0xf]
        %v3405 = vld [vmem:[%s915 + $0x130] sm:$0xf]
        %v3406 = vld [vmem:[%s915 + $0x134] sm:$0xf]
        %v3407 = vld [vmem:[%s915 + $0x138] sm:$0xf]
        %v3408 = vld [vmem:[%s915 + $0x13c] sm:$0xf]
        %v3409 = vld [vmem:[%s915 + $0x140] sm:$0xf]
        %v3410 = vld [vmem:[%s915 + $0x144] sm:$0xf]
        %v3411 = vld [vmem:[%s915 + $0x148] sm:$0xf]
        %v3412 = vld [vmem:[%s915 + $0x14c] sm:$0xf]
        %v3413 = vld [vmem:[%s915 + $0x150] sm:$0xf]
        %v3414 = vld [vmem:[%s915 + $0x154] sm:$0xf]
        %v3415 = vld [vmem:[%s915 + $0x158] sm:$0xf]
        %v3416 = vld [vmem:[%s915 + $0x15c] sm:$0xf]
        %v3417 = vld [vmem:[%s915 + $0x160] sm:$0xf]
        %v3418 = vld [vmem:[%s915 + $0x164] sm:$0xf]
        %v3419 = vld [vmem:[%s915 + $0x168] sm:$0xf]
        %v3420 = vld [vmem:[%s915 + $0x16c] sm:$0xf]
        %v3421 = vld [vmem:[%s915 + $0x170] sm:$0xf]
        %v3422 = vld [vmem:[%s915 + $0x174] sm:$0xf]
        %v3423 = vld [vmem:[%s915 + $0x178] sm:$0xf]
        %v3424 = vld [vmem:[%s915 + $0x17c] sm:$0xf]
        %v3425 = vld [vmem:[%s915 + $0x180] sm:$0xf]
        %v3426 = vld [vmem:[%s915 + $0x184] sm:$0xf]
        %v3427 = vld [vmem:[%s915 + $0x188] sm:$0xf]
        %v3428 = vld [vmem:[%s915 + $0x18c] sm:$0xf]
        %v3429 = vld [vmem:[%s915 + $0x190] sm:$0xf]
        %v3430 = vld [vmem:[%s915 + $0x194] sm:$0xf]
        %v3431 = vld [vmem:[%s915 + $0x198] sm:$0xf]
        %v3432 = vld [vmem:[%s915 + $0x19c] sm:$0xf]
        %v3433 = vld [vmem:[%s915 + $0x1a0] sm:$0xf]
        %v3434 = vld [vmem:[%s915 + $0x1a4] sm:$0xf]
        %v3435 = vld [vmem:[%s915 + $0x1a8] sm:$0xf]
        %v3436 = vld [vmem:[%s915 + $0x1ac] sm:$0xf]
        %v3437 = vld [vmem:[%s915 + $0x1b0] sm:$0xf]
        %v3438 = vld [vmem:[%s915 + $0x1b4] sm:$0xf]
        %v3439 = vld [vmem:[%s915 + $0x1b8] sm:$0xf]
        %v3440 = vld [vmem:[%s915 + $0x1bc] sm:$0xf]
        %v3441 = vld [vmem:[%s915 + $0x1c0] sm:$0xf]
        %v3442 = vld [vmem:[%s915 + $0x1c4] sm:$0xf]
        %v3443 = vld [vmem:[%s915 + $0x1c8] sm:$0xf]
        %v3444 = vld [vmem:[%s915 + $0x1cc] sm:$0xf]
        %v3445 = vld [vmem:[%s915 + $0x1d0] sm:$0xf]
        %v3446 = vld [vmem:[%s915 + $0x1d4] sm:$0xf]
        %v3447 = vld [vmem:[%s915 + $0x1d8] sm:$0xf]
        %v3448 = vld [vmem:[%s915 + $0x1dc] sm:$0xf]
        %v3449 = vld [vmem:[%s915 + $0x1e0] sm:$0xf]
        %v3450 = vld [vmem:[%s915 + $0x1e4] sm:$0xf]
        %v3451 = vld [vmem:[%s915 + $0x1e8] sm:$0xf]
        %v3452 = vld [vmem:[%s915 + $0x1ec] sm:$0xf]
        %v3453 = vld [vmem:[%s915 + $0x1f0] sm:$0xf]
        %v3454 = vld [vmem:[%s915 + $0x1f4] sm:$0xf]
        %v3455 = vld [vmem:[%s915 + $0x1f8] sm:$0xf]
        %v3456 = vld [vmem:[%s915 + $0x1fc] sm:$0xf]
        %v3457 = vld [vmem:[%s915 + $0x200] sm:$0xf]
        %v3458 = vld [vmem:[%s915 + $0x204] sm:$0xf]
        %v3459 = vld [vmem:[%s915 + $0x208] sm:$0xf]
        %v3460 = vld [vmem:[%s915 + $0x20c] sm:$0xf]
        %v3461 = vld [vmem:[%s915 + $0x210] sm:$0xf]
        %v3462 = vld [vmem:[%s915 + $0x214] sm:$0xf]
        %v3463 = vld [vmem:[%s915 + $0x218] sm:$0xf]
        %v3464 = vld [vmem:[%s915 + $0x21c] sm:$0xf]
        %v3465 = vld [vmem:[%s915 + $0x220] sm:$0xf]
        %v3466 = vld [vmem:[%s915 + $0x224] sm:$0xf]
        %v3467 = vld [vmem:[%s915 + $0x228] sm:$0xf]
        %v3468 = vld [vmem:[%s915 + $0x22c] sm:$0xf]
        %v3469 = vld [vmem:[%s915 + $0x230] sm:$0xf]
        %v3470 = vld [vmem:[%s915 + $0x234] sm:$0xf]
        %v3471 = vld [vmem:[%s915 + $0x238] sm:$0xf]
        %v3472 = vld [vmem:[%s915 + $0x23c] sm:$0xf]
        %v3473 = vld [vmem:[%s915 + $0x240] sm:$0xf]
        %v3474 = vld [vmem:[%s915 + $0x244] sm:$0xf]
        %v3475 = vld [vmem:[%s915 + $0x248] sm:$0xf]
        %v3476 = vld [vmem:[%s915 + $0x24c] sm:$0xf]
        %v3477 = vld [vmem:[%s915 + $0x250] sm:$0xf]
        %v3478 = vld [vmem:[%s915 + $0x254] sm:$0xf]
        %v3479 = vld [vmem:[%s915 + $0x258] sm:$0xf]
        %v3480 = vld [vmem:[%s915 + $0x25c] sm:$0xf]
        %v3481 = vld [vmem:[%s915 + $0x260] sm:$0xf]
        %v3482 = vld [vmem:[%s915 + $0x264] sm:$0xf]
        %v3483 = vld [vmem:[%s915 + $0x268] sm:$0xf]
        %v3484 = vld [vmem:[%s915 + $0x26c] sm:$0xf]
        %v3485 = vld [vmem:[%s915 + $0x270] sm:$0xf]
        %v3486 = vld [vmem:[%s915 + $0x274] sm:$0xf]
        %v3487 = vld [vmem:[%s915 + $0x278] sm:$0xf]
        %v3488 = vld [vmem:[%s915 + $0x27c] sm:$0xf]
        %v3489 = vld [vmem:[%s915 + $0x280] sm:$0xf]
        %v3490 = vld [vmem:[%s915 + $0x284] sm:$0xf]
        %v3491 = vld [vmem:[%s915 + $0x288] sm:$0xf]
        %v3492 = vld [vmem:[%s915 + $0x28c] sm:$0xf]
        %v3493 = vld [vmem:[%s915 + $0x290] sm:$0xf]
        %v3494 = vld [vmem:[%s915 + $0x294] sm:$0xf]
        %v3495 = vld [vmem:[%s915 + $0x298] sm:$0xf]
        %v3496 = vld [vmem:[%s915 + $0x29c] sm:$0xf]
        %v3497 = vld [vmem:[%s915 + $0x2a0] sm:$0xf]
        %v3498 = vld [vmem:[%s915 + $0x2a4] sm:$0xf]
        %v3499 = vld [vmem:[%s915 + $0x2a8] sm:$0xf]
        %v3500 = vld [vmem:[%s915 + $0x2ac] sm:$0xf]
        %v3501 = vld [vmem:[%s915 + $0x2b0] sm:$0xf]
        %v3502 = vld [vmem:[%s915 + $0x2b4] sm:$0xf]
        %v3503 = vld [vmem:[%s915 + $0x2b8] sm:$0xf]
        %v3504 = vld [vmem:[%s915 + $0x2bc] sm:$0xf]
        %v3505 = vld [vmem:[%s915 + $0x2c0] sm:$0xf]
        %v3506 = vld [vmem:[%s915 + $0x2c4] sm:$0xf]
        %v3507 = vld [vmem:[%s915 + $0x2c8] sm:$0xf]
        %v3508 = vld [vmem:[%s915 + $0x2cc] sm:$0xf]
        %v3509 = vld [vmem:[%s915 + $0x2d0] sm:$0xf]
        %v3510 = vld [vmem:[%s915 + $0x2d4] sm:$0xf]
        %v3511 = vld [vmem:[%s915 + $0x2d8] sm:$0xf]
        %v3512 = vld [vmem:[%s915 + $0x2dc] sm:$0xf]
        %v3513 = vld [vmem:[%s915 + $0x2e0] sm:$0xf]
        %v3514 = vld [vmem:[%s915 + $0x2e4] sm:$0xf]
        %v3515 = vld [vmem:[%s915 + $0x2e8] sm:$0xf]
        %v3516 = vld [vmem:[%s915 + $0x2ec] sm:$0xf]
        %v3517 = vld [vmem:[%s915 + $0x2f0] sm:$0xf]
        %v3518 = vld [vmem:[%s915 + $0x2f4] sm:$0xf]
        %v3519 = vld [vmem:[%s915 + $0x2f8] sm:$0xf]
        %v3520 = vld [vmem:[%s915 + $0x2fc] sm:$0xf]
        %v3521 = vld [vmem:[%s915 + $0x300] sm:$0xf]
        %v3522 = vld [vmem:[%s915 + $0x304] sm:$0xf]
        %v3523 = vld [vmem:[%s915 + $0x308] sm:$0xf]
        %v3524 = vld [vmem:[%s915 + $0x30c] sm:$0xf]
        %v3525 = vld [vmem:[%s915 + $0x310] sm:$0xf]
        %v3526 = vld [vmem:[%s915 + $0x314] sm:$0xf]
        %v3527 = vld [vmem:[%s915 + $0x318] sm:$0xf]
        %v3528 = vld [vmem:[%s915 + $0x31c] sm:$0xf]
        %v3529 = vld [vmem:[%s915 + $0x320] sm:$0xf]
        %v3530 = vld [vmem:[%s915 + $0x324] sm:$0xf]
        %v3531 = vld [vmem:[%s915 + $0x328] sm:$0xf]
        %v3532 = vld [vmem:[%s915 + $0x32c] sm:$0xf]
        %v3533 = vld [vmem:[%s915 + $0x330] sm:$0xf]
        %v3534 = vld [vmem:[%s915 + $0x334] sm:$0xf]
        %v3535 = vld [vmem:[%s915 + $0x338] sm:$0xf]
        %v3536 = vld [vmem:[%s915 + $0x33c] sm:$0xf]
        %v3537 = vld [vmem:[%s915 + $0x340] sm:$0xf]
        %v3538 = vld [vmem:[%s915 + $0x344] sm:$0xf]
        %v3539 = vld [vmem:[%s915 + $0x348] sm:$0xf]
        %v3540 = vld [vmem:[%s915 + $0x34c] sm:$0xf]
        %v3541 = vld [vmem:[%s915 + $0x350] sm:$0xf]
        %v3542 = vld [vmem:[%s915 + $0x354] sm:$0xf]
        %v3543 = vld [vmem:[%s915 + $0x358] sm:$0xf]
        %v3544 = vld [vmem:[%s915 + $0x35c] sm:$0xf]
        %v3545 = vld [vmem:[%s915 + $0x360] sm:$0xf]
        %v3546 = vld [vmem:[%s915 + $0x364] sm:$0xf]
        %v3547 = vld [vmem:[%s915 + $0x368] sm:$0xf]
        %v3548 = vld [vmem:[%s915 + $0x36c] sm:$0xf]
        %v3549 = vld [vmem:[%s915 + $0x370] sm:$0xf]
        %v3550 = vld [vmem:[%s915 + $0x374] sm:$0xf]
        %v3551 = vld [vmem:[%s915 + $0x378] sm:$0xf]
        %v3552 = vld [vmem:[%s915 + $0x37c] sm:$0xf]
        %v3553 = vld [vmem:[%s915 + $0x380] sm:$0xf]
        %v3554 = vld [vmem:[%s915 + $0x384] sm:$0xf]
        %v3555 = vld [vmem:[%s915 + $0x388] sm:$0xf]
        %v3556 = vld [vmem:[%s915 + $0x38c] sm:$0xf]
        %v3557 = vld [vmem:[%s915 + $0x390] sm:$0xf]
        %v3558 = vld [vmem:[%s915 + $0x394] sm:$0xf]
        %v3559 = vld [vmem:[%s915 + $0x398] sm:$0xf]
        %v3560 = vld [vmem:[%s915 + $0x39c] sm:$0xf]
        %v3561 = vld [vmem:[%s915 + $0x3a0] sm:$0xf]
        %v3562 = vld [vmem:[%s915 + $0x3a4] sm:$0xf]
        %v3563 = vld [vmem:[%s915 + $0x3a8] sm:$0xf]
        %v3564 = vld [vmem:[%s915 + $0x3ac] sm:$0xf]
        %v3565 = vld [vmem:[%s915 + $0x3b0] sm:$0xf]
        %v3566 = vld [vmem:[%s915 + $0x3b4] sm:$0xf]
        %v3567 = vld [vmem:[%s915 + $0x3b8] sm:$0xf]
        %v3568 = vld [vmem:[%s915 + $0x3bc] sm:$0xf]
        %v3569 = vld [vmem:[%s915 + $0x3c0] sm:$0xf]
        %v3570 = vld [vmem:[%s915 + $0x3c4] sm:$0xf]
        %v3571 = vld [vmem:[%s915 + $0x3c8] sm:$0xf]
        %v3572 = vld [vmem:[%s915 + $0x3cc] sm:$0xf]
        %v3573 = vld [vmem:[%s915 + $0x3d0] sm:$0xf]
        %v3574 = vld [vmem:[%s915 + $0x3d4] sm:$0xf]
        %v3575 = vld [vmem:[%s915 + $0x3d8] sm:$0xf]
        %v3576 = vld [vmem:[%s915 + $0x3dc] sm:$0xf]
        %v3577 = vld [vmem:[%s915 + $0x3e0] sm:$0xf]
        %v3578 = vld [vmem:[%s915 + $0x3e4] sm:$0xf]
        %v3579 = vld [vmem:[%s915 + $0x3e8] sm:$0xf]
        %v3580 = vld [vmem:[%s915 + $0x3ec] sm:$0xf]
        %v3581 = vld [vmem:[%s915 + $0x3f0] sm:$0xf]
        %v3582 = vld [vmem:[%s915 + $0x3f4] sm:$0xf]
        %v3583 = vld [vmem:[%s915 + $0x3f8] sm:$0xf]
        %v3584 = vld [vmem:[%s915 + $0x3fc] sm:$0xf]
        %v3585 = vld [vmem:[%s918] sm:$0x1]
        %v3587 = vlaneseq
        %v3588 = vshrl.u32 %v3587, 7
        %v3589 = vsub.s32 0, %v3588
        %v3590 = vrot.slane %v3585, %v3589
        %v3848 = vunpack.c.l.b16 %v3329
        %v3849 = vunpack.c.l.b16 %v3330
        %v3850 = vunpack.c.l.b16 %v3331
        %v3851 = vunpack.c.l.b16 %v3332
        %v3852 = vunpack.c.l.b16 %v3333
        %v3853 = vunpack.c.l.b16 %v3334
        %v3854 = vunpack.c.l.b16 %v3335
        %v3855 = vunpack.c.l.b16 %v3336
        %v3856 = vunpack.c.l.b16 %v3337
        %v3857 = vunpack.c.l.b16 %v3338
        %v3858 = vunpack.c.l.b16 %v3339
        %v3859 = vunpack.c.l.b16 %v3340
        %v3860 = vunpack.c.l.b16 %v3341
        %v3861 = vunpack.c.l.b16 %v3342
        %v3862 = vunpack.c.l.b16 %v3343
        %v3863 = vunpack.c.l.b16 %v3344
        %v3864 = vunpack.c.l.b16 %v3345
        %v3865 = vunpack.c.l.b16 %v3346
        %v3866 = vunpack.c.l.b16 %v3347
        %v3867 = vunpack.c.l.b16 %v3348
        %v3868 = vunpack.c.l.b16 %v3349
        %v3869 = vunpack.c.l.b16 %v3350
        %v3870 = vunpack.c.l.b16 %v3351
        %v3871 = vunpack.c.l.b16 %v3352
        %v3872 = vunpack.c.l.b16 %v3353
        %v3873 = vunpack.c.l.b16 %v3354
        %v3874 = vunpack.c.l.b16 %v3355
        %v3875 = vunpack.c.l.b16 %v3356
        %v3876 = vunpack.c.l.b16 %v3357
        %v3877 = vunpack.c.l.b16 %v3358
        %v3878 = vunpack.c.l.b16 %v3359
        %v3879 = vunpack.c.l.b16 %v3360
        %v3880 = vunpack.c.l.b16 %v3361
        %v3881 = vunpack.c.l.b16 %v3362
        %v3882 = vunpack.c.l.b16 %v3363
        %v3883 = vunpack.c.l.b16 %v3364
        %v3884 = vunpack.c.l.b16 %v3365
        %v3885 = vunpack.c.l.b16 %v3366
        %v3886 = vunpack.c.l.b16 %v3367
        %v3887 = vunpack.c.l.b16 %v3368
        %v3888 = vunpack.c.l.b16 %v3369
        %v3889 = vunpack.c.l.b16 %v3370
        %v3890 = vunpack.c.l.b16 %v3371
        %v3891 = vunpack.c.l.b16 %v3372
        %v3892 = vunpack.c.l.b16 %v3373
        %v3893 = vunpack.c.l.b16 %v3374
        %v3894 = vunpack.c.l.b16 %v3375
        %v3895 = vunpack.c.l.b16 %v3376
        %v3896 = vunpack.c.l.b16 %v3377
        %v3897 = vunpack.c.l.b16 %v3378
        %v3898 = vunpack.c.l.b16 %v3379
        %v3899 = vunpack.c.l.b16 %v3380
        %v3900 = vunpack.c.l.b16 %v3381
        %v3901 = vunpack.c.l.b16 %v3382
        %v3902 = vunpack.c.l.b16 %v3383
        %v3903 = vunpack.c.l.b16 %v3384
        %v3904 = vunpack.c.l.b16 %v3385
        %v3905 = vunpack.c.l.b16 %v3386
        %v3906 = vunpack.c.l.b16 %v3387
        %v3907 = vunpack.c.l.b16 %v3388
        %v3908 = vunpack.c.l.b16 %v3389
        %v3909 = vunpack.c.l.b16 %v3390
        %v3910 = vunpack.c.l.b16 %v3391
        %v3911 = vunpack.c.l.b16 %v3392
        %v3912 = vunpack.c.l.b16 %v3393
        %v3913 = vunpack.c.l.b16 %v3394
        %v3914 = vunpack.c.l.b16 %v3395
        %v3915 = vunpack.c.l.b16 %v3396
        %v3916 = vunpack.c.l.b16 %v3397
        %v3917 = vunpack.c.l.b16 %v3398
        %v3918 = vunpack.c.l.b16 %v3399
        %v3919 = vunpack.c.l.b16 %v3400
        %v3920 = vunpack.c.l.b16 %v3401
        %v3921 = vunpack.c.l.b16 %v3402
        %v3922 = vunpack.c.l.b16 %v3403
        %v3923 = vunpack.c.l.b16 %v3404
        %v3924 = vunpack.c.l.b16 %v3405
        %v3925 = vunpack.c.l.b16 %v3406
        %v3926 = vunpack.c.l.b16 %v3407
        %v3927 = vunpack.c.l.b16 %v3408
        %v3928 = vunpack.c.l.b16 %v3409
        %v3929 = vunpack.c.l.b16 %v3410
        %v3930 = vunpack.c.l.b16 %v3411
        %v3931 = vunpack.c.l.b16 %v3412
        %v3932 = vunpack.c.l.b16 %v3413
        %v3933 = vunpack.c.l.b16 %v3414
        %v3934 = vunpack.c.l.b16 %v3415
        %v3935 = vunpack.c.l.b16 %v3416
        %v3936 = vunpack.c.l.b16 %v3417
        %v3937 = vunpack.c.l.b16 %v3418
        %v3938 = vunpack.c.l.b16 %v3419
        %v3939 = vunpack.c.l.b16 %v3420
        %v3940 = vunpack.c.l.b16 %v3421
        %v3941 = vunpack.c.l.b16 %v3422
        %v3942 = vunpack.c.l.b16 %v3423
        %v3943 = vunpack.c.l.b16 %v3424
        %v3944 = vunpack.c.l.b16 %v3425
        %v3945 = vunpack.c.l.b16 %v3426
        %v3946 = vunpack.c.l.b16 %v3427
        %v3947 = vunpack.c.l.b16 %v3428
        %v3948 = vunpack.c.l.b16 %v3429
        %v3949 = vunpack.c.l.b16 %v3430
        %v3950 = vunpack.c.l.b16 %v3431
        %v3951 = vunpack.c.l.b16 %v3432
        %v3952 = vunpack.c.l.b16 %v3433
        %v3953 = vunpack.c.l.b16 %v3434
        %v3954 = vunpack.c.l.b16 %v3435
        %v3955 = vunpack.c.l.b16 %v3436
        %v3956 = vunpack.c.l.b16 %v3437
        %v3957 = vunpack.c.l.b16 %v3438
        %v3958 = vunpack.c.l.b16 %v3439
        %v3959 = vunpack.c.l.b16 %v3440
        %v3960 = vunpack.c.l.b16 %v3441
        %v3961 = vunpack.c.l.b16 %v3442
        %v3962 = vunpack.c.l.b16 %v3443
        %v3963 = vunpack.c.l.b16 %v3444
        %v3964 = vunpack.c.l.b16 %v3445
        %v3965 = vunpack.c.l.b16 %v3446
        %v3966 = vunpack.c.l.b16 %v3447
        %v3967 = vunpack.c.l.b16 %v3448
        %v3968 = vunpack.c.l.b16 %v3449
        %v3969 = vunpack.c.l.b16 %v3450
        %v3970 = vunpack.c.l.b16 %v3451
        %v3971 = vunpack.c.l.b16 %v3452
        %v3972 = vunpack.c.l.b16 %v3453
        %v3973 = vunpack.c.l.b16 %v3454
        %v3974 = vunpack.c.l.b16 %v3455
        %v3975 = vunpack.c.l.b16 %v3456
        %v3976 = vunpack.c.l.b16 %v3457
        %v3977 = vunpack.c.l.b16 %v3458
        %v3978 = vunpack.c.l.b16 %v3459
        %v3979 = vunpack.c.l.b16 %v3460
        %v3980 = vunpack.c.l.b16 %v3461
        %v3981 = vunpack.c.l.b16 %v3462
        %v3982 = vunpack.c.l.b16 %v3463
        %v3983 = vunpack.c.l.b16 %v3464
        %v3984 = vunpack.c.l.b16 %v3465
        %v3985 = vunpack.c.l.b16 %v3466
        %v3986 = vunpack.c.l.b16 %v3467
        %v3987 = vunpack.c.l.b16 %v3468
        %v3988 = vunpack.c.l.b16 %v3469
        %v3989 = vunpack.c.l.b16 %v3470
        %v3990 = vunpack.c.l.b16 %v3471
        %v3991 = vunpack.c.l.b16 %v3472
        %v3992 = vunpack.c.l.b16 %v3473
        %v3993 = vunpack.c.l.b16 %v3474
        %v3994 = vunpack.c.l.b16 %v3475
        %v3995 = vunpack.c.l.b16 %v3476
        %v3996 = vunpack.c.l.b16 %v3477
        %v3997 = vunpack.c.l.b16 %v3478
        %v3998 = vunpack.c.l.b16 %v3479
        %v3999 = vunpack.c.l.b16 %v3480
        %v4000 = vunpack.c.l.b16 %v3481
        %v4001 = vunpack.c.l.b16 %v3482
        %v4002 = vunpack.c.l.b16 %v3483
        %v4003 = vunpack.c.l.b16 %v3484
        %v4004 = vunpack.c.l.b16 %v3485
        %v4005 = vunpack.c.l.b16 %v3486
        %v4006 = vunpack.c.l.b16 %v3487
        %v4007 = vunpack.c.l.b16 %v3488
        %v4008 = vunpack.c.l.b16 %v3489
        %v4009 = vunpack.c.l.b16 %v3490
        %v4010 = vunpack.c.l.b16 %v3491
        %v4011 = vunpack.c.l.b16 %v3492
        %v4012 = vunpack.c.l.b16 %v3493
        %v4013 = vunpack.c.l.b16 %v3494
        %v4014 = vunpack.c.l.b16 %v3495
        %v4015 = vunpack.c.l.b16 %v3496
        %v4016 = vunpack.c.l.b16 %v3497
        %v4017 = vunpack.c.l.b16 %v3498
        %v4018 = vunpack.c.l.b16 %v3499
        %v4019 = vunpack.c.l.b16 %v3500
        %v4020 = vunpack.c.l.b16 %v3501
        %v4021 = vunpack.c.l.b16 %v3502
        %v4022 = vunpack.c.l.b16 %v3503
        %v4023 = vunpack.c.l.b16 %v3504
        %v4024 = vunpack.c.l.b16 %v3505
        %v4025 = vunpack.c.l.b16 %v3506
        %v4026 = vunpack.c.l.b16 %v3507
        %v4027 = vunpack.c.l.b16 %v3508
        %v4028 = vunpack.c.l.b16 %v3509
        %v4029 = vunpack.c.l.b16 %v3510
        %v4030 = vunpack.c.l.b16 %v3511
        %v4031 = vunpack.c.l.b16 %v3512
        %v4032 = vunpack.c.l.b16 %v3513
        %v4033 = vunpack.c.l.b16 %v3514
        %v4034 = vunpack.c.l.b16 %v3515
        %v4035 = vunpack.c.l.b16 %v3516
        %v4036 = vunpack.c.l.b16 %v3517
        %v4037 = vunpack.c.l.b16 %v3518
        %v4038 = vunpack.c.l.b16 %v3519
        %v4039 = vunpack.c.l.b16 %v3520
        %v4040 = vunpack.c.l.b16 %v3521
        %v4041 = vunpack.c.l.b16 %v3522
        %v4042 = vunpack.c.l.b16 %v3523
        %v4043 = vunpack.c.l.b16 %v3524
        %v4044 = vunpack.c.l.b16 %v3525
        %v4045 = vunpack.c.l.b16 %v3526
        %v4046 = vunpack.c.l.b16 %v3527
        %v4047 = vunpack.c.l.b16 %v3528
        %v4048 = vunpack.c.l.b16 %v3529
        %v4049 = vunpack.c.l.b16 %v3530
        %v4050 = vunpack.c.l.b16 %v3531
        %v4051 = vunpack.c.l.b16 %v3532
        %v4052 = vunpack.c.l.b16 %v3533
        %v4053 = vunpack.c.l.b16 %v3534
        %v4054 = vunpack.c.l.b16 %v3535
        %v4055 = vunpack.c.l.b16 %v3536
        %v4056 = vunpack.c.l.b16 %v3537
        %v4057 = vunpack.c.l.b16 %v3538
        %v4058 = vunpack.c.l.b16 %v3539
        %v4059 = vunpack.c.l.b16 %v3540
        %v4060 = vunpack.c.l.b16 %v3541
        %v4061 = vunpack.c.l.b16 %v3542
        %v4062 = vunpack.c.l.b16 %v3543
        %v4063 = vunpack.c.l.b16 %v3544
        %v4064 = vunpack.c.l.b16 %v3545
        %v4065 = vunpack.c.l.b16 %v3546
        %v4066 = vunpack.c.l.b16 %v3547
        %v4067 = vunpack.c.l.b16 %v3548
        %v4068 = vunpack.c.l.b16 %v3549
        %v4069 = vunpack.c.l.b16 %v3550
        %v4070 = vunpack.c.l.b16 %v3551
        %v4071 = vunpack.c.l.b16 %v3552
        %v4072 = vunpack.c.l.b16 %v3553
        %v4073 = vunpack.c.l.b16 %v3554
        %v4074 = vunpack.c.l.b16 %v3555
        %v4075 = vunpack.c.l.b16 %v3556
        %v4076 = vunpack.c.l.b16 %v3557
        %v4077 = vunpack.c.l.b16 %v3558
        %v4078 = vunpack.c.l.b16 %v3559
        %v4079 = vunpack.c.l.b16 %v3560
        %v4080 = vunpack.c.l.b16 %v3561
        %v4081 = vunpack.c.l.b16 %v3562
        %v4082 = vunpack.c.l.b16 %v3563
        %v4083 = vunpack.c.l.b16 %v3564
        %v4084 = vunpack.c.l.b16 %v3565
        %v4085 = vunpack.c.l.b16 %v3566
        %v4086 = vunpack.c.l.b16 %v3567
        %v4087 = vunpack.c.l.b16 %v3568
        %v4088 = vunpack.c.l.b16 %v3569
        %v4089 = vunpack.c.l.b16 %v3570
        %v4090 = vunpack.c.l.b16 %v3571
        %v4091 = vunpack.c.l.b16 %v3572
        %v4092 = vunpack.c.l.b16 %v3573
        %v4093 = vunpack.c.l.b16 %v3574
        %v4094 = vunpack.c.l.b16 %v3575
        %v4095 = vunpack.c.l.b16 %v3576
        %v4096 = vunpack.c.l.b16 %v3577
        %v4097 = vunpack.c.l.b16 %v3578
        %v4098 = vunpack.c.l.b16 %v3579
        %v4099 = vunpack.c.l.b16 %v3580
        %v4100 = vunpack.c.l.b16 %v3581
        %v4101 = vunpack.c.l.b16 %v3582
        %v4102 = vunpack.c.l.b16 %v3583
        %v4103 = vunpack.c.l.b16 %v3584
        %v4104 = vpack.c.b16 %v3849, %v3848
        %v4105 = vpack.c.b16 %v3851, %v3850
        %v4106 = vpack.c.b16 %v3853, %v3852
        %v4107 = vpack.c.b16 %v3855, %v3854
        %v4108 = vpack.c.b16 %v3857, %v3856
        %v4109 = vpack.c.b16 %v3859, %v3858
        %v4110 = vpack.c.b16 %v3861, %v3860
        %v4111 = vpack.c.b16 %v3863, %v3862
        %v4112 = vpack.c.b16 %v3865, %v3864
        %v4113 = vpack.c.b16 %v3867, %v3866
        %v4114 = vpack.c.b16 %v3869, %v3868
        %v4115 = vpack.c.b16 %v3871, %v3870
        %v4116 = vpack.c.b16 %v3873, %v3872
        %v4117 = vpack.c.b16 %v3875, %v3874
        %v4118 = vpack.c.b16 %v3877, %v3876
        %v4119 = vpack.c.b16 %v3879, %v3878
        %v4120 = vpack.c.b16 %v3881, %v3880
        %v4121 = vpack.c.b16 %v3883, %v3882
        %v4122 = vpack.c.b16 %v3885, %v3884
        %v4123 = vpack.c.b16 %v3887, %v3886
        %v4124 = vpack.c.b16 %v3889, %v3888
        %v4125 = vpack.c.b16 %v3891, %v3890
        %v4126 = vpack.c.b16 %v3893, %v3892
        %v4127 = vpack.c.b16 %v3895, %v3894
        %v4128 = vpack.c.b16 %v3897, %v3896
        %v4129 = vpack.c.b16 %v3899, %v3898
        %v4130 = vpack.c.b16 %v3901, %v3900
        %v4131 = vpack.c.b16 %v3903, %v3902
        %v4132 = vpack.c.b16 %v3905, %v3904
        %v4133 = vpack.c.b16 %v3907, %v3906
        %v4134 = vpack.c.b16 %v3909, %v3908
        %v4135 = vpack.c.b16 %v3911, %v3910
        %v4136 = vpack.c.b16 %v3913, %v3912
        %v4137 = vpack.c.b16 %v3915, %v3914
        %v4138 = vpack.c.b16 %v3917, %v3916
        %v4139 = vpack.c.b16 %v3919, %v3918
        %v4140 = vpack.c.b16 %v3921, %v3920
        %v4141 = vpack.c.b16 %v3923, %v3922
        %v4142 = vpack.c.b16 %v3925, %v3924
        %v4143 = vpack.c.b16 %v3927, %v3926
        %v4144 = vpack.c.b16 %v3929, %v3928
        %v4145 = vpack.c.b16 %v3931, %v3930
        %v4146 = vpack.c.b16 %v3933, %v3932
        %v4147 = vpack.c.b16 %v3935, %v3934
        %v4148 = vpack.c.b16 %v3937, %v3936
        %v4149 = vpack.c.b16 %v3939, %v3938
        %v4150 = vpack.c.b16 %v3941, %v3940
        %v4151 = vpack.c.b16 %v3943, %v3942
        %v4152 = vpack.c.b16 %v3945, %v3944
        %v4153 = vpack.c.b16 %v3947, %v3946
        %v4154 = vpack.c.b16 %v3949, %v3948
        %v4155 = vpack.c.b16 %v3951, %v3950
        %v4156 = vpack.c.b16 %v3953, %v3952
        %v4157 = vpack.c.b16 %v3955, %v3954
        %v4158 = vpack.c.b16 %v3957, %v3956
        %v4159 = vpack.c.b16 %v3959, %v3958
        %v4160 = vpack.c.b16 %v3961, %v3960
        %v4161 = vpack.c.b16 %v3963, %v3962
        %v4162 = vpack.c.b16 %v3965, %v3964
        %v4163 = vpack.c.b16 %v3967, %v3966
        %v4164 = vpack.c.b16 %v3969, %v3968
        %v4165 = vpack.c.b16 %v3971, %v3970
        %v4166 = vpack.c.b16 %v3973, %v3972
        %v4167 = vpack.c.b16 %v3975, %v3974
        %v4168 = vpack.c.b16 %v3977, %v3976
        %v4169 = vpack.c.b16 %v3979, %v3978
        %v4170 = vpack.c.b16 %v3981, %v3980
        %v4171 = vpack.c.b16 %v3983, %v3982
        %v4172 = vpack.c.b16 %v3985, %v3984
        %v4173 = vpack.c.b16 %v3987, %v3986
        %v4174 = vpack.c.b16 %v3989, %v3988
        %v4175 = vpack.c.b16 %v3991, %v3990
        %v4176 = vpack.c.b16 %v3993, %v3992
        %v4177 = vpack.c.b16 %v3995, %v3994
        %v4178 = vpack.c.b16 %v3997, %v3996
        %v4179 = vpack.c.b16 %v3999, %v3998
        %v4180 = vpack.c.b16 %v4001, %v4000
        %v4181 = vpack.c.b16 %v4003, %v4002
        %v4182 = vpack.c.b16 %v4005, %v4004
        %v4183 = vpack.c.b16 %v4007, %v4006
        %v4184 = vpack.c.b16 %v4009, %v4008
        %v4185 = vpack.c.b16 %v4011, %v4010
        %v4186 = vpack.c.b16 %v4013, %v4012
        %v4187 = vpack.c.b16 %v4015, %v4014
        %v4188 = vpack.c.b16 %v4017, %v4016
        %v4189 = vpack.c.b16 %v4019, %v4018
        %v4190 = vpack.c.b16 %v4021, %v4020
        %v4191 = vpack.c.b16 %v4023, %v4022
        %v4192 = vpack.c.b16 %v4025, %v4024
        %v4193 = vpack.c.b16 %v4027, %v4026
        %v4194 = vpack.c.b16 %v4029, %v4028
        %v4195 = vpack.c.b16 %v4031, %v4030
        %v4196 = vpack.c.b16 %v4033, %v4032
        %v4197 = vpack.c.b16 %v4035, %v4034
        %v4198 = vpack.c.b16 %v4037, %v4036
        %v4199 = vpack.c.b16 %v4039, %v4038
        %v4200 = vpack.c.b16 %v4041, %v4040
        %v4201 = vpack.c.b16 %v4043, %v4042
        %v4202 = vpack.c.b16 %v4045, %v4044
        %v4203 = vpack.c.b16 %v4047, %v4046
        %v4204 = vpack.c.b16 %v4049, %v4048
        %v4205 = vpack.c.b16 %v4051, %v4050
        %v4206 = vpack.c.b16 %v4053, %v4052
        %v4207 = vpack.c.b16 %v4055, %v4054
        %v4208 = vpack.c.b16 %v4057, %v4056
        %v4209 = vpack.c.b16 %v4059, %v4058
        %v4210 = vpack.c.b16 %v4061, %v4060
        %v4211 = vpack.c.b16 %v4063, %v4062
        %v4212 = vpack.c.b16 %v4065, %v4064
        %v4213 = vpack.c.b16 %v4067, %v4066
        %v4214 = vpack.c.b16 %v4069, %v4068
        %v4215 = vpack.c.b16 %v4071, %v4070
        %v4216 = vpack.c.b16 %v4073, %v4072
        %v4217 = vpack.c.b16 %v4075, %v4074
        %v4218 = vpack.c.b16 %v4077, %v4076
        %v4219 = vpack.c.b16 %v4079, %v4078
        %v4220 = vpack.c.b16 %v4081, %v4080
        %v4221 = vpack.c.b16 %v4083, %v4082
        %v4222 = vpack.c.b16 %v4085, %v4084
        %v4223 = vpack.c.b16 %v4087, %v4086
        %v4224 = vpack.c.b16 %v4089, %v4088
        %v4225 = vpack.c.b16 %v4091, %v4090
        %v4226 = vpack.c.b16 %v4093, %v4092
        %v4227 = vpack.c.b16 %v4095, %v4094
        %v4228 = vpack.c.b16 %v4097, %v4096
        %v4229 = vpack.c.b16 %v4099, %v4098
        %v4230 = vpack.c.b16 %v4101, %v4100
        %v4231 = vpack.c.b16 %v4103, %v4102
        %4360 = vmatprep.subr.bf16.mxu0 0
        %4361 = vmatpush1.bf16.msra.mxu0 %v4104
        %4362 = vmatprep.subr.bf16.mxu0 0
        %4363 = vmatpush1.bf16.msra.mxu0 %v4105
        %4364 = vmatprep.subr.bf16.mxu0 0
        %4365 = vmatpush1.bf16.msra.mxu0 %v4106
        %4366 = vmatprep.subr.bf16.mxu0 0
        %4367 = vmatpush1.bf16.msra.mxu0 %v4107
        %4368 = vmatprep.subr.bf16.mxu0 0
        %4369 = vmatpush1.bf16.msra.mxu0 %v4108
        %4370 = vmatprep.subr.bf16.mxu0 0
        %4371 = vmatpush1.bf16.msra.mxu0 %v4109
        %4372 = vmatprep.subr.bf16.mxu0 0
        %4373 = vmatpush1.bf16.msra.mxu0 %v4110
        %4374 = vmatprep.subr.bf16.mxu0 0
        %4375 = vmatpush1.bf16.msra.mxu0 %v4111
        %4376 = vmatprep.subr.bf16.mxu0 0
        %4377 = vmatpush1.bf16.msra.mxu0 %v4112
        %4378 = vmatprep.subr.bf16.mxu0 0
        %4379 = vmatpush1.bf16.msra.mxu0 %v4113
        %4380 = vmatprep.subr.bf16.mxu0 0
        %4381 = vmatpush1.bf16.msra.mxu0 %v4114
        %4382 = vmatprep.subr.bf16.mxu0 0
        %4383 = vmatpush1.bf16.msra.mxu0 %v4115
        %4384 = vmatprep.subr.bf16.mxu0 0
        %4385 = vmatpush1.bf16.msra.mxu0 %v4116
        %4386 = vmatprep.subr.bf16.mxu0 0
        %4387 = vmatpush1.bf16.msra.mxu0 %v4117
        %4388 = vmatprep.subr.bf16.mxu0 0
        %4389 = vmatpush1.bf16.msra.mxu0 %v4118
        %4390 = vmatprep.subr.bf16.mxu0 0
        %4391 = vmatpush1.bf16.msra.mxu0 %v4119
        %4392 = vmatprep.mubr.bf16.mxu0 %v3314
        %4393 = vmatmul.mubr.bf16.gmra.mrb[0].mxu0 %v3313
        %v4394 = vpop.f32.mrb[0].mxu0
        %v4395 = vadd.f32 %v3590, %v4394
        %v4396 = vpop.f32.mrb[0].mxu0
        %v4397 = vpop.f32.mrb[0].mxu0
        %v4398 = vadd.f32 %v3590, %v4397
        %v4399 = vpop.f32.mrb[0].mxu0
        %4400 = vdwg.mxu0
        %4401 = vmatprep.subr.bf16.mxu0 0
        %4402 = vmatpush1.bf16.msra.mxu0 %v4120
        %4403 = vmatprep.subr.bf16.mxu0 0
        %4404 = vmatpush1.bf16.msra.mxu0 %v4121
        %4405 = vmatprep.subr.bf16.mxu0 0
        %4406 = vmatpush1.bf16.msra.mxu0 %v4122
        %4407 = vmatprep.subr.bf16.mxu0 0
        %4408 = vmatpush1.bf16.msra.mxu0 %v4123
        %4409 = vmatprep.subr.bf16.mxu0 0
        %4410 = vmatpush1.bf16.msra.mxu0 %v4124
        %4411 = vmatprep.subr.bf16.mxu0 0
        %4412 = vmatpush1.bf16.msra.mxu0 %v4125
        %4413 = vmatprep.subr.bf16.mxu0 0
        %4414 = vmatpush1.bf16.msra.mxu0 %v4126
        %4415 = vmatprep.subr.bf16.mxu0 0
        %4416 = vmatpush1.bf16.msra.mxu0 %v4127
        %4417 = vmatprep.subr.bf16.mxu0 0
        %4418 = vmatpush1.bf16.msra.mxu0 %v4128
        %4419 = vmatprep.subr.bf16.mxu0 0
        %4420 = vmatpush1.bf16.msra.mxu0 %v4129
        %4421 = vmatprep.subr.bf16.mxu0 0
        %4422 = vmatpush1.bf16.msra.mxu0 %v4130
        %4423 = vmatprep.subr.bf16.mxu0 0
        %4424 = vmatpush1.bf16.msra.mxu0 %v4131
        %4425 = vmatprep.subr.bf16.mxu0 0
        %4426 = vmatpush1.bf16.msra.mxu0 %v4132
        %4427 = vmatprep.subr.bf16.mxu0 0
        %4428 = vmatpush1.bf16.msra.mxu0 %v4133
        %4429 = vmatprep.subr.bf16.mxu0 0
        %4430 = vmatpush1.bf16.msra.mxu0 %v4134
        %4431 = vmatprep.subr.bf16.mxu0 0
        %4432 = vmatpush1.bf16.msra.mxu0 %v4135
        %4433 = vmatprep.mubr.bf16.mxu0 %v3316
        %4434 = vmatmul.mubr.bf16.gmra.mrb[0].mxu0 %v3315
        %v4435 = vpop.f32.mrb[0].mxu0
        %v4436 = vadd.f32 %v4395, %v4435
        %v4437 = vpop.f32.mrb[0].mxu0
        %v4438 = vpop.f32.mrb[0].mxu0
        %v4439 = vadd.f32 %v4398, %v4438
        %v4440 = vpop.f32.mrb[0].mxu0
        %4441 = vdwg.mxu0
        %4442 = vmatprep.subr.bf16.mxu0 0
        %4443 = vmatpush1.bf16.msra.mxu0 %v4136
        %4444 = vmatprep.subr.bf16.mxu0 0
        %4445 = vmatpush1.bf16.msra.mxu0 %v4137
        %4446 = vmatprep.subr.bf16.mxu0 0
        %4447 = vmatpush1.bf16.msra.mxu0 %v4138
        %4448 = vmatprep.subr.bf16.mxu0 0
        %4449 = vmatpush1.bf16.msra.mxu0 %v4139
        %4450 = vmatprep.subr.bf16.mxu0 0
        %4451 = vmatpush1.bf16.msra.mxu0 %v4140
        %4452 = vmatprep.subr.bf16.mxu0 0
        %4453 = vmatpush1.bf16.msra.mxu0 %v4141
        %4454 = vmatprep.subr.bf16.mxu0 0
        %4455 = vmatpush1.bf16.msra.mxu0 %v4142
        %4456 = vmatprep.subr.bf16.mxu0 0
        %4457 = vmatpush1.bf16.msra.mxu0 %v4143
        %4458 = vmatprep.subr.bf16.mxu0 0
        %4459 = vmatpush1.bf16.msra.mxu0 %v4144
        %4460 = vmatprep.subr.bf16.mxu0 0
        %4461 = vmatpush1.bf16.msra.mxu0 %v4145
        %4462 = vmatprep.subr.bf16.mxu0 0
        %4463 = vmatpush1.bf16.msra.mxu0 %v4146
        %4464 = vmatprep.subr.bf16.mxu0 0
        %4465 = vmatpush1.bf16.msra.mxu0 %v4147
        %4466 = vmatprep.subr.bf16.mxu0 0
        %4467 = vmatpush1.bf16.msra.mxu0 %v4148
        %4468 = vmatprep.subr.bf16.mxu0 0
        %4469 = vmatpush1.bf16.msra.mxu0 %v4149
        %4470 = vmatprep.subr.bf16.mxu0 0
        %4471 = vmatpush1.bf16.msra.mxu0 %v4150
        %4472 = vmatprep.subr.bf16.mxu0 0
        %4473 = vmatpush1.bf16.msra.mxu0 %v4151
        %4474 = vmatprep.mubr.bf16.mxu0 %v3318
        %4475 = vmatmul.mubr.bf16.gmra.mrb[0].mxu0 %v3317
        %v4476 = vpop.f32.mrb[0].mxu0
        %v4477 = vadd.f32 %v4436, %v4476
        %v4478 = vpop.f32.mrb[0].mxu0
        %v4479 = vpop.f32.mrb[0].mxu0
        %v4480 = vadd.f32 %v4439, %v4479
        %v4481 = vpop.f32.mrb[0].mxu0
        %4482 = vdwg.mxu0
        %4483 = vmatprep.subr.bf16.mxu0 0
        %4484 = vmatpush1.bf16.msra.mxu0 %v4152
        %4485 = vmatprep.subr.bf16.mxu0 0
        %4486 = vmatpush1.bf16.msra.mxu0 %v4153
        %4487 = vmatprep.subr.bf16.mxu0 0
        %4488 = vmatpush1.bf16.msra.mxu0 %v4154
        %4489 = vmatprep.subr.bf16.mxu0 0
        %4490 = vmatpush1.bf16.msra.mxu0 %v4155
        %4491 = vmatprep.subr.bf16.mxu0 0
        %4492 = vmatpush1.bf16.msra.mxu0 %v4156
        %4493 = vmatprep.subr.bf16.mxu0 0
        %4494 = vmatpush1.bf16.msra.mxu0 %v4157
        %4495 = vmatprep.subr.bf16.mxu0 0
        %4496 = vmatpush1.bf16.msra.mxu0 %v4158
        %4497 = vmatprep.subr.bf16.mxu0 0
        %4498 = vmatpush1.bf16.msra.mxu0 %v4159
        %4499 = vmatprep.subr.bf16.mxu0 0
        %4500 = vmatpush1.bf16.msra.mxu0 %v4160
        %4501 = vmatprep.subr.bf16.mxu0 0
        %4502 = vmatpush1.bf16.msra.mxu0 %v4161
        %4503 = vmatprep.subr.bf16.mxu0 0
        %4504 = vmatpush1.bf16.msra.mxu0 %v4162
        %4505 = vmatprep.subr.bf16.mxu0 0
        %4506 = vmatpush1.bf16.msra.mxu0 %v4163
        %4507 = vmatprep.subr.bf16.mxu0 0
        %4508 = vmatpush1.bf16.msra.mxu0 %v4164
        %4509 = vmatprep.subr.bf16.mxu0 0
        %4510 = vmatpush1.bf16.msra.mxu0 %v4165
        %4511 = vmatprep.subr.bf16.mxu0 0
        %4512 = vmatpush1.bf16.msra.mxu0 %v4166
        %4513 = vmatprep.subr.bf16.mxu0 0
        %4514 = vmatpush1.bf16.msra.mxu0 %v4167
        %4515 = vmatprep.mubr.bf16.mxu0 %v3320
        %4516 = vmatmul.mubr.bf16.gmra.mrb[0].mxu0 %v3319
        %v4517 = vpop.f32.mrb[0].mxu0
        %v4518 = vadd.f32 %v4477, %v4517
        %v4519 = vpop.f32.mrb[0].mxu0
        %v4520 = vpop.f32.mrb[0].mxu0
        %v4521 = vadd.f32 %v4480, %v4520
        %v4522 = vpop.f32.mrb[0].mxu0
        %4523 = vdwg.mxu0
        %4524 = vmatprep.subr.bf16.mxu0 0
        %4525 = vmatpush1.bf16.msra.mxu0 %v4168
        %4526 = vmatprep.subr.bf16.mxu0 0
        %4527 = vmatpush1.bf16.msra.mxu0 %v4169
        %4528 = vmatprep.subr.bf16.mxu0 0
        %4529 = vmatpush1.bf16.msra.mxu0 %v4170
        %4530 = vmatprep.subr.bf16.mxu0 0
        %4531 = vmatpush1.bf16.msra.mxu0 %v4171
        %4532 = vmatprep.subr.bf16.mxu0 0
        %4533 = vmatpush1.bf16.msra.mxu0 %v4172
        %4534 = vmatprep.subr.bf16.mxu0 0
        %4535 = vmatpush1.bf16.msra.mxu0 %v4173
        %4536 = vmatprep.subr.bf16.mxu0 0
        %4537 = vmatpush1.bf16.msra.mxu0 %v4174
        %4538 = vmatprep.subr.bf16.mxu0 0
        %4539 = vmatpush1.bf16.msra.mxu0 %v4175
        %4540 = vmatprep.subr.bf16.mxu0 0
        %4541 = vmatpush1.bf16.msra.mxu0 %v4176
        %4542 = vmatprep.subr.bf16.mxu0 0
        %4543 = vmatpush1.bf16.msra.mxu0 %v4177
        %4544 = vmatprep.subr.bf16.mxu0 0
        %4545 = vmatpush1.bf16.msra.mxu0 %v4178
        %4546 = vmatprep.subr.bf16.mxu0 0
        %4547 = vmatpush1.bf16.msra.mxu0 %v4179
        %4548 = vmatprep.subr.bf16.mxu0 0
        %4549 = vmatpush1.bf16.msra.mxu0 %v4180
        %4550 = vmatprep.subr.bf16.mxu0 0
        %4551 = vmatpush1.bf16.msra.mxu0 %v4181
        %4552 = vmatprep.subr.bf16.mxu0 0
        %4553 = vmatpush1.bf16.msra.mxu0 %v4182
        %4554 = vmatprep.subr.bf16.mxu0 0
        %4555 = vmatpush1.bf16.msra.mxu0 %v4183
        %4556 = vmatprep.mubr.bf16.mxu0 %v3322
        %4557 = vmatmul.mubr.bf16.gmra.mrb[0].mxu0 %v3321
        %v4558 = vpop.f32.mrb[0].mxu0
        %v4559 = vadd.f32 %v4518, %v4558
        %v4560 = vpop.f32.mrb[0].mxu0
        %v4561 = vpop.f32.mrb[0].mxu0
        %v4562 = vadd.f32 %v4521, %v4561
        %v4563 = vpop.f32.mrb[0].mxu0
        %4564 = vdwg.mxu0
        %4565 = vmatprep.subr.bf16.mxu0 0
        %4566 = vmatpush1.bf16.msra.mxu0 %v4184
        %4567 = vmatprep.subr.bf16.mxu0 0
        %4568 = vmatpush1.bf16.msra.mxu0 %v4185
        %4569 = vmatprep.subr.bf16.mxu0 0
        %4570 = vmatpush1.bf16.msra.mxu0 %v4186
        %4571 = vmatprep.subr.bf16.mxu0 0
        %4572 = vmatpush1.bf16.msra.mxu0 %v4187
        %4573 = vmatprep.subr.bf16.mxu0 0
        %4574 = vmatpush1.bf16.msra.mxu0 %v4188
        %4575 = vmatprep.subr.bf16.mxu0 0
        %4576 = vmatpush1.bf16.msra.mxu0 %v4189
        %4577 = vmatprep.subr.bf16.mxu0 0
        %4578 = vmatpush1.bf16.msra.mxu0 %v4190
        %4579 = vmatprep.subr.bf16.mxu0 0
        %4580 = vmatpush1.bf16.msra.mxu0 %v4191
        %4581 = vmatprep.subr.bf16.mxu0 0
        %4582 = vmatpush1.bf16.msra.mxu0 %v4192
        %4583 = vmatprep.subr.bf16.mxu0 0
        %4584 = vmatpush1.bf16.msra.mxu0 %v4193
        %4585 = vmatprep.subr.bf16.mxu0 0
        %4586 = vmatpush1.bf16.msra.mxu0 %v4194
        %4587 = vmatprep.subr.bf16.mxu0 0
        %4588 = vmatpush1.bf16.msra.mxu0 %v4195
        %4589 = vmatprep.subr.bf16.mxu0 0
        %4590 = vmatpush1.bf16.msra.mxu0 %v4196
        %4591 = vmatprep.subr.bf16.mxu0 0
        %4592 = vmatpush1.bf16.msra.mxu0 %v4197
        %4593 = vmatprep.subr.bf16.mxu0 0
        %4594 = vmatpush1.bf16.msra.mxu0 %v4198
        %4595 = vmatprep.subr.bf16.mxu0 0
        %4596 = vmatpush1.bf16.msra.mxu0 %v4199
        %4597 = vmatprep.mubr.bf16.mxu0 %v3324
        %4598 = vmatmul.mubr.bf16.gmra.mrb[0].mxu0 %v3323
        %v4599 = vpop.f32.mrb[0].mxu0
        %v4600 = vadd.f32 %v4559, %v4599
        %v4601 = vpop.f32.mrb[0].mxu0
        %v4602 = vpop.f32.mrb[0].mxu0
        %v4603 = vadd.f32 %v4562, %v4602
        %v4604 = vpop.f32.mrb[0].mxu0
        %4605 = vdwg.mxu0
        %4606 = vmatprep.subr.bf16.mxu0 0
        %4607 = vmatpush1.bf16.msra.mxu0 %v4200
        %4608 = vmatprep.subr.bf16.mxu0 0
        %4609 = vmatpush1.bf16.msra.mxu0 %v4201
        %4610 = vmatprep.subr.bf16.mxu0 0
        %4611 = vmatpush1.bf16.msra.mxu0 %v4202
        %4612 = vmatprep.subr.bf16.mxu0 0
        %4613 = vmatpush1.bf16.msra.mxu0 %v4203
        %4614 = vmatprep.subr.bf16.mxu0 0
        %4615 = vmatpush1.bf16.msra.mxu0 %v4204
        %4616 = vmatprep.subr.bf16.mxu0 0
        %4617 = vmatpush1.bf16.msra.mxu0 %v4205
        %4618 = vmatprep.subr.bf16.mxu0 0
        %4619 = vmatpush1.bf16.msra.mxu0 %v4206
        %4620 = vmatprep.subr.bf16.mxu0 0
        %4621 = vmatpush1.bf16.msra.mxu0 %v4207
        %4622 = vmatprep.subr.bf16.mxu0 0
        %4623 = vmatpush1.bf16.msra.mxu0 %v4208
        %4624 = vmatprep.subr.bf16.mxu0 0
        %4625 = vmatpush1.bf16.msra.mxu0 %v4209
        %4626 = vmatprep.subr.bf16.mxu0 0
        %4627 = vmatpush1.bf16.msra.mxu0 %v4210
        %4628 = vmatprep.subr.bf16.mxu0 0
        %4629 = vmatpush1.bf16.msra.mxu0 %v4211
        %4630 = vmatprep.subr.bf16.mxu0 0
        %4631 = vmatpush1.bf16.msra.mxu0 %v4212
        %4632 = vmatprep.subr.bf16.mxu0 0
        %4633 = vmatpush1.bf16.msra.mxu0 %v4213
        %4634 = vmatprep.subr.bf16.mxu0 0
        %4635 = vmatpush1.bf16.msra.mxu0 %v4214
        %4636 = vmatprep.subr.bf16.mxu0 0
        %4637 = vmatpush1.bf16.msra.mxu0 %v4215
        %4638 = vmatprep.mubr.bf16.mxu0 %v3326
        %4639 = vmatmul.mubr.bf16.gmra.mrb[0].mxu0 %v3325
        %v4640 = vpop.f32.mrb[0].mxu0
        %v4641 = vadd.f32 %v4600, %v4640
        %v4642 = vpop.f32.mrb[0].mxu0
        %v4643 = vpop.f32.mrb[0].mxu0
        %v4644 = vadd.f32 %v4603, %v4643
        %v4645 = vpop.f32.mrb[0].mxu0
        %4646 = vdwg.mxu0
        %4647 = vmatprep.subr.bf16.mxu0 0
        %4648 = vmatpush1.bf16.msra.mxu0 %v4216
        %4649 = vmatprep.subr.bf16.mxu0 0
        %4650 = vmatpush1.bf16.msra.mxu0 %v4217
        %4651 = vmatprep.subr.bf16.mxu0 0
        %4652 = vmatpush1.bf16.msra.mxu0 %v4218
        %4653 = vmatprep.subr.bf16.mxu0 0
        %4654 = vmatpush1.bf16.msra.mxu0 %v4219
        %4655 = vmatprep.subr.bf16.mxu0 0
        %4656 = vmatpush1.bf16.msra.mxu0 %v4220
        %4657 = vmatprep.subr.bf16.mxu0 0
        %4658 = vmatpush1.bf16.msra.mxu0 %v4221
        %4659 = vmatprep.subr.bf16.mxu0 0
        %4660 = vmatpush1.bf16.msra.mxu0 %v4222
        %4661 = vmatprep.subr.bf16.mxu0 0
        %4662 = vmatpush1.bf16.msra.mxu0 %v4223
        %4663 = vmatprep.subr.bf16.mxu0 0
        %4664 = vmatpush1.bf16.msra.mxu0 %v4224
        %4665 = vmatprep.subr.bf16.mxu0 0
        %4666 = vmatpush1.bf16.msra.mxu0 %v4225
        %4667 = vmatprep.subr.bf16.mxu0 0
        %4668 = vmatpush1.bf16.msra.mxu0 %v4226
        %4669 = vmatprep.subr.bf16.mxu0 0
        %4670 = vmatpush1.bf16.msra.mxu0 %v4227
        %4671 = vmatprep.subr.bf16.mxu0 0
        %4672 = vmatpush1.bf16.msra.mxu0 %v4228
        %4673 = vmatprep.subr.bf16.mxu0 0
        %4674 = vmatpush1.bf16.msra.mxu0 %v4229
        %4675 = vmatprep.subr.bf16.mxu0 0
        %4676 = vmatpush1.bf16.msra.mxu0 %v4230
        %4677 = vmatprep.subr.bf16.mxu0 0
        %4678 = vmatpush1.bf16.msra.mxu0 %v4231
        %4679 = vmatprep.mubr.bf16.mxu0 %v3328
        %4680 = vmatmul.mubr.bf16.gmra.mrb[0].mxu0 %v3327
        %v4681 = vpop.f32.mrb[0].mxu0
        %v4682 = vadd.f32 %v4641, %v4681
        %v4683 = vpop.f32.mrb[0].mxu0
        %v4684 = vpop.f32.mrb[0].mxu0
        %v4685 = vadd.f32 %v4644, %v4684
        %v4686 = vpop.f32.mrb[0].mxu0
        %4687 = vdwg.mxu0
        %v4688 = vadd.f32 %v2655, %v4682
        %v4689 = vadd.f32 %v2656, %v4685
        %v4690 = vld [vmem:[%s921] sm:$0x1]
        %v4691 = vld [vmem:[%s924] sm:$0x1]
        %v4692 = vsel %vm1024, %v4688, 0.0
        %4693 = vadd.xlane.f32.xlu0 %v4692
        %v4694 = vpop.xlane.xlu0 %4693
        %v4695 = vsel %vm1024, %v4689, 0.0
        %4696 = vadd.xlane.f32.xlu0 %v4695
        %v4697 = vpop.xlane.xlu0 %4696
        %v4698 = vmul.f32 %v4694, %v2620
        %v4699 = vmul.f32 %v4697, %v2620
        %v4700 = vsub.f32 %v4688, %v4698
        %v4701 = vsub.f32 %v4689, %v4699
        %v4702 = vmul.f32 %v4700, %v4700
        %v4703 = vmul.f32 %v4701, %v4701
        %v4704 = vsel %vm1024, %v4702, 0.0
        %4705 = vadd.xlane.f32.xlu0 %v4704
        %v4706 = vpop.xlane.xlu0 %4705
        %v4707 = vsel %vm1024, %v4703, 0.0
        %4708 = vadd.xlane.f32.xlu0 %v4707
        %v4709 = vpop.xlane.xlu0 %4708
        %v4710 = vmul.f32 %v4706, %v2620
        %v4711 = vmul.f32 %v4709, %v2620
        %v4712 = vadd.f32 %v4710, 1e-05
        %v4713 = vadd.f32 %v4711, 1e-05
        %v4714 = vrsqrt.pop %v4712
        %v4715 = vrsqrt.pop %v4713
        %v4716 = vmul.f32 %v4700, %v4714
        %v4717 = vmul.f32 %v4701, %v4715
        %v4719 = vlaneseq
        %v4720 = vshrl.u32 %v4719, 7
        %v4721 = vsub.s32 0, %v4720
        %v4722 = vrot.slane %v4690, %v4721
        %v4724 = vmul.f32 %v4716, %v4722
        %v4725 = vmul.f32 %v4717, %v4722
        %v4727 = vlaneseq
        %v4728 = vshrl.u32 %v4727, 7
        %v4729 = vsub.s32 0, %v4728
        %v4730 = vrot.slane %v4691, %v4729
        %v4732 = vadd.f32 %v4724, %v4730
        %v4733 = vadd.f32 %v4725, %v4730
        %4734 = vst.msk [vmem:[#allocation2] sm:$0xff] %vm1024, %v4732
        %4735 = vst.msk [vmem:[#allocation2 + $0x8] sm:$0xff] %vm1024, %v4733
        %p4736 = scmp.eq.s32.totalorder %s38, 1
        // Predicated region
        $region109: #{tpu_custom_call.1} parent=103 // pred_check
          %p4737 = pneg %p4736
        $region110: #{tpu_custom_call.1} parent=103 // pred_check_branch
          %4739 = sbr.rel (%p4737) target = $region112
        $region111: #{tpu_custom_call.1} parent=103 // pred_region
          %v4740 = vpack.c.bf16 %v4732, %v4732
          %v4741 = vpack.c.bf16 %v4733, %v4733
          %v4742 = vld [vmem:[%s3] sm:$0xf]
          %v4743 = vld [vmem:[%s3 + $0x4] sm:$0xf]
          %v4744 = vld [vmem:[%s3 + $0x8] sm:$0xf]
          %v4745 = vld [vmem:[%s3 + $0xc] sm:$0xf]
          %v4746 = vld [vmem:[%s4] sm:$0x1]
          %v4748 = vlaneseq
          %v4749 = vshrl.u32 %v4748, 7
          %v4750 = vsub.s32 0, %v4749
          %v4751 = vrot.slane %v4746, %v4750
          %v4755 = vunpack.c.l.b16 %v4740
          %v4756 = vunpack.c.l.b16 %v4741
          %v4757 = vrot.slane %v4755, 7
          %v4758 = vrot.slane %v4756, 6
          %vm4759 = vcmask 1041409
          %v4760 = vsel %vm4759, %v4758, %v4757
          %v4761 = vpack.c.b16 %v4760, %v4760
          %v4766 = vunpack.c.l.b16 %v4742
          %v4767 = vunpack.c.l.b16 %v4743
          %v4768 = vunpack.c.l.b16 %v4744
          %v4769 = vunpack.c.l.b16 %v4745
          %v4770 = vpack.c.b16 %v4767, %v4766
          %v4771 = vpack.c.b16 %v4769, %v4768
          %v4775 = vsel %vm1024, %v4761, 0
          %4777 = vmatprep.subr.bf16.mxu0 0
          %4778 = vmatpush1.bf16.msra.mxu0 %v4770
          %4779 = vmatprep.subr.bf16.mxu0 0
          %4780 = vmatpush1.bf16.msra.mxu0 %v4771
          %4781 = vmatprep.subr.bf16.mxu0 0
          %4782 = vmatpush1.bf16.msra.mxu0 0
          %4783 = vmatprep.subr.bf16.mxu0 0
          %4784 = vmatpush1.bf16.msra.mxu0 0
          %4785 = vmatprep.subr.bf16.mxu0 0
          %4786 = vmatpush1.bf16.msra.mxu0 0
          %4787 = vmatprep.subr.bf16.mxu0 0
          %4788 = vmatpush1.bf16.msra.mxu0 0
          %4789 = vmatprep.subr.bf16.mxu0 0
          %4790 = vmatpush1.bf16.msra.mxu0 0
          %4791 = vmatprep.subr.bf16.mxu0 0
          %4792 = vmatpush1.bf16.msra.mxu0 0
          %4793 = vmatprep.subr.bf16.mxu0 0
          %4794 = vmatpush1.bf16.msra.mxu0 0
          %4795 = vmatprep.subr.bf16.mxu0 0
          %4796 = vmatpush1.bf16.msra.mxu0 0
          %4797 = vmatprep.subr.bf16.mxu0 0
          %4798 = vmatpush1.bf16.msra.mxu0 0
          %4799 = vmatprep.subr.bf16.mxu0 0
          %4800 = vmatpush1.bf16.msra.mxu0 0
          %4801 = vmatprep.subr.bf16.mxu0 0
          %4802 = vmatpush1.bf16.msra.mxu0 0
          %4803 = vmatprep.subr.bf16.mxu0 0
          %4804 = vmatpush1.bf16.msra.mxu0 0
          %4805 = vmatprep.subr.bf16.mxu0 0
          %4806 = vmatpush1.bf16.msra.mxu0 0
          %4807 = vmatprep.subr.bf16.mxu0 0
          %4808 = vmatpush1.bf16.msra.mxu0 0
          %4809 = vmatprep.mubr.bf16.mxu0 0
          %4810 = vmatmul.mubr.bf16.gmra.mrb[0].mxu0 %v4775
          %v4811 = vpop.f32.mrb[0].mxu0
          %v4812 = vadd.f32 %v4751, %v4811
          %v4813 = vpop.f32.mrb[0].mxu0
          %v4814 = vpop.f32.mrb[0].mxu0
          %v4815 = vpop.f32.mrb[0].mxu0
          %4816 = vdwg.mxu0
          %v4817 = vtanh.pop %v4812
          %4818 = vst [vmem:[#allocation3] sm:$0x3] %v4817
        $region112: #{tpu_custom_call.1} parent=103 // pred_fallthru
          _
        // Predicated region
        $region113: #{tpu_custom_call.1} parent=103 // pred_check
          %p4819 = pneg %p589
        $region114: #{tpu_custom_call.1} parent=103 // pred_check_branch
          %4821 = sbr.rel (%p4819) target = $region116
        $region115: #{tpu_custom_call.1} parent=103 // pred_region
          %s4823 = ssub.s32 32, 32
          %4824 = vsyncadd [#allocation4], %s4823
          %s4825 = smul.addr %s37, 32
          %s4826 = scalar_lea.hbm %s21, %s4825
          %s4828 = sshll.u32 [#allocation3], 4
          %s4829 = int_to_ptr.vmem [resolvable:$true] %s4828
          %4831 = dma.vmem_to_hbm [thread:$0]  %s4829, 32, %s4826, [#allocation4]
        $region116: #{tpu_custom_call.1} parent=103 // pred_fallthru
          _
        // Predicated region
        $region117: #{tpu_custom_call.1} parent=103 // pred_check
          %p4832 = pneg %p589
        $region118: #{tpu_custom_call.1} parent=103 // pred_check_branch
          %4834 = sbr.rel (%p4832) target = $region120
        $region119: #{tpu_custom_call.1} parent=103 // pred_region
          %4835 = dma.done [#allocation4], 32
        $region120: #{tpu_custom_call.1} parent=103 // pred_fallthru
          _
      $region104: #{tpu_custom_call.1} parent=5 // pred_fallthru
        _
      %p4836 = scmp.le.s32.totalorder 2, %s28
      // Predicated region
      $region121: #{tpu_custom_call.1} parent=5 // pred_check
        %p4837 = pneg %p4836
      $region122: #{tpu_custom_call.1} parent=5 // pred_check_branch
        %4839 = sbr.rel (%p4837) target = $region124
      $region123: #{tpu_custom_call.1} parent=5 // pred_region
        %s4840 = ssub.s32 %s28, 2
      $region124: #{tpu_custom_call.1} parent=5 // pred_fallthru
        _
    $region6: #{tpu_custom_call.1} parent=1 // loop_footer
      %s32 = sadd.s32 1, %s28
    $region7: #{tpu_custom_call.1} parent=1 // loop_footer_branch
      %27 = sbr.rel target = $region3
    $region8: #{tpu_custom_call.1} parent=1 // loop_exit
      _
    %4841 = vsyncpa [#allocation4], 1
    %s4842 = scalar_lea.sflag [#allocation4], 1
    %4843 = vsyncpa %s4842, 1

</llo_original>
